<compile_context>
chip_gen: v6e
topology: v6e:2x2x1
jax: 0.10.0
libtpu: 0.0.40
codegen_flags: <defaults>
</compile_context>

<pallas_src>
import functools

import jax
import jax.numpy as jnp
from jax.experimental import pallas as pl
from jax.experimental.pallas import tpu as pltpu

EPS = 1e-5
_VMEM_LIMIT = 48 * 1024 * 1024          # headroom-safe on v5e/v6e (128 MiB) and v7x (64 MiB)
_PAR1 = pltpu.CompilerParams(dimension_semantics=("parallel",),
                             vmem_limit_bytes=_VMEM_LIMIT)


def _pick_tile(m, target=512):
    """Largest row-tile <= target that divides m (never exceeds target)."""
    for t in (1024, 512, 256, 128, 64, 32, 16, 8):
        if t <= target and t <= m and m % t == 0:
            return t
    return m


# ----------------------------------------------------------------------------
# Stage 1: 1x1 conv as row-tiled bf16 MXU matmul + BN1 partial stats
# ----------------------------------------------------------------------------
def _mm_stats_kernel(x_ref, w_ref, y_ref, part_ref):
    acc = jnp.dot(x_ref[...], w_ref[...], preferred_element_type=jnp.float32)
    y_ref[...] = acc.astype(y_ref.dtype)
    s1 = jnp.sum(acc, axis=0, keepdims=True)
    s2 = jnp.sum(acc * acc, axis=0, keepdims=True)
    part_ref[0] = jnp.concatenate([s1, s2], axis=0)          # single (2, C) store


def matmul_stats(x, w, tile=512):
    M, K = x.shape
    C = w.shape[1]
    TM = _pick_tile(M, tile)
    T = M // TM
    return pl.pallas_call(
        _mm_stats_kernel,
        grid=(T,),
        in_specs=[pl.BlockSpec((TM, K), lambda i: (i, 0)),
                  pl.BlockSpec((K, C), lambda i: (0, 0))],
        out_specs=[pl.BlockSpec((TM, C), lambda i: (i, 0)),
                   pl.BlockSpec((1, 2, C), lambda i: (i, 0, 0))],
        out_shape=[jax.ShapeDtypeStruct((M, C), jnp.bfloat16),
                   jax.ShapeDtypeStruct((T, 2, C), jnp.float32)],
        compiler_params=_PAR1,
    )(x, w)


# ----------------------------------------------------------------------------
# Stage 2, stride == 1: fully fused BN1-affine + ReLU + pad + 3x3 conv
# ----------------------------------------------------------------------------
def _conv3x3_s1_kernel(y1_ref, sc1_ref, sh1_ref, w2_ref, y2_ref, part_ref,
                       buf_ref, acc_ref, *, H, W):
    """One image: BN1 affine + ReLU applied in VMEM, activation written once
    into a flat buffer with (W+1) zero guard rows at each end; each of the 9
    taps is then a contiguous row slice (per-tap column mask removes the
    row-wrap contributions).  Accumulates into a VMEM f32 scratch."""
    L = H * W
    C = buf_ref.shape[1]
    a = jnp.maximum(y1_ref[0].astype(jnp.float32) * sc1_ref[...] + sh1_ref[...], 0.0)
    buf_ref[0:W + 1, :] = jnp.zeros((W + 1, C), buf_ref.dtype)
    buf_ref[W + 1 + L:, :] = jnp.zeros((W + 1, C), buf_ref.dtype)
    buf_ref[W + 1:W + 1 + L, :] = a.astype(buf_ref.dtype)

    col = jax.lax.broadcasted_iota(jnp.int32, (L, 1), 0) % W
    mask_l = (col >= 1).astype(jnp.bfloat16)        # source column wo-1 valid
    mask_r = (col <= W - 2).astype(jnp.bfloat16)    # source column wo+1 valid

    acc_ref[...] = jnp.zeros_like(acc_ref)
    for kh in range(3):
        for kw in range(3):
            dh, dw = kh - 1, kw - 1
            off = (W + 1) + dh * W + dw
            src = buf_ref[off:off + L, :]
            if dw == -1:
                src = src * mask_l
            elif dw == 1:
                src = src * mask_r
            acc_ref[...] += jnp.dot(src, w2_ref[kh * 3 + kw, :, :],
                                    preferred_element_type=jnp.float32)

    acc = acc_ref[...]
    y2_ref[0] = acc.astype(y2_ref.dtype)
    s1 = jnp.sum(acc, axis=0, keepdims=True)
    s2 = jnp.sum(acc * acc, axis=0, keepdims=True)
    part_ref[0] = jnp.concatenate([s1, s2], axis=0)


def conv3x3_s1(y1_raw, sc1, sh1, w2m, N, H, W):
    C = w2m.shape[1]
    D = w2m.shape[2]
    L = H * W
    kern = functools.partial(_conv3x3_s1_kernel, H=H, W=W)
    return pl.pallas_call(
        kern,
        grid=(N,),
        in_specs=[pl.BlockSpec((1, L, C), lambda n: (n, 0, 0)),
                  pl.BlockSpec((1, C), lambda n: (0, 0)),
                  pl.BlockSpec((1, C), lambda n: (0, 0)),
                  pl.BlockSpec((9, C, D), lambda n: (0, 0, 0))],
        out_specs=[pl.BlockSpec((1, L, D), lambda n: (n, 0, 0)),
                   pl.BlockSpec((1, 2, D), lambda n: (n, 0, 0))],
        out_shape=[jax.ShapeDtypeStruct((N, L, D), jnp.bfloat16),
                   jax.ShapeDtypeStruct((N, 2, D), jnp.float32)],
        scratch_shapes=[pltpu.VMEM((L + 2 * W + 2, C), jnp.bfloat16),
                        pltpu.VMEM((L, D), jnp.float32)],
        compiler_params=_PAR1,
    )(y1_raw.reshape(N, L, C), sc1, sh1, w2m)


# ----------------------------------------------------------------------------
# Stage 2, stride >= 2: stride-phase-split input, 9 shifted matmuls
# ----------------------------------------------------------------------------
def _conv3x3_str_kernel(p2_ref, w2_ref, y_ref, part_ref, acc_ref, *, s, Wq, Ho, Wo):
    L = Ho * Wq
    acc_ref[...] = jnp.zeros_like(acc_ref)
    for ph in range(s):
        for pw in range(s):
            phase = p2_ref[0, ph * s + pw, :, :]              # (Hq*Wq, C)
            for kh in range(ph, 3, s):
                for kw in range(pw, 3, s):
                    off = (kh // s) * Wq + (kw // s)
                    acc_ref[...] += jnp.dot(phase[off:off + L, :],
                                            w2_ref[kh * 3 + kw, :, :],
                                            preferred_element_type=jnp.float32)
    acc = acc_ref[...]
    # BN2 partial stats over the Wo valid columns only (reuse masked product).
    col = jax.lax.broadcasted_iota(jnp.int32, (L, 1), 0) % Wq
    am = acc * (col < Wo).astype(jnp.float32)
    s1 = jnp.sum(am, axis=0, keepdims=True)
    s2 = jnp.sum(am * acc, axis=0, keepdims=True)
    part_ref[0] = jnp.concatenate([s1, s2], axis=0)
    # Store only the Wo valid columns (no XLA re-slice round trip through HBM).
    for ho in range(Ho):
        y_ref[0, ho, :, :] = acc_ref[ho * Wq:ho * Wq + Wo, :].astype(y_ref.dtype)


def conv3x3_strided(p2, w2m, s, Hq, Wq, Ho, Wo):
    N = p2.shape[0]
    C = p2.shape[-1]
    D = w2m.shape[-1]
    L = Ho * Wq
    kern = functools.partial(_conv3x3_str_kernel, s=s, Wq=Wq, Ho=Ho, Wo=Wo)
    return pl.pallas_call(
        kern,
        grid=(N,),
        in_specs=[pl.BlockSpec((1, s * s, Hq * Wq, C), lambda n: (n, 0, 0, 0)),
                  pl.BlockSpec((9, C, D), lambda n: (0, 0, 0))],
        out_specs=[pl.BlockSpec((1, Ho, Wo, D), lambda n: (n, 0, 0, 0)),
                   pl.BlockSpec((1, 2, D), lambda n: (n, 0, 0))],
        out_shape=[jax.ShapeDtypeStruct((N, Ho, Wo, D), jnp.bfloat16),
                   jax.ShapeDtypeStruct((N, 2, D), jnp.float32)],
        scratch_shapes=[pltpu.VMEM((L, D), jnp.float32)],
        compiler_params=_PAR1,
    )(p2, w2m)


# ----------------------------------------------------------------------------
# Stage 3: single-pass matmul (+ BN3/BNs partial stats), then pure-VPU apply
# ----------------------------------------------------------------------------
def _s3_mm_proj_kernel(y2_ref, xs_ref, sc2_ref, sh2_ref, w3_ref, ws_ref,
                       r_ref, t_ref, part_ref):
    a2 = jnp.maximum(y2_ref[...].astype(jnp.float32) * sc2_ref[...] + sh2_ref[...], 0.0)
    r = jnp.dot(a2.astype(jnp.bfloat16), w3_ref[...], preferred_element_type=jnp.float32)
    t = jnp.dot(xs_ref[...], ws_ref[...], preferred_element_type=jnp.float32)
    r_ref[...] = r.astype(r_ref.dtype)
    t_ref[...] = t.astype(t_ref.dtype)
    part_ref[0] = jnp.concatenate(
        [jnp.sum(r, axis=0, keepdims=True),
         jnp.sum(r * r, axis=0, keepdims=True),
         jnp.sum(t, axis=0, keepdims=True),
         jnp.sum(t * t, axis=0, keepdims=True)], axis=0)


def _s3_apply_proj_kernel(r_ref, t_ref, sc3_ref, sh3_ref, scs_ref, shs_ref, o_ref):
    r = r_ref[...].astype(jnp.float32)
    t = t_ref[...].astype(jnp.float32)
    o = r * sc3_ref[...] + sh3_ref[...] + t * scs_ref[...] + shs_ref[...]
    o_ref[...] = jnp.maximum(o, 0.0).astype(o_ref.dtype)


def _s3_mm_id_kernel(y2_ref, sc2_ref, sh2_ref, w3_ref, r_ref, part_ref):
    a2 = jnp.maximum(y2_ref[...].astype(jnp.float32) * sc2_ref[...] + sh2_ref[...], 0.0)
    r = jnp.dot(a2.astype(jnp.bfloat16), w3_ref[...], preferred_element_type=jnp.float32)
    r_ref[...] = r.astype(r_ref.dtype)
    part_ref[0] = jnp.concatenate(
        [jnp.sum(r, axis=0, keepdims=True),
         jnp.sum(r * r, axis=0, keepdims=True)], axis=0)


def _s3_apply_id_kernel(r_ref, sc_ref, sc3_ref, sh3_ref, o_ref):
    r = r_ref[...].astype(jnp.float32)
    o = r * sc3_ref[...] + sh3_ref[...] + sc_ref[...].astype(jnp.float32)
    o_ref[...] = jnp.maximum(o, 0.0).astype(o_ref.dtype)


def stage3_mm_proj(y2v, xs, sc2, sh2, w3, ws, tile=512):
    M, C = y2v.shape
    Cin = xs.shape[1]
    C4 = w3.shape[1]
    TM = _pick_tile(M, tile)
    T = M // TM
    return pl.pallas_call(
        _s3_mm_proj_kernel,
        grid=(T,),
        in_specs=[pl.BlockSpec((TM, C), lambda i: (i, 0)),
                  pl.BlockSpec((TM, Cin), lambda i: (i, 0)),
                  pl.BlockSpec((1, C), lambda i: (0, 0)),
                  pl.BlockSpec((1, C), lambda i: (0, 0)),
                  pl.BlockSpec((C, C4), lambda i: (0, 0)),
                  pl.BlockSpec((Cin, C4), lambda i: (0, 0))],
        out_specs=[pl.BlockSpec((TM, C4), lambda i: (i, 0)),
                   pl.BlockSpec((TM, C4), lambda i: (i, 0)),
                   pl.BlockSpec((1, 4, C4), lambda i: (i, 0, 0))],
        out_shape=[jax.ShapeDtypeStruct((M, C4), jnp.bfloat16),
                   jax.ShapeDtypeStruct((M, C4), jnp.bfloat16),
                   jax.ShapeDtypeStruct((T, 4, C4), jnp.float32)],
        compiler_params=_PAR1,
    )(y2v, xs, sc2, sh2, w3, ws)


def stage3_apply_proj(r, t, sc3, sh3, scs, shs, tile=512):
    M, C4 = r.shape
    TM = _pick_tile(M, tile)
    T = M // TM
    return pl.pallas_call(
        _s3_apply_proj_kernel,
        grid=(T,),
        in_specs=[pl.BlockSpec((TM, C4), lambda i: (i, 0)),
                  pl.BlockSpec((TM, C4), lambda i: (i, 0)),
                  pl.BlockSpec((1, C4), lambda i: (0, 0)),
                  pl.BlockSpec((1, C4), lambda i: (0, 0)),
                  pl.BlockSpec((1, C4), lambda i: (0, 0)),
                  pl.BlockSpec((1, C4), lambda i: (0, 0))],
        out_specs=pl.BlockSpec((TM, C4), lambda i: (i, 0)),
        out_shape=jax.ShapeDtypeStruct((M, C4), jnp.bfloat16),
        compiler_params=_PAR1,
    )(r, t, sc3, sh3, scs, shs)


def stage3_mm_id(y2v, sc2, sh2, w3, tile=512):
    M, C = y2v.shape
    C4 = w3.shape[1]
    TM = _pick_tile(M, tile)
    T = M // TM
    return pl.pallas_call(
        _s3_mm_id_kernel,
        grid=(T,),
        in_specs=[pl.BlockSpec((TM, C), lambda i: (i, 0)),
                  pl.BlockSpec((1, C), lambda i: (0, 0)),
                  pl.BlockSpec((1, C), lambda i: (0, 0)),
                  pl.BlockSpec((C, C4), lambda i: (0, 0))],
        out_specs=[pl.BlockSpec((TM, C4), lambda i: (i, 0)),
                   pl.BlockSpec((1, 2, C4), lambda i: (i, 0, 0))],
        out_shape=[jax.ShapeDtypeStruct((M, C4), jnp.bfloat16),
                   jax.ShapeDtypeStruct((T, 2, C4), jnp.float32)],
        compiler_params=_PAR1,
    )(y2v, sc2, sh2, w3)


def stage3_apply_id(r, sc, sc3, sh3, tile=512):
    M, C4 = r.shape
    TM = _pick_tile(M, tile)
    T = M // TM
    return pl.pallas_call(
        _s3_apply_id_kernel,
        grid=(T,),
        in_specs=[pl.BlockSpec((TM, C4), lambda i: (i, 0)),
                  pl.BlockSpec((TM, C4), lambda i: (i, 0)),
                  pl.BlockSpec((1, C4), lambda i: (0, 0)),
                  pl.BlockSpec((1, C4), lambda i: (0, 0))],
        out_specs=pl.BlockSpec((TM, C4), lambda i: (i, 0)),
        out_shape=jax.ShapeDtypeStruct((M, C4), jnp.bfloat16),
        compiler_params=_PAR1,
    )(r, sc, sc3, sh3)


# ----------------------------------------------------------------------------
# Plain-JAX glue: BN finalize + strided-path layout prep + full forward
# ----------------------------------------------------------------------------
def _bn_affine(sum_y, sumsq, count, g, b):
    """Exact batch-stats BN folded into one per-channel scale/shift (f32)."""
    mean = sum_y / count
    var = jnp.maximum(sumsq / count - mean * mean, 0.0)
    scale = g * jax.lax.rsqrt(var + EPS)
    shift = b - mean * scale
    return (scale.reshape(1, -1).astype(jnp.float32),
            shift.reshape(1, -1).astype(jnp.float32))


def _prep_stage2_strided(y1_raw, scale1, shift1, N, H, W, C, s):
    """Stride >= 2 only: deferred BN1 affine + ReLU, zero-pad, phase split.
    # TODO(synk): stride>=2 padded stride-phase layout prep stays in XLA (no
    # clean contiguous-slice formulation inside a Pallas kernel)."""
    a = jnp.maximum(y1_raw.astype(jnp.float32) * scale1 + shift1, 0.0)
    a = a.astype(jnp.bfloat16).reshape(N, H, W, C)
    Ho = (H - 1) // s + 1
    Wo = (W - 1) // s + 1
    Hq = -((-(H + 2)) // s) + 1        # +1 row of slack for shifted flat reads
    Wq = -((-(W + 2)) // s)
    off_max = (2 // s) * Wq + (2 // s)
    assert Ho * Wq + off_max <= Hq * Wq, "insufficient slack for shifted flat reads"
    canvas = jnp.zeros((N, Hq * s, Wq * s, C), jnp.bfloat16)
    canvas = canvas.at[:, 1:H + 1, 1:W + 1, :].set(a)
    p2 = canvas.reshape(N, Hq, s, Wq, s, C).transpose(0, 2, 4, 1, 3, 5)
    p2 = p2.reshape(N, s * s, Hq * Wq, C)
    return p2, Ho, Wo, Hq, Wq


def bottleneck_forward(x_nhwc, params, stride):
    """BottleNeck.forward with batch-stat BN (fresh module, training mode)."""
    N, H, W, Cin = x_nhwc.shape
    C = params["w1"].shape[1]
    C4 = 4 * C
    s = stride
    M1 = N * H * W

    x_bf = x_nhwc.astype(jnp.bfloat16)
    x_flat = x_bf.reshape(M1, Cin)

    # stage 1: 1x1 conv (row-tiled bf16 MXU matmul) + BN1 partial stats
    y1_raw, part1 = matmul_stats(x_flat, params["w1"].astype(jnp.bfloat16))
    p1 = part1.sum(axis=0)
    scale1, shift1 = _bn_affine(p1[0], p1[1], M1, params["g1"], params["b1"])

    # stage 2: 3x3 conv (pad=1) + BN2 partial stats
    w2m = params["w2"].reshape(9, C, C).astype(jnp.bfloat16)
    if s == 1:
        Ho, Wo = H, W
        y2_raw, part2 = conv3x3_s1(y1_raw, scale1, shift1, w2m, N, H, W)
    else:
        p2, Ho, Wo, Hq, Wq = _prep_stage2_strided(y1_raw, scale1, shift1, N, H, W, C, s)
        y2_raw, part2 = conv3x3_strided(p2, w2m, s, Hq, Wq, Ho, Wo)
    M2 = N * Ho * Wo
    p2s = part2.sum(axis=0)
    scale2, shift2 = _bn_affine(p2s[0], p2s[1], M2, params["g2"], params["b2"])
    y2v = y2_raw.reshape(M2, C)            # contiguous, no strided re-slice

    # stage 3 (+ shortcut): BN2+ReLU fused as prologue into the single-pass
    # matmul/stats kernel; apply pass is pure VPU on the cached r/t.
    w3 = params["w3"].astype(jnp.bfloat16)
    if s == 1 and Cin == C4:
        r, part3 = stage3_mm_id(y2v, scale2, shift2, w3)
        p3 = part3.sum(axis=0)
        scale3, shift3 = _bn_affine(p3[0], p3[1], M2, params["g3"], params["b3"])
        out = stage3_apply_id(r, x_flat, scale3, shift3)
    else:
        xs = x_bf[:, ::s, ::s, :].reshape(M2, Cin)
        ws = params["ws"].astype(jnp.bfloat16)
        r, t, part3 = stage3_mm_proj(y2v, xs, scale2, shift2, w3, ws)
        p3 = part3.sum(axis=0)
        scale3, shift3 = _bn_affine(p3[0], p3[1], M2, params["g3"], params["b3"])
        scales, shifts = _bn_affine(p3[2], p3[3], M2, params["gs"], params["bs"])
        out = stage3_apply_proj(r, t, scale3, shift3, scales, shifts)
    return out.reshape(N, Ho, Wo, C4)


# ----------------------------------------------------------------------------
# Pure-JAX f32 reference (same semantics) for correctness checking
# ----------------------------------------------------------------------------
def _conv_ref(x, w, stride, pad):
    return jax.lax.conv_general_dilated(
        x, w, (stride, stride), [(pad, pad), (pad, pad)],
        dimension_numbers=("NHWC", "HWIO", "NHWC"),
        precision=jax.lax.Precision.HIGHEST)


def _bn_ref(y, g, b):
    mean = y.mean(axis=(0, 1, 2), keepdims=True)
    var = ((y - mean) ** 2).mean(axis=(0, 1, 2), keepdims=True)
    return (y - mean) * jax.lax.rsqrt(var + EPS) * g + b


def ref_forward(x_nhwc, p, stride):
    Cin = x_nhwc.shape[-1]
    C = p["w1"].shape[1]
    y = jax.nn.relu(_bn_ref(_conv_ref(x_nhwc, p["w1"][None, None], 1, 0), p["g1"], p["b1"]))
    y = jax.nn.relu(_bn_ref(_conv_ref(y, p["w2"], stride, 1), p["g2"], p["b2"]))
    y = _bn_ref(_conv_ref(y, p["w3"][None, None], 1, 0), p["g3"], p["b3"])
    if stride == 1 and Cin == 4 * C:
        sh = x_nhwc
    else:
        sh = _bn_ref(_conv_ref(x_nhwc, p["ws"][None, None], stride, 0), p["gs"], p["bs"])
    return jax.nn.relu(y + sh)


# ----------------------------------------------------------------------------
# Deterministic parameter init (shapes from the torch module's __init__)
# ----------------------------------------------------------------------------
def init_params(key, cin, c):
    cexp = 4 * c
    ks = jax.random.split(key, 12)

    def w(k, shape):
        return 0.1 * jax.random.normal(k, shape, jnp.float32)

    def g(k, n):
        return jax.random.uniform(k, (n,), jnp.float32, 0.5, 1.5)

    def b(k, n):
        return 0.1 * jax.random.normal(k, (n,), jnp.float32)

    return dict(
        w1=w(ks[0], (cin, c)),        g1=g(ks[1], c),     b1=b(ks[2], c),
        w2=w(ks[3], (3, 3, c, c)),    g2=g(ks[4], c),     b2=b(ks[5], c),
        w3=w(ks[6], (c, cexp)),       g3=g(ks[7], cexp),  b3=b(ks[8], cexp),
        ws=w(ks[9], (cin, cexp)),     gs=g(ks[10], cexp), bs=b(ks[11], cexp),
    )


def _check(out, ref, name):
    out = out.astype(jnp.float32)
    diff = jnp.abs(out - ref)
    rel = jnp.linalg.norm(out - ref) / (jnp.linalg.norm(ref) + 1e-9)
    assert float(rel) < 5e-2, f"{name}: relative L2 error {float(rel):.4f}"
    assert float(jnp.max(diff)) < 3e-1, f"{name}: max abs diff {float(jnp.max(diff)):.4f}"


# ----------------------------------------------------------------------------
if __name__ == "__main__":
    key = jax.random.PRNGKey(0)
    k_x1, k_p1, k_x2, k_p2 = jax.random.split(key, 4)
    fwd = jax.jit(bottleneck_forward, static_argnums=2)

    # Case 1: projection shortcut (stride=2, in_channels != out_channels*4)
    N, H, W, cin, cmid, stride = 2, 16, 16, 16, 8, 2
    x_nchw = jax.random.normal(k_x1, (N, cin, H, W), jnp.float32)   # torch layout
    x_nhwc = jnp.transpose(x_nchw, (0, 2, 3, 1))
    params = init_params(k_p1, cin, cmid)
    out = jax.block_until_ready(fwd(x_nhwc, params, stride))
    ref = jax.block_until_ready(ref_forward(x_nhwc, params, stride))
    assert out.shape == (N, H // stride, W // stride, 4 * cmid)
    _check(out, ref, "projection case")

    # Case 2: identity shortcut (stride=1, in_channels == out_channels*4)
    N2, H2, W2, cin2, cmid2, stride2 = 2, 8, 8, 32, 8, 1
    x2_nchw = jax.random.normal(k_x2, (N2, cin2, H2, W2), jnp.float32)
    x2_nhwc = jnp.transpose(x2_nchw, (0, 2, 3, 1))
    params2 = init_params(k_p2, cin2, cmid2)
    out2 = jax.block_until_ready(fwd(x2_nhwc, params2, stride2))
    ref2 = jax.block_until_ready(ref_forward(x2_nhwc, params2, stride2))
    assert out2.shape == (N2, H2, W2, 4 * cmid2)
    _check(out2, ref2, "identity case")

    print("KERNEL_OK")
</pallas_src>

<mosaic_0001>
module attributes {stable_mosaic.version = 11 : i64} {
  func.func @_mm_stats_kernel(%arg0: i32, %arg1: memref<512x16xbf16, #tpu.memory_space<vmem>>, %arg2: memref<16x8xbf16, #tpu.memory_space<vmem>>, %arg3: memref<512x8xbf16, #tpu.memory_space<vmem>>, %arg4: memref<1x2x8xf32, #tpu.memory_space<vmem>>) attributes {dimension_semantics = [#tpu.dimension_semantics<parallel>], iteration_bounds = array<i64: 1>, scalar_prefetch = 0 : i64, scratch_operands = 0 : i64, tpu.core_type = #tpu.core_type<tc>, window_params = [{transform_indices = @transform_0, window_bounds = array<i64: 512, 16>}, {pipeline_mode = #tpu.pipeline_mode<synchronous>, transform_indices = @transform_1, window_bounds = array<i64: 16, 8>}, {transform_indices = @transform_2, window_bounds = array<i64: 512, 8>}, {transform_indices = @transform_3, window_bounds = array<i64: 1, 2, 8>}]} {
    %c0 = arith.constant 0 : index
    %c0_0 = arith.constant 0 : index
    %0 = vector.load %arg1[%c0, %c0_0] : memref<512x16xbf16, #tpu.memory_space<vmem>>, vector<512x16xbf16>
    %c0_1 = arith.constant 0 : index
    %c0_2 = arith.constant 0 : index
    %1 = vector.load %arg2[%c0_1, %c0_2] : memref<16x8xbf16, #tpu.memory_space<vmem>>, vector<16x8xbf16>
    %cst = arith.constant dense<0.000000e+00> : vector<512x8xf32>
    %2 = tpu.matmul %0, %1, %cst {dimension_numbers = #tpu.dot_dimension_numbers<[1], [0], [0], [1], [0, 0, 1, 1], [], []>} : vector<512x16xbf16>, vector<16x8xbf16>, vector<512x8xf32> -> vector<512x8xf32>
    %3 = arith.truncf %2 : vector<512x8xf32> to vector<512x8xbf16>
    %c0_3 = arith.constant 0 : index
    %c0_4 = arith.constant 0 : index
    %4 = vector.load %arg3[%c0_3, %c0_4] : memref<512x8xbf16, #tpu.memory_space<vmem>>, vector<512x8xbf16>
    tpu.vector_store %arg3[%c0_3, %c0_4], %3 {strides = array<i32>} : memref<512x8xbf16, #tpu.memory_space<vmem>>, vector<512x8xbf16>,
    %cst_5 = arith.constant dense<0.000000e+00> : vector<8xf32>
    %5 = vector.multi_reduction <add>, %2, %cst_5 [0] : vector<512x8xf32> to vector<8xf32>
    %6 = vector.shape_cast %5 : vector<8xf32> to vector<1x8xf32>
    %7 = arith.mulf %2, %2 : vector<512x8xf32>
    %cst_6 = arith.constant dense<0.000000e+00> : vector<8xf32>
    %8 = vector.multi_reduction <add>, %7, %cst_6 [0] : vector<512x8xf32> to vector<8xf32>
    %9 = vector.shape_cast %8 : vector<8xf32> to vector<1x8xf32>
    %10 = tpu.concatenate %6, %9 in 0 : vector<1x8xf32>, vector<1x8xf32> -> vector<2x8xf32>
    %c0_7 = arith.constant 0 : index
    %c0_8 = arith.constant 0 : index
    %c0_9 = arith.constant 0 : index
    %11 = vector.load %arg4[%c0_7, %c0_8, %c0_9] : memref<1x2x8xf32, #tpu.memory_space<vmem>>, vector<1x2x8xf32>
    %12 = vector.shape_cast %11 : vector<1x2x8xf32> to vector<2x8xf32>
    %13 = vector.shape_cast %10 : vector<2x8xf32> to vector<1x2x8xf32>
    tpu.vector_store %arg4[%c0_7, %c0_8, %c0_9], %13 {strides = array<i32>} : memref<1x2x8xf32, #tpu.memory_space<vmem>>, vector<1x2x8xf32>,
    return
  }
  func.func @transform_0(%arg0: i32) -> (i32, i32) {
    %c0_i32 = arith.constant 0 : i32
    %c0_i32_0 = arith.constant 0 : i32
    return %arg0, %c0_i32 : i32, i32
  }
  func.func @transform_1(%arg0: i32) -> (i32, i32) {
    %c0_i32 = arith.constant 0 : i32
    %c0_i32_0 = arith.constant 0 : i32
    %c0_i32_1 = arith.constant 0 : i32
    return %c0_i32, %c0_i32_0 : i32, i32
  }
  func.func @transform_2(%arg0: i32) -> (i32, i32) {
    %c0_i32 = arith.constant 0 : i32
    %c0_i32_0 = arith.constant 0 : i32
    return %arg0, %c0_i32 : i32, i32
  }
  func.func @transform_3(%arg0: i32) -> (i32, i32, i32) {
    %c0_i32 = arith.constant 0 : i32
    %c0_i32_0 = arith.constant 0 : i32
    %c0_i32_1 = arith.constant 0 : i32
    return %arg0, %c0_i32, %c0_i32_0 : i32, i32, i32
  }
}

module attributes {stable_mosaic.version = 11 : i64} {
  func.func @_conv3x3_str_kernel(%arg0: i32, %arg1: memref<1x4x90x8xbf16, #tpu.memory_space<vmem>>, %arg2: memref<9x8x8xbf16, #tpu.memory_space<vmem>>, %arg3: memref<1x8x8x8xbf16, #tpu.memory_space<vmem>>, %arg4: memref<1x2x8xf32, #tpu.memory_space<vmem>>, %arg5: memref<72x8xf32, #tpu.memory_space<vmem>>) attributes {dimension_semantics = [#tpu.dimension_semantics<parallel>], iteration_bounds = array<i64: 2>, scalar_prefetch = 0 : i64, scratch_operands = 1 : i64, tpu.core_type = #tpu.core_type<tc>, window_params = [{transform_indices = @transform_0, window_bounds = array<i64: 1, 4, 90, 8>}, {pipeline_mode = #tpu.pipeline_mode<synchronous>, transform_indices = @transform_1, window_bounds = array<i64: 9, 8, 8>}, {transform_indices = @transform_2, window_bounds = array<i64: 1, 8, 8, 8>}, {transform_indices = @transform_3, window_bounds = array<i64: 1, 2, 8>}]} {
    %cst = arith.constant 0.000000e+00 : f32
    %0 = vector.broadcast %cst : f32 to vector<72x8xf32>
    %c0 = arith.constant 0 : index
    %c0_0 = arith.constant 0 : index
    %1 = vector.load %arg5[%c0, %c0_0] : memref<72x8xf32, #tpu.memory_space<vmem>>, vector<72x8xf32>
    tpu.vector_store %arg5[%c0, %c0_0], %0 {strides = array<i32>} : memref<72x8xf32, #tpu.memory_space<vmem>>, vector<72x8xf32>,
    %c0_1 = arith.constant 0 : index
    %c0_2 = arith.constant 0 : index
    %c0_3 = arith.constant 0 : index
    %c0_4 = arith.constant 0 : index
    %2 = vector.load %arg1[%c0_1, %c0_2, %c0_3, %c0_4] : memref<1x4x90x8xbf16, #tpu.memory_space<vmem>>, vector<1x1x90x8xbf16>
    %3 = vector.shape_cast %2 : vector<1x1x90x8xbf16> to vector<90x8xbf16>
    %c0_5 = arith.constant 0 : index
    %c0_6 = arith.constant 0 : index
    %4 = vector.load %arg5[%c0_5, %c0_6] : memref<72x8xf32, #tpu.memory_space<vmem>>, vector<72x8xf32>
    %5 = vector.extract_strided_slice %3 {offsets = [0, 0], sizes = [72, 8], strides = [1, 1]} : vector<90x8xbf16> to vector<72x8xbf16>
    %c0_7 = arith.constant 0 : index
    %c0_8 = arith.constant 0 : index
    %c0_9 = arith.constant 0 : index
    %6 = vector.load %arg2[%c0_7, %c0_8, %c0_9] : memref<9x8x8xbf16, #tpu.memory_space<vmem>>, vector<1x8x8xbf16>
    %7 = vector.shape_cast %6 : vector<1x8x8xbf16> to vector<8x8xbf16>
    %cst_10 = arith.constant dense<0.000000e+00> : vector<72x8xf32>
    %8 = tpu.matmul %5, %7, %cst_10 {dimension_numbers = #tpu.dot_dimension_numbers<[1], [0], [0], [1], [0, 0, 1, 1], [], []>} : vector<72x8xbf16>, vector<8x8xbf16>, vector<72x8xf32> -> vector<72x8xf32>
    %9 = arith.addf %4, %8 : vector<72x8xf32>
    %c0_11 = arith.constant 0 : index
    %c0_12 = arith.constant 0 : index
    %10 = vector.load %arg5[%c0_11, %c0_12] : memref<72x8xf32, #tpu.memory_space<vmem>>, vector<72x8xf32>
    tpu.vector_store %arg5[%c0_11, %c0_12], %9 {strides = array<i32>} : memref<72x8xf32, #tpu.memory_space<vmem>>, vector<72x8xf32>,
    %c0_13 = arith.constant 0 : index
    %c0_14 = arith.constant 0 : index
    %11 = vector.load %arg5[%c0_13, %c0_14] : memref<72x8xf32, #tpu.memory_space<vmem>>, vector<72x8xf32>
    %12 = vector.extract_strided_slice %3 {offsets = [1, 0], sizes = [72, 8], strides = [1, 1]} : vector<90x8xbf16> to vector<72x8xbf16>
    %c2 = arith.constant 2 : index
    %c0_15 = arith.constant 0 : index
    %c0_16 = arith.constant 0 : index
    %13 = vector.load %arg2[%c2, %c0_15, %c0_16] : memref<9x8x8xbf16, #tpu.memory_space<vmem>>, vector<1x8x8xbf16>
    %14 = vector.shape_cast %13 : vector<1x8x8xbf16> to vector<8x8xbf16>
    %cst_17 = arith.constant dense<0.000000e+00> : vector<72x8xf32>
    %15 = tpu.matmul %12, %14, %cst_17 {dimension_numbers = #tpu.dot_dimension_numbers<[1], [0], [0], [1], [0, 0, 1, 1], [], []>} : vector<72x8xbf16>, vector<8x8xbf16>, vector<72x8xf32> -> vector<72x8xf32>
    %16 = arith.addf %11, %15 : vector<72x8xf32>
    %c0_18 = arith.constant 0 : index
    %c0_19 = arith.constant 0 : index
    %17 = vector.load %arg5[%c0_18, %c0_19] : memref<72x8xf32, #tpu.memory_space<vmem>>, vector<72x8xf32>
    tpu.vector_store %arg5[%c0_18, %c0_19], %16 {strides = array<i32>} : memref<72x8xf32, #tpu.memory_space<vmem>>, vector<72x8xf32>,
    %c0_20 = arith.constant 0 : index
    %c0_21 = arith.constant 0 : index
    %18 = vector.load %arg5[%c0_20, %c0_21] : memref<72x8xf32, #tpu.memory_space<vmem>>, vector<72x8xf32>
    %19 = vector.extract_strided_slice %3 {offsets = [9, 0], sizes = [72, 8], strides = [1, 1]} : vector<90x8xbf16> to vector<72x8xbf16>
    %c6 = arith.constant 6 : index
    %c0_22 = arith.constant 0 : index
    %c0_23 = arith.constant 0 : index
    %20 = vector.load %arg2[%c6, %c0_22, %c0_23] : memref<9x8x8xbf16, #tpu.memory_space<vmem>>, vector<1x8x8xbf16>
    %21 = vector.shape_cast %20 : vector<1x8x8xbf16> to vector<8x8xbf16>
    %cst_24 = arith.constant dense<0.000000e+00> : vector<72x8xf32>
    %22 = tpu.matmul %19, %21, %cst_24 {dimension_numbers = #tpu.dot_dimension_numbers<[1], [0], [0], [1], [0, 0, 1, 1], [], []>} : vector<72x8xbf16>, vector<8x8xbf16>, vector<72x8xf32> -> vector<72x8xf32>
    %23 = arith.addf %18, %22 : vector<72x8xf32>
    %c0_25 = arith.constant 0 : index
    %c0_26 = arith.constant 0 : index
    %24 = vector.load %arg5[%c0_25, %c0_26] : memref<72x8xf32, #tpu.memory_space<vmem>>, vector<72x8xf32>
    tpu.vector_store %arg5[%c0_25, %c0_26], %23 {strides = array<i32>} : memref<72x8xf32, #tpu.memory_space<vmem>>, vector<72x8xf32>,
    %c0_27 = arith.constant 0 : index
    %c0_28 = arith.constant 0 : index
    %25 = vector.load %arg5[%c0_27, %c0_28] : memref<72x8xf32, #tpu.memory_space<vmem>>, vector<72x8xf32>
    %26 = vector.extract_strided_slice %3 {offsets = [10, 0], sizes = [72, 8], strides = [1, 1]} : vector<90x8xbf16> to vector<72x8xbf16>
    %c8 = arith.constant 8 : index
    %c0_29 = arith.constant 0 : index
    %c0_30 = arith.constant 0 : index
    %27 = vector.load %arg2[%c8, %c0_29, %c0_30] : memref<9x8x8xbf16, #tpu.memory_space<vmem>>, vector<1x8x8xbf16>
    %28 = vector.shape_cast %27 : vector<1x8x8xbf16> to vector<8x8xbf16>
    %cst_31 = arith.constant dense<0.000000e+00> : vector<72x8xf32>
    %29 = tpu.matmul %26, %28, %cst_31 {dimension_numbers = #tpu.dot_dimension_numbers<[1], [0], [0], [1], [0, 0, 1, 1], [], []>} : vector<72x8xbf16>, vector<8x8xbf16>, vector<72x8xf32> -> vector<72x8xf32>
    %30 = arith.addf %25, %29 : vector<72x8xf32>
    %c0_32 = arith.constant 0 : index
    %c0_33 = arith.constant 0 : index
    %31 = vector.load %arg5[%c0_32, %c0_33] : memref<72x8xf32, #tpu.memory_space<vmem>>, vector<72x8xf32>
    tpu.vector_store %arg5[%c0_32, %c0_33], %30 {strides = array<i32>} : memref<72x8xf32, #tpu.memory_space<vmem>>, vector<72x8xf32>,
    %c0_34 = arith.constant 0 : index
    %c1 = arith.constant 1 : index
    %c0_35 = arith.constant 0 : index
    %c0_36 = arith.constant 0 : index
    %32 = vector.load %arg1[%c0_34, %c1, %c0_35, %c0_36] : memref<1x4x90x8xbf16, #tpu.memory_space<vmem>>, vector<1x1x90x8xbf16>
    %33 = vector.shape_cast %32 : vector<1x1x90x8xbf16> to vector<90x8xbf16>
    %c0_37 = arith.constant 0 : index
    %c0_38 = arith.constant 0 : index
    %34 = vector.load %arg5[%c0_37, %c0_38] : memref<72x8xf32, #tpu.memory_space<vmem>>, vector<72x8xf32>
    %35 = vector.extract_strided_slice %33 {offsets = [0, 0], sizes = [72, 8], strides = [1, 1]} : vector<90x8xbf16> to vector<72x8xbf16>
    %c1_39 = arith.constant 1 : index
    %c0_40 = arith.constant 0 : index
    %c0_41 = arith.constant 0 : index
    %36 = vector.load %arg2[%c1_39, %c0_40, %c0_41] : memref<9x8x8xbf16, #tpu.memory_space<vmem>>, vector<1x8x8xbf16>
    %37 = vector.shape_cast %36 : vector<1x8x8xbf16> to vector<8x8xbf16>
    %cst_42 = arith.constant dense<0.000000e+00> : vector<72x8xf32>
    %38 = tpu.matmul %35, %37, %cst_42 {dimension_numbers = #tpu.dot_dimension_numbers<[1], [0], [0], [1], [0, 0, 1, 1], [], []>} : vector<72x8xbf16>, vector<8x8xbf16>, vector<72x8xf32> -> vector<72x8xf32>
    %39 = arith.addf %34, %38 : vector<72x8xf32>
    %c0_43 = arith.constant 0 : index
    %c0_44 = arith.constant 0 : index
    %40 = vector.load %arg5[%c0_43, %c0_44] : memref<72x8xf32, #tpu.memory_space<vmem>>, vector<72x8xf32>
    tpu.vector_store %arg5[%c0_43, %c0_44], %39 {strides = array<i32>} : memref<72x8xf32, #tpu.memory_space<vmem>>, vector<72x8xf32>,
    %c0_45 = arith.constant 0 : index
    %c0_46 = arith.constant 0 : index
    %41 = vector.load %arg5[%c0_45, %c0_46] : memref<72x8xf32, #tpu.memory_space<vmem>>, vector<72x8xf32>
    %42 = vector.extract_strided_slice %33 {offsets = [9, 0], sizes = [72, 8], strides = [1, 1]} : vector<90x8xbf16> to vector<72x8xbf16>
    %c7 = arith.constant 7 : index
    %c0_47 = arith.constant 0 : index
    %c0_48 = arith.constant 0 : index
    %43 = vector.load %arg2[%c7, %c0_47, %c0_48] : memref<9x8x8xbf16, #tpu.memory_space<vmem>>, vector<1x8x8xbf16>
    %44 = vector.shape_cast %43 : vector<1x8x8xbf16> to vector<8x8xbf16>
    %cst_49 = arith.constant dense<0.000000e+00> : vector<72x8xf32>
    %45 = tpu.matmul %42, %44, %cst_49 {dimension_numbers = #tpu.dot_dimension_numbers<[1], [0], [0], [1], [0, 0, 1, 1], [], []>} : vector<72x8xbf16>, vector<8x8xbf16>, vector<72x8xf32> -> vector<72x8xf32>
    %46 = arith.addf %41, %45 : vector<72x8xf32>
    %c0_50 = arith.constant 0 : index
    %c0_51 = arith.constant 0 : index
    %47 = vector.load %arg5[%c0_50, %c0_51] : memref<72x8xf32, #tpu.memory_space<vmem>>, vector<72x8xf32>
    tpu.vector_store %arg5[%c0_50, %c0_51], %46 {strides = array<i32>} : memref<72x8xf32, #tpu.memory_space<vmem>>, vector<72x8xf32>,
    %c0_52 = arith.constant 0 : index
    %c2_53 = arith.constant 2 : index
    %c0_54 = arith.constant 0 : index
    %c0_55 = arith.constant 0 : index
    %48 = vector.load %arg1[%c0_52, %c2_53, %c0_54, %c0_55] : memref<1x4x90x8xbf16, #tpu.memory_space<vmem>>, vector<1x1x90x8xbf16>
    %49 = vector.shape_cast %48 : vector<1x1x90x8xbf16> to vector<90x8xbf16>
    %c0_56 = arith.constant 0 : index
    %c0_57 = arith.constant 0 : index
    %50 = vector.load %arg5[%c0_56, %c0_57] : memref<72x8xf32, #tpu.memory_space<vmem>>, vector<72x8xf32>
    %51 = vector.extract_strided_slice %49 {offsets = [0, 0], sizes = [72, 8], strides = [1, 1]} : vector<90x8xbf16> to vector<72x8xbf16>
    %c3 = arith.constant 3 : index
    %c0_58 = arith.constant 0 : index
    %c0_59 = arith.constant 0 : index
    %52 = vector.load %arg2[%c3, %c0_58, %c0_59] : memref<9x8x8xbf16, #tpu.memory_space<vmem>>, vector<1x8x8xbf16>
    %53 = vector.shape_cast %52 : vector<1x8x8xbf16> to vector<8x8xbf16>
    %cst_60 = arith.constant dense<0.000000e+00> : vector<72x8xf32>
    %54 = tpu.matmul %51, %53, %cst_60 {dimension_numbers = #tpu.dot_dimension_numbers<[1], [0], [0], [1], [0, 0, 1, 1], [], []>} : vector<72x8xbf16>, vector<8x8xbf16>, vector<72x8xf32> -> vector<72x8xf32>
    %55 = arith.addf %50, %54 : vector<72x8xf32>
    %c0_61 = arith.constant 0 : index
    %c0_62 = arith.constant 0 : index
    %56 = vector.load %arg5[%c0_61, %c0_62] : memref<72x8xf32, #tpu.memory_space<vmem>>, vector<72x8xf32>
    tpu.vector_store %arg5[%c0_61, %c0_62], %55 {strides = array<i32>} : memref<72x8xf32, #tpu.memory_space<vmem>>, vector<72x8xf32>,
    %c0_63 = arith.constant 0 : index
    %c0_64 = arith.constant 0 : index
    %57 = vector.load %arg5[%c0_63, %c0_64] : memref<72x8xf32, #tpu.memory_space<vmem>>, vector<72x8xf32>
    %58 = vector.extract_strided_slice %49 {offsets = [1, 0], sizes = [72, 8], strides = [1, 1]} : vector<90x8xbf16> to vector<72x8xbf16>
    %c5 = arith.constant 5 : index
    %c0_65 = arith.constant 0 : index
    %c0_66 = arith.constant 0 : index
    %59 = vector.load %arg2[%c5, %c0_65, %c0_66] : memref<9x8x8xbf16, #tpu.memory_space<vmem>>, vector<1x8x8xbf16>
    %60 = vector.shape_cast %59 : vector<1x8x8xbf16> to vector<8x8xbf16>
    %cst_67 = arith.constant dense<0.000000e+00> : vector<72x8xf32>
    %61 = tpu.matmul %58, %60, %cst_67 {dimension_numbers = #tpu.dot_dimension_numbers<[1], [0], [0], [1], [0, 0, 1, 1], [], []>} : vector<72x8xbf16>, vector<8x8xbf16>, vector<72x8xf32> -> vector<72x8xf32>
    %62 = arith.addf %57, %61 : vector<72x8xf32>
    %c0_68 = arith.constant 0 : index
    %c0_69 = arith.constant 0 : index
    %63 = vector.load %arg5[%c0_68, %c0_69] : memref<72x8xf32, #tpu.memory_space<vmem>>, vector<72x8xf32>
    tpu.vector_store %arg5[%c0_68, %c0_69], %62 {strides = array<i32>} : memref<72x8xf32, #tpu.memory_space<vmem>>, vector<72x8xf32>,
    %c0_70 = arith.constant 0 : index
    %c3_71 = arith.constant 3 : index
    %c0_72 = arith.constant 0 : index
    %c0_73 = arith.constant 0 : index
    %64 = vector.load %arg1[%c0_70, %c3_71, %c0_72, %c0_73] : memref<1x4x90x8xbf16, #tpu.memory_space<vmem>>, vector<1x1x90x8xbf16>
    %65 = vector.shape_cast %64 : vector<1x1x90x8xbf16> to vector<90x8xbf16>
    %c0_74 = arith.constant 0 : index
    %c0_75 = arith.constant 0 : index
    %66 = vector.load %arg5[%c0_74, %c0_75] : memref<72x8xf32, #tpu.memory_space<vmem>>, vector<72x8xf32>
    %67 = vector.extract_strided_slice %65 {offsets = [0, 0], sizes = [72, 8], strides = [1, 1]} : vector<90x8xbf16> to vector<72x8xbf16>
    %c4 = arith.constant 4 : index
    %c0_76 = arith.constant 0 : index
    %c0_77 = arith.constant 0 : index
    %68 = vector.load %arg2[%c4, %c0_76, %c0_77] : memref<9x8x8xbf16, #tpu.memory_space<vmem>>, vector<1x8x8xbf16>
    %69 = vector.shape_cast %68 : vector<1x8x8xbf16> to vector<8x8xbf16>
    %cst_78 = arith.constant dense<0.000000e+00> : vector<72x8xf32>
    %70 = tpu.matmul %67, %69, %cst_78 {dimension_numbers = #tpu.dot_dimension_numbers<[1], [0], [0], [1], [0, 0, 1, 1], [], []>} : vector<72x8xbf16>, vector<8x8xbf16>, vector<72x8xf32> -> vector<72x8xf32>
    %71 = arith.addf %66, %70 : vector<72x8xf32>
    %c0_79 = arith.constant 0 : index
    %c0_80 = arith.constant 0 : index
    %72 = vector.load %arg5[%c0_79, %c0_80] : memref<72x8xf32, #tpu.memory_space<vmem>>, vector<72x8xf32>
    tpu.vector_store %arg5[%c0_79, %c0_80], %71 {strides = array<i32>} : memref<72x8xf32, #tpu.memory_space<vmem>>, vector<72x8xf32>,
    %c0_81 = arith.constant 0 : index
    %c0_82 = arith.constant 0 : index
    %73 = vector.load %arg5[%c0_81, %c0_82] : memref<72x8xf32, #tpu.memory_space<vmem>>, vector<72x8xf32>
    %74 = tpu.iota {dimensions = array<i32: 0>} : vector<72x1xi32>
    %c9_i32 = arith.constant 9 : i32
    %c0_i32 = arith.constant 0 : i32
    %75 = arith.cmpi eq, %c9_i32, %c0_i32 : i32
    %c1_i32 = arith.constant 1 : i32
    %76 = arith.select %75, %c1_i32, %c9_i32 : i32
    %77 = vector.broadcast %76 : i32 to vector<72x1xi32>
    %78 = arith.remsi %74, %77 : vector<72x1xi32>
    %c0_i32_83 = arith.constant 0 : i32
    %79 = vector.broadcast %c0_i32_83 : i32 to vector<72x1xi32>
    %80 = arith.cmpi ne, %78, %79 : vector<72x1xi32>
    %c0_i32_84 = arith.constant 0 : i32
    %81 = vector.broadcast %c0_i32_84 : i32 to vector<72x1xi32>
    %82 = arith.cmpi slt, %78, %81 : vector<72x1xi32>
    %c0_i32_85 = arith.constant 0 : i32
    %83 = arith.cmpi slt, %76, %c0_i32_85 : i32
    %84 = vector.broadcast %83 : i1 to vector<72x1xi1>
    %85 = vector.broadcast %84 : vector<72x1xi1> to vector<72x1xi1>
    %86 = arith.xori %82, %85 : vector<72x1xi1>
    %87 = arith.andi %86, %80 : vector<72x1xi1>
    %88 = vector.broadcast %76 : i32 to vector<72x1xi32>
    %89 = arith.addi %78, %88 : vector<72x1xi32>
    %90 = arith.select %87, %89, %78 : vector<72x1xi1>, vector<72x1xi32>
    %c8_i32 = arith.constant 8 : i32
    %91 = vector.broadcast %c8_i32 : i32 to vector<72x1xi32>
    %92 = arith.cmpi slt, %90, %91 : vector<72x1xi32>
    %93 = arith.extui %92 : vector<72x1xi1> to vector<72x1xi32>
    %94 = arith.sitofp %93 : vector<72x1xi32> to vector<72x1xf32>
    %95 = vector.broadcast %94 : vector<72x1xf32> to vector<72x8xf32>
    %96 = arith.mulf %73, %95 : vector<72x8xf32>
    %cst_86 = arith.constant dense<0.000000e+00> : vector<8xf32>
    %97 = vector.multi_reduction <add>, %96, %cst_86 [0] : vector<72x8xf32> to vector<8xf32>
    %98 = vector.shape_cast %97 : vector<8xf32> to vector<1x8xf32>
    %99 = arith.mulf %96, %73 : vector<72x8xf32>
    %cst_87 = arith.constant dense<0.000000e+00> : vector<8xf32>
    %100 = vector.multi_reduction <add>, %99, %cst_87 [0] : vector<72x8xf32> to vector<8xf32>
    %101 = vector.shape_cast %100 : vector<8xf32> to vector<1x8xf32>
    %102 = tpu.concatenate %98, %101 in 0 : vector<1x8xf32>, vector<1x8xf32> -> vector<2x8xf32>
    %c0_88 = arith.constant 0 : index
    %c0_89 = arith.constant 0 : index
    %c0_90 = arith.constant 0 : index
    %103 = vector.load %arg4[%c0_88, %c0_89, %c0_90] : memref<1x2x8xf32, #tpu.memory_space<vmem>>, vector<1x2x8xf32>
    %104 = vector.shape_cast %103 : vector<1x2x8xf32> to vector<2x8xf32>
    %105 = vector.shape_cast %102 : vector<2x8xf32> to vector<1x2x8xf32>
    tpu.vector_store %arg4[%c0_88, %c0_89, %c0_90], %105 {strides = array<i32>} : memref<1x2x8xf32, #tpu.memory_space<vmem>>, vector<1x2x8xf32>,
    %c0_91 = arith.constant 0 : index
    %c0_92 = arith.constant 0 : index
    %106 = vector.load %arg5[%c0_91, %c0_92] : memref<72x8xf32, #tpu.memory_space<vmem>>, vector<8x8xf32>
    %107 = arith.truncf %106 : vector<8x8xf32> to vector<8x8xbf16>
    %c0_93 = arith.constant 0 : index
    %c0_94 = arith.constant 0 : index
    %c0_95 = arith.constant 0 : index
    %c0_96 = arith.constant 0 : index
    %108 = vector.load %arg3[%c0_93, %c0_94, %c0_95, %c0_96] : memref<1x8x8x8xbf16, #tpu.memory_space<vmem>>, vector<1x1x8x8xbf16>
    %109 = vector.shape_cast %108 : vector<1x1x8x8xbf16> to vector<8x8xbf16>
    %110 = vector.shape_cast %107 : vector<8x8xbf16> to vector<1x1x8x8xbf16>
    tpu.vector_store %arg3[%c0_93, %c0_94, %c0_95, %c0_96], %110 {strides = array<i32>} : memref<1x8x8x8xbf16, #tpu.memory_space<vmem>>, vector<1x1x8x8xbf16>,
    %c9 = arith.constant 9 : index
    %c0_97 = arith.constant 0 : index
    %111 = vector.load %arg5[%c9, %c0_97] : memref<72x8xf32, #tpu.memory_space<vmem>>, vector<8x8xf32>
    %112 = arith.truncf %111 : vector<8x8xf32> to vector<8x8xbf16>
    %c0_98 = arith.constant 0 : index
    %c1_99 = arith.constant 1 : index
    %c0_100 = arith.constant 0 : index
    %c0_101 = arith.constant 0 : index
    %113 = vector.load %arg3[%c0_98, %c1_99, %c0_100, %c0_101] : memref<1x8x8x8xbf16, #tpu.memory_space<vmem>>, vector<1x1x8x8xbf16>
    %114 = vector.shape_cast %113 : vector<1x1x8x8xbf16> to vector<8x8xbf16>
    %115 = vector.shape_cast %112 : vector<8x8xbf16> to vector<1x1x8x8xbf16>
    tpu.vector_store %arg3[%c0_98, %c1_99, %c0_100, %c0_101], %115 {strides = array<i32>} : memref<1x8x8x8xbf16, #tpu.memory_space<vmem>>, vector<1x1x8x8xbf16>,
    %c18 = arith.constant 18 : index
    %c0_102 = arith.constant 0 : index
    %116 = vector.load %arg5[%c18, %c0_102] : memref<72x8xf32, #tpu.memory_space<vmem>>, vector<8x8xf32>
    %117 = arith.truncf %116 : vector<8x8xf32> to vector<8x8xbf16>
    %c0_103 = arith.constant 0 : index
    %c2_104 = arith.constant 2 : index
    %c0_105 = arith.constant 0 : index
    %c0_106 = arith.constant 0 : index
    %118 = vector.load %arg3[%c0_103, %c2_104, %c0_105, %c0_106] : memref<1x8x8x8xbf16, #tpu.memory_space<vmem>>, vector<1x1x8x8xbf16>
    %119 = vector.shape_cast %118 : vector<1x1x8x8xbf16> to vector<8x8xbf16>
    %120 = vector.shape_cast %117 : vector<8x8xbf16> to vector<1x1x8x8xbf16>
    tpu.vector_store %arg3[%c0_103, %c2_104, %c0_105, %c0_106], %120 {strides = array<i32>} : memref<1x8x8x8xbf16, #tpu.memory_space<vmem>>, vector<1x1x8x8xbf16>,
    %c27 = arith.constant 27 : index
    %c0_107 = arith.constant 0 : index
    %121 = vector.load %arg5[%c27, %c0_107] : memref<72x8xf32, #tpu.memory_space<vmem>>, vector<8x8xf32>
    %122 = arith.truncf %121 : vector<8x8xf32> to vector<8x8xbf16>
    %c0_108 = arith.constant 0 : index
    %c3_109 = arith.constant 3 : index
    %c0_110 = arith.constant 0 : index
    %c0_111 = arith.constant 0 : index
    %123 = vector.load %arg3[%c0_108, %c3_109, %c0_110, %c0_111] : memref<1x8x8x8xbf16, #tpu.memory_space<vmem>>, vector<1x1x8x8xbf16>
    %124 = vector.shape_cast %123 : vector<1x1x8x8xbf16> to vector<8x8xbf16>
    %125 = vector.shape_cast %122 : vector<8x8xbf16> to vector<1x1x8x8xbf16>
    tpu.vector_store %arg3[%c0_108, %c3_109, %c0_110, %c0_111], %125 {strides = array<i32>} : memref<1x8x8x8xbf16, #tpu.memory_space<vmem>>, vector<1x1x8x8xbf16>,
    %c36 = arith.constant 36 : index
    %c0_112 = arith.constant 0 : index
    %126 = vector.load %arg5[%c36, %c0_112] : memref<72x8xf32, #tpu.memory_space<vmem>>, vector<8x8xf32>
    %127 = arith.truncf %126 : vector<8x8xf32> to vector<8x8xbf16>
    %c0_113 = arith.constant 0 : index
    %c4_114 = arith.constant 4 : index
    %c0_115 = arith.constant 0 : index
    %c0_116 = arith.constant 0 : index
    %128 = vector.load %arg3[%c0_113, %c4_114, %c0_115, %c0_116] : memref<1x8x8x8xbf16, #tpu.memory_space<vmem>>, vector<1x1x8x8xbf16>
    %129 = vector.shape_cast %128 : vector<1x1x8x8xbf16> to vector<8x8xbf16>
    %130 = vector.shape_cast %127 : vector<8x8xbf16> to vector<1x1x8x8xbf16>
    tpu.vector_store %arg3[%c0_113, %c4_114, %c0_115, %c0_116], %130 {strides = array<i32>} : memref<1x8x8x8xbf16, #tpu.memory_space<vmem>>, vector<1x1x8x8xbf16>,
    %c45 = arith.constant 45 : index
    %c0_117 = arith.constant 0 : index
    %131 = vector.load %arg5[%c45, %c0_117] : memref<72x8xf32, #tpu.memory_space<vmem>>, vector<8x8xf32>
    %132 = arith.truncf %131 : vector<8x8xf32> to vector<8x8xbf16>
    %c0_118 = arith.constant 0 : index
    %c5_119 = arith.constant 5 : index
    %c0_120 = arith.constant 0 : index
    %c0_121 = arith.constant 0 : index
    %133 = vector.load %arg3[%c0_118, %c5_119, %c0_120, %c0_121] : memref<1x8x8x8xbf16, #tpu.memory_space<vmem>>, vector<1x1x8x8xbf16>
    %134 = vector.shape_cast %133 : vector<1x1x8x8xbf16> to vector<8x8xbf16>
    %135 = vector.shape_cast %132 : vector<8x8xbf16> to vector<1x1x8x8xbf16>
    tpu.vector_store %arg3[%c0_118, %c5_119, %c0_120, %c0_121], %135 {strides = array<i32>} : memref<1x8x8x8xbf16, #tpu.memory_space<vmem>>, vector<1x1x8x8xbf16>,
    %c54 = arith.constant 54 : index
    %c0_122 = arith.constant 0 : index
    %136 = vector.load %arg5[%c54, %c0_122] : memref<72x8xf32, #tpu.memory_space<vmem>>, vector<8x8xf32>
    %137 = arith.truncf %136 : vector<8x8xf32> to vector<8x8xbf16>
    %c0_123 = arith.constant 0 : index
    %c6_124 = arith.constant 6 : index
    %c0_125 = arith.constant 0 : index
    %c0_126 = arith.constant 0 : index
    %138 = vector.load %arg3[%c0_123, %c6_124, %c0_125, %c0_126] : memref<1x8x8x8xbf16, #tpu.memory_space<vmem>>, vector<1x1x8x8xbf16>
    %139 = vector.shape_cast %138 : vector<1x1x8x8xbf16> to vector<8x8xbf16>
    %140 = vector.shape_cast %137 : vector<8x8xbf16> to vector<1x1x8x8xbf16>
    tpu.vector_store %arg3[%c0_123, %c6_124, %c0_125, %c0_126], %140 {strides = array<i32>} : memref<1x8x8x8xbf16, #tpu.memory_space<vmem>>, vector<1x1x8x8xbf16>,
    %c63 = arith.constant 63 : index
    %c0_127 = arith.constant 0 : index
    %141 = vector.load %arg5[%c63, %c0_127] : memref<72x8xf32, #tpu.memory_space<vmem>>, vector<8x8xf32>
    %142 = arith.truncf %141 : vector<8x8xf32> to vector<8x8xbf16>
    %c0_128 = arith.constant 0 : index
    %c7_129 = arith.constant 7 : index
    %c0_130 = arith.constant 0 : index
    %c0_131 = arith.constant 0 : index
    %143 = vector.load %arg3[%c0_128, %c7_129, %c0_130, %c0_131] : memref<1x8x8x8xbf16, #tpu.memory_space<vmem>>, vector<1x1x8x8xbf16>
    %144 = vector.shape_cast %143 : vector<1x1x8x8xbf16> to vector<8x8xbf16>
    %145 = vector.shape_cast %142 : vector<8x8xbf16> to vector<1x1x8x8xbf16>
    tpu.vector_store %arg3[%c0_128, %c7_129, %c0_130, %c0_131], %145 {strides = array<i32>} : memref<1x8x8x8xbf16, #tpu.memory_space<vmem>>, vector<1x1x8x8xbf16>,
    return
  }
  func.func @transform_0(%arg0: i32) -> (i32, i32, i32, i32) {
    %c0_i32 = arith.constant 0 : i32
    %c0_i32_0 = arith.constant 0 : i32
    %c0_i32_1 = arith.constant 0 : i32
    %c0_i32_2 = arith.constant 0 : i32
    return %arg0, %c0_i32, %c0_i32_0, %c0_i32_1 : i32, i32, i32, i32
  }
  func.func @transform_1(%arg0: i32) -> (i32, i32, i32) {
    %c0_i32 = arith.constant 0 : i32
    %c0_i32_0 = arith.constant 0 : i32
    %c0_i32_1 = arith.constant 0 : i32
    %c0_i32_2 = arith.constant 0 : i32
    return %c0_i32, %c0_i32_0, %c0_i32_1 : i32, i32, i32
  }
  func.func @transform_2(%arg0: i32) -> (i32, i32, i32, i32) {
    %c0_i32 = arith.constant 0 : i32
    %c0_i32_0 = arith.constant 0 : i32
    %c0_i32_1 = arith.constant 0 : i32
    %c0_i32_2 = arith.constant 0 : i32
    return %arg0, %c0_i32, %c0_i32_0, %c0_i32_1 : i32, i32, i32, i32
  }
  func.func @transform_3(%arg0: i32) -> (i32, i32, i32) {
    %c0_i32 = arith.constant 0 : i32
    %c0_i32_0 = arith.constant 0 : i32
    %c0_i32_1 = arith.constant 0 : i32
    return %arg0, %c0_i32, %c0_i32_0 : i32, i32, i32
  }
}

module attributes {stable_mosaic.version = 11 : i64} {
  func.func @_s3_apply_proj_kernel(%arg0: i32, %arg1: memref<128x32xbf16, #tpu.memory_space<vmem>>, %arg2: memref<128x32xbf16, #tpu.memory_space<vmem>>, %arg3: memref<1x32xf32, #tpu.memory_space<vmem>>, %arg4: memref<1x32xf32, #tpu.memory_space<vmem>>, %arg5: memref<1x32xf32, #tpu.memory_space<vmem>>, %arg6: memref<1x32xf32, #tpu.memory_space<vmem>>, %arg7: memref<128x32xbf16, #tpu.memory_space<vmem>>) attributes {dimension_semantics = [#tpu.dimension_semantics<parallel>], iteration_bounds = array<i64: 1>, scalar_prefetch = 0 : i64, scratch_operands = 0 : i64, tpu.core_type = #tpu.core_type<tc>, window_params = [{transform_indices = @transform_0, window_bounds = array<i64: 128, 32>}, {transform_indices = @transform_1, window_bounds = array<i64: 128, 32>}, {pipeline_mode = #tpu.pipeline_mode<synchronous>, transform_indices = @transform_2, window_bounds = array<i64: 1, 32>}, {pipeline_mode = #tpu.pipeline_mode<synchronous>, transform_indices = @transform_3, window_bounds = array<i64: 1, 32>}, {pipeline_mode = #tpu.pipeline_mode<synchronous>, transform_indices = @transform_4, window_bounds = array<i64: 1, 32>}, {pipeline_mode = #tpu.pipeline_mode<synchronous>, transform_indices = @transform_5, window_bounds = array<i64: 1, 32>}, {transform_indices = @transform_6, window_bounds = array<i64: 128, 32>}]} {
    %c0 = arith.constant 0 : index
    %c0_0 = arith.constant 0 : index
    %0 = vector.load %arg1[%c0, %c0_0] : memref<128x32xbf16, #tpu.memory_space<vmem>>, vector<128x32xbf16>
    %1 = arith.extf %0 : vector<128x32xbf16> to vector<128x32xf32>
    %c0_1 = arith.constant 0 : index
    %c0_2 = arith.constant 0 : index
    %2 = vector.load %arg2[%c0_1, %c0_2] : memref<128x32xbf16, #tpu.memory_space<vmem>>, vector<128x32xbf16>
    %3 = arith.extf %2 : vector<128x32xbf16> to vector<128x32xf32>
    %c0_3 = arith.constant 0 : index
    %c0_4 = arith.constant 0 : index
    %4 = vector.load %arg3[%c0_3, %c0_4] : memref<1x32xf32, #tpu.memory_space<vmem>>, vector<1x32xf32>
    %5 = vector.broadcast %4 : vector<1x32xf32> to vector<128x32xf32>
    %6 = arith.mulf %1, %5 : vector<128x32xf32>
    %c0_5 = arith.constant 0 : index
    %c0_6 = arith.constant 0 : index
    %7 = vector.load %arg4[%c0_5, %c0_6] : memref<1x32xf32, #tpu.memory_space<vmem>>, vector<1x32xf32>
    %8 = vector.broadcast %7 : vector<1x32xf32> to vector<128x32xf32>
    %9 = arith.addf %6, %8 : vector<128x32xf32>
    %c0_7 = arith.constant 0 : index
    %c0_8 = arith.constant 0 : index
    %10 = vector.load %arg5[%c0_7, %c0_8] : memref<1x32xf32, #tpu.memory_space<vmem>>, vector<1x32xf32>
    %11 = vector.broadcast %10 : vector<1x32xf32> to vector<128x32xf32>
    %12 = arith.mulf %3, %11 : vector<128x32xf32>
    %13 = arith.addf %9, %12 : vector<128x32xf32>
    %c0_9 = arith.constant 0 : index
    %c0_10 = arith.constant 0 : index
    %14 = vector.load %arg6[%c0_9, %c0_10] : memref<1x32xf32, #tpu.memory_space<vmem>>, vector<1x32xf32>
    %15 = vector.broadcast %14 : vector<1x32xf32> to vector<128x32xf32>
    %16 = arith.addf %13, %15 : vector<128x32xf32>
    %cst = arith.constant 0.000000e+00 : f32
    %17 = vector.broadcast %cst : f32 to vector<128x32xf32>
    %18 = arith.maximumf %16, %17 : vector<128x32xf32>
    %19 = arith.truncf %18 : vector<128x32xf32> to vector<128x32xbf16>
    %c0_11 = arith.constant 0 : index
    %c0_12 = arith.constant 0 : index
    %20 = vector.load %arg7[%c0_11, %c0_12] : memref<128x32xbf16, #tpu.memory_space<vmem>>, vector<128x32xbf16>
    tpu.vector_store %arg7[%c0_11, %c0_12], %19 {strides = array<i32>} : memref<128x32xbf16, #tpu.memory_space<vmem>>, vector<128x32xbf16>,
    return
  }
  func.func @transform_0(%arg0: i32) -> (i32, i32) {
    %c0_i32 = arith.constant 0 : i32
    %c0_i32_0 = arith.constant 0 : i32
    return %arg0, %c0_i32 : i32, i32
  }
  func.func @transform_1(%arg0: i32) -> (i32, i32) {
    %c0_i32 = arith.constant 0 : i32
    %c0_i32_0 = arith.constant 0 : i32
    return %arg0, %c0_i32 : i32, i32
  }
  func.func @transform_2(%arg0: i32) -> (i32, i32) {
    %c0_i32 = arith.constant 0 : i32
    %c0_i32_0 = arith.constant 0 : i32
    %c0_i32_1 = arith.constant 0 : i32
    return %c0_i32, %c0_i32_0 : i32, i32
  }
  func.func @transform_3(%arg0: i32) -> (i32, i32) {
    %c0_i32 = arith.constant 0 : i32
    %c0_i32_0 = arith.constant 0 : i32
    %c0_i32_1 = arith.constant 0 : i32
    return %c0_i32, %c0_i32_0 : i32, i32
  }
  func.func @transform_4(%arg0: i32) -> (i32, i32) {
    %c0_i32 = arith.constant 0 : i32
    %c0_i32_0 = arith.constant 0 : i32
    %c0_i32_1 = arith.constant 0 : i32
    return %c0_i32, %c0_i32_0 : i32, i32
  }
  func.func @transform_5(%arg0: i32) -> (i32, i32) {
    %c0_i32 = arith.constant 0 : i32
    %c0_i32_0 = arith.constant 0 : i32
    %c0_i32_1 = arith.constant 0 : i32
    return %c0_i32, %c0_i32_0 : i32, i32
  }
  func.func @transform_6(%arg0: i32) -> (i32, i32) {
    %c0_i32 = arith.constant 0 : i32
    %c0_i32_0 = arith.constant 0 : i32
    return %arg0, %c0_i32 : i32, i32
  }
}

module attributes {stable_mosaic.version = 11 : i64} {
  func.func @_s3_mm_proj_kernel(%arg0: i32, %arg1: memref<128x8xbf16, #tpu.memory_space<vmem>>, %arg2: memref<128x16xbf16, #tpu.memory_space<vmem>>, %arg3: memref<1x8xf32, #tpu.memory_space<vmem>>, %arg4: memref<1x8xf32, #tpu.memory_space<vmem>>, %arg5: memref<8x32xbf16, #tpu.memory_space<vmem>>, %arg6: memref<16x32xbf16, #tpu.memory_space<vmem>>, %arg7: memref<128x32xbf16, #tpu.memory_space<vmem>>, %arg8: memref<128x32xbf16, #tpu.memory_space<vmem>>, %arg9: memref<1x4x32xf32, #tpu.memory_space<vmem>>) attributes {dimension_semantics = [#tpu.dimension_semantics<parallel>], iteration_bounds = array<i64: 1>, scalar_prefetch = 0 : i64, scratch_operands = 0 : i64, tpu.core_type = #tpu.core_type<tc>, window_params = [{transform_indices = @transform_0, window_bounds = array<i64: 128, 8>}, {transform_indices = @transform_1, window_bounds = array<i64: 128, 16>}, {pipeline_mode = #tpu.pipeline_mode<synchronous>, transform_indices = @transform_2, window_bounds = array<i64: 1, 8>}, {pipeline_mode = #tpu.pipeline_mode<synchronous>, transform_indices = @transform_3, window_bounds = array<i64: 1, 8>}, {pipeline_mode = #tpu.pipeline_mode<synchronous>, transform_indices = @transform_4, window_bounds = array<i64: 8, 32>}, {pipeline_mode = #tpu.pipeline_mode<synchronous>, transform_indices = @transform_5, window_bounds = array<i64: 16, 32>}, {transform_indices = @transform_6, window_bounds = array<i64: 128, 32>}, {transform_indices = @transform_7, window_bounds = array<i64: 128, 32>}, {transform_indices = @transform_8, window_bounds = array<i64: 1, 4, 32>}]} {
    %c0 = arith.constant 0 : index
    %c0_0 = arith.constant 0 : index
    %0 = vector.load %arg1[%c0, %c0_0] : memref<128x8xbf16, #tpu.memory_space<vmem>>, vector<128x8xbf16>
    %1 = arith.extf %0 : vector<128x8xbf16> to vector<128x8xf32>
    %c0_1 = arith.constant 0 : index
    %c0_2 = arith.constant 0 : index
    %2 = vector.load %arg3[%c0_1, %c0_2] : memref<1x8xf32, #tpu.memory_space<vmem>>, vector<1x8xf32>
    %3 = vector.broadcast %2 : vector<1x8xf32> to vector<128x8xf32>
    %4 = arith.mulf %1, %3 : vector<128x8xf32>
    %c0_3 = arith.constant 0 : index
    %c0_4 = arith.constant 0 : index
    %5 = vector.load %arg4[%c0_3, %c0_4] : memref<1x8xf32, #tpu.memory_space<vmem>>, vector<1x8xf32>
    %6 = vector.broadcast %5 : vector<1x8xf32> to vector<128x8xf32>
    %7 = arith.addf %4, %6 : vector<128x8xf32>
    %cst = arith.constant 0.000000e+00 : f32
    %8 = vector.broadcast %cst : f32 to vector<128x8xf32>
    %9 = arith.maximumf %7, %8 : vector<128x8xf32>
    %10 = arith.truncf %9 : vector<128x8xf32> to vector<128x8xbf16>
    %c0_5 = arith.constant 0 : index
    %c0_6 = arith.constant 0 : index
    %11 = vector.load %arg5[%c0_5, %c0_6] : memref<8x32xbf16, #tpu.memory_space<vmem>>, vector<8x32xbf16>
    %cst_7 = arith.constant dense<0.000000e+00> : vector<128x32xf32>
    %12 = tpu.matmul %10, %11, %cst_7 {dimension_numbers = #tpu.dot_dimension_numbers<[1], [0], [0], [1], [0, 0, 1, 1], [], []>} : vector<128x8xbf16>, vector<8x32xbf16>, vector<128x32xf32> -> vector<128x32xf32>
    %c0_8 = arith.constant 0 : index
    %c0_9 = arith.constant 0 : index
    %13 = vector.load %arg2[%c0_8, %c0_9] : memref<128x16xbf16, #tpu.memory_space<vmem>>, vector<128x16xbf16>
    %c0_10 = arith.constant 0 : index
    %c0_11 = arith.constant 0 : index
    %14 = vector.load %arg6[%c0_10, %c0_11] : memref<16x32xbf16, #tpu.memory_space<vmem>>, vector<16x32xbf16>
    %cst_12 = arith.constant dense<0.000000e+00> : vector<128x32xf32>
    %15 = tpu.matmul %13, %14, %cst_12 {dimension_numbers = #tpu.dot_dimension_numbers<[1], [0], [0], [1], [0, 0, 1, 1], [], []>} : vector<128x16xbf16>, vector<16x32xbf16>, vector<128x32xf32> -> vector<128x32xf32>
    %16 = arith.truncf %12 : vector<128x32xf32> to vector<128x32xbf16>
    %c0_13 = arith.constant 0 : index
    %c0_14 = arith.constant 0 : index
    %17 = vector.load %arg7[%c0_13, %c0_14] : memref<128x32xbf16, #tpu.memory_space<vmem>>, vector<128x32xbf16>
    tpu.vector_store %arg7[%c0_13, %c0_14], %16 {strides = array<i32>} : memref<128x32xbf16, #tpu.memory_space<vmem>>, vector<128x32xbf16>,
    %18 = arith.truncf %15 : vector<128x32xf32> to vector<128x32xbf16>
    %c0_15 = arith.constant 0 : index
    %c0_16 = arith.constant 0 : index
    %19 = vector.load %arg8[%c0_15, %c0_16] : memref<128x32xbf16, #tpu.memory_space<vmem>>, vector<128x32xbf16>
    tpu.vector_store %arg8[%c0_15, %c0_16], %18 {strides = array<i32>} : memref<128x32xbf16, #tpu.memory_space<vmem>>, vector<128x32xbf16>,
    %cst_17 = arith.constant dense<0.000000e+00> : vector<32xf32>
    %20 = vector.multi_reduction <add>, %12, %cst_17 [0] : vector<128x32xf32> to vector<32xf32>
    %21 = vector.shape_cast %20 : vector<32xf32> to vector<1x32xf32>
    %22 = arith.mulf %12, %12 : vector<128x32xf32>
    %cst_18 = arith.constant dense<0.000000e+00> : vector<32xf32>
    %23 = vector.multi_reduction <add>, %22, %cst_18 [0] : vector<128x32xf32> to vector<32xf32>
    %24 = vector.shape_cast %23 : vector<32xf32> to vector<1x32xf32>
    %cst_19 = arith.constant dense<0.000000e+00> : vector<32xf32>
    %25 = vector.multi_reduction <add>, %15, %cst_19 [0] : vector<128x32xf32> to vector<32xf32>
    %26 = vector.shape_cast %25 : vector<32xf32> to vector<1x32xf32>
    %27 = arith.mulf %15, %15 : vector<128x32xf32>
    %cst_20 = arith.constant dense<0.000000e+00> : vector<32xf32>
    %28 = vector.multi_reduction <add>, %27, %cst_20 [0] : vector<128x32xf32> to vector<32xf32>
    %29 = vector.shape_cast %28 : vector<32xf32> to vector<1x32xf32>
    %30 = tpu.concatenate %21, %24, %26, %29 in 0 : vector<1x32xf32>, vector<1x32xf32>, vector<1x32xf32>, vector<1x32xf32> -> vector<4x32xf32>
    %c0_21 = arith.constant 0 : index
    %c0_22 = arith.constant 0 : index
    %c0_23 = arith.constant 0 : index
    %31 = vector.load %arg9[%c0_21, %c0_22, %c0_23] : memref<1x4x32xf32, #tpu.memory_space<vmem>>, vector<1x4x32xf32>
    %32 = vector.shape_cast %31 : vector<1x4x32xf32> to vector<4x32xf32>
    %33 = vector.shape_cast %30 : vector<4x32xf32> to vector<1x4x32xf32>
    tpu.vector_store %arg9[%c0_21, %c0_22, %c0_23], %33 {strides = array<i32>} : memref<1x4x32xf32, #tpu.memory_space<vmem>>, vector<1x4x32xf32>,
    return
  }
  func.func @transform_0(%arg0: i32) -> (i32, i32) {
    %c0_i32 = arith.constant 0 : i32
    %c0_i32_0 = arith.constant 0 : i32
    return %arg0, %c0_i32 : i32, i32
  }
  func.func @transform_1(%arg0: i32) -> (i32, i32) {
    %c0_i32 = arith.constant 0 : i32
    %c0_i32_0 = arith.constant 0 : i32
    return %arg0, %c0_i32 : i32, i32
  }
  func.func @transform_2(%arg0: i32) -> (i32, i32) {
    %c0_i32 = arith.constant 0 : i32
    %c0_i32_0 = arith.constant 0 : i32
    %c0_i32_1 = arith.constant 0 : i32
    return %c0_i32, %c0_i32_0 : i32, i32
  }
  func.func @transform_3(%arg0: i32) -> (i32, i32) {
    %c0_i32 = arith.constant 0 : i32
    %c0_i32_0 = arith.constant 0 : i32
    %c0_i32_1 = arith.constant 0 : i32
    return %c0_i32, %c0_i32_0 : i32, i32
  }
  func.func @transform_4(%arg0: i32) -> (i32, i32) {
    %c0_i32 = arith.constant 0 : i32
    %c0_i32_0 = arith.constant 0 : i32
    %c0_i32_1 = arith.constant 0 : i32
    return %c0_i32, %c0_i32_0 : i32, i32
  }
  func.func @transform_5(%arg0: i32) -> (i32, i32) {
    %c0_i32 = arith.constant 0 : i32
    %c0_i32_0 = arith.constant 0 : i32
    %c0_i32_1 = arith.constant 0 : i32
    return %c0_i32, %c0_i32_0 : i32, i32
  }
  func.func @transform_6(%arg0: i32) -> (i32, i32) {
    %c0_i32 = arith.constant 0 : i32
    %c0_i32_0 = arith.constant 0 : i32
    return %arg0, %c0_i32 : i32, i32
  }
  func.func @transform_7(%arg0: i32) -> (i32, i32) {
    %c0_i32 = arith.constant 0 : i32
    %c0_i32_0 = arith.constant 0 : i32
    return %arg0, %c0_i32 : i32, i32
  }
  func.func @transform_8(%arg0: i32) -> (i32, i32, i32) {
    %c0_i32 = arith.constant 0 : i32
    %c0_i32_0 = arith.constant 0 : i32
    %c0_i32_1 = arith.constant 0 : i32
    return %arg0, %c0_i32, %c0_i32_0 : i32, i32, i32
  }
}

</mosaic_0001>

<llo_original>
// kernel: bottleneck_forward.4
$region0: #{bottleneck_forward.4}
  #allocation0 [shape = 'u32[]', space=smem, size = 0x4, offset = 0x4, fixed_abs, tag = 'smem constant byte address 0x4 - core index']
  #allocation1 [shape = 'u32[144,128]{1,0:T(1,128)}', space=vmem, size = 0x12000, scoped, tag = 'internal scratch']
  %s0 = inlined_call_operand.vmem [shape: bf16[512,16], index: 0, kind: input, shape index: {}]
  %s1 = inlined_call_operand.vmem [shape: bf16[16,8], index: 1, kind: input, shape index: {}]
  %s2 = inlined_call_operand.vmem [shape: bf16[512,8], index: 2, kind: output, shape index: {0}]
  %s3 = inlined_call_operand.vmem [shape: f32[1,2,8], index: 3, kind: output, shape index: {1}]
  %4 = xla_tuple %s2, %s3
  %s5 = sld [smem:[#allocation0]]
  $region26: #{bottleneck_forward.4} parent=0
    _
  %s7 = ssub.s32 1, %s5
  %s8 = scalar_select 0, %s7, %s5
  // Predicated region
  $region2: #{bottleneck_forward.4} parent=0 // pred_check
    _
  $region3: #{bottleneck_forward.4} parent=0 // pred_check_branch
    %10 = sbr.rel (0) target = $region5
  $region4: #{bottleneck_forward.4} parent=0 // pred_region
    _
  $region5: #{bottleneck_forward.4} parent=0 // pred_fallthru
    _
  // Predicated region
  $region6: #{bottleneck_forward.4} parent=0 // pred_check
    _
  $region7: #{bottleneck_forward.4} parent=0 // pred_check_branch
    %12 = sbr.rel (0) target = $region9
  $region8: #{bottleneck_forward.4} parent=0 // pred_region
    _
  $region9: #{bottleneck_forward.4} parent=0 // pred_fallthru
    _
  %v14 = vld [vmem:[%s0] sm:$0xf]
  %v15 = vld [vmem:[%s0 + $0x4] sm:$0xf]
  %v16 = vld [vmem:[%s0 + $0x8] sm:$0xf]
  %v17 = vld [vmem:[%s0 + $0xc] sm:$0xf]
  %v18 = vld [vmem:[%s0 + $0x10] sm:$0xf]
  %v19 = vld [vmem:[%s0 + $0x14] sm:$0xf]
  %v20 = vld [vmem:[%s0 + $0x18] sm:$0xf]
  %v21 = vld [vmem:[%s0 + $0x1c] sm:$0xf]
  %v22 = vld [vmem:[%s0 + $0x20] sm:$0xf]
  %v23 = vld [vmem:[%s0 + $0x24] sm:$0xf]
  %v24 = vld [vmem:[%s0 + $0x28] sm:$0xf]
  %v25 = vld [vmem:[%s0 + $0x2c] sm:$0xf]
  %v26 = vld [vmem:[%s0 + $0x30] sm:$0xf]
  %v27 = vld [vmem:[%s0 + $0x34] sm:$0xf]
  %v28 = vld [vmem:[%s0 + $0x38] sm:$0xf]
  %v29 = vld [vmem:[%s0 + $0x3c] sm:$0xf]
  %v30 = vld [vmem:[%s0 + $0x40] sm:$0xf]
  %v31 = vld [vmem:[%s0 + $0x44] sm:$0xf]
  %v32 = vld [vmem:[%s0 + $0x48] sm:$0xf]
  %v33 = vld [vmem:[%s0 + $0x4c] sm:$0xf]
  %v34 = vld [vmem:[%s0 + $0x50] sm:$0xf]
  %v35 = vld [vmem:[%s0 + $0x54] sm:$0xf]
  %v36 = vld [vmem:[%s0 + $0x58] sm:$0xf]
  %v37 = vld [vmem:[%s0 + $0x5c] sm:$0xf]
  %v38 = vld [vmem:[%s0 + $0x60] sm:$0xf]
  %v39 = vld [vmem:[%s0 + $0x64] sm:$0xf]
  %v40 = vld [vmem:[%s0 + $0x68] sm:$0xf]
  %v41 = vld [vmem:[%s0 + $0x6c] sm:$0xf]
  %v42 = vld [vmem:[%s0 + $0x70] sm:$0xf]
  %v43 = vld [vmem:[%s0 + $0x74] sm:$0xf]
  %v44 = vld [vmem:[%s0 + $0x78] sm:$0xf]
  %v45 = vld [vmem:[%s0 + $0x7c] sm:$0xf]
  %v46 = vld [vmem:[%s0 + $0x80] sm:$0xf]
  %v47 = vld [vmem:[%s0 + $0x84] sm:$0xf]
  %v48 = vld [vmem:[%s0 + $0x88] sm:$0xf]
  %v49 = vld [vmem:[%s0 + $0x8c] sm:$0xf]
  %v50 = vld [vmem:[%s0 + $0x90] sm:$0xf]
  %v51 = vld [vmem:[%s0 + $0x94] sm:$0xf]
  %v52 = vld [vmem:[%s0 + $0x98] sm:$0xf]
  %v53 = vld [vmem:[%s0 + $0x9c] sm:$0xf]
  %v54 = vld [vmem:[%s0 + $0xa0] sm:$0xf]
  %v55 = vld [vmem:[%s0 + $0xa4] sm:$0xf]
  %v56 = vld [vmem:[%s0 + $0xa8] sm:$0xf]
  %v57 = vld [vmem:[%s0 + $0xac] sm:$0xf]
  %v58 = vld [vmem:[%s0 + $0xb0] sm:$0xf]
  %v59 = vld [vmem:[%s0 + $0xb4] sm:$0xf]
  %v60 = vld [vmem:[%s0 + $0xb8] sm:$0xf]
  %v61 = vld [vmem:[%s0 + $0xbc] sm:$0xf]
  %v62 = vld [vmem:[%s0 + $0xc0] sm:$0xf]
  %v63 = vld [vmem:[%s0 + $0xc4] sm:$0xf]
  %v64 = vld [vmem:[%s0 + $0xc8] sm:$0xf]
  %v65 = vld [vmem:[%s0 + $0xcc] sm:$0xf]
  %v66 = vld [vmem:[%s0 + $0xd0] sm:$0xf]
  %v67 = vld [vmem:[%s0 + $0xd4] sm:$0xf]
  %v68 = vld [vmem:[%s0 + $0xd8] sm:$0xf]
  %v69 = vld [vmem:[%s0 + $0xdc] sm:$0xf]
  %v70 = vld [vmem:[%s0 + $0xe0] sm:$0xf]
  %v71 = vld [vmem:[%s0 + $0xe4] sm:$0xf]
  %v72 = vld [vmem:[%s0 + $0xe8] sm:$0xf]
  %v73 = vld [vmem:[%s0 + $0xec] sm:$0xf]
  %v74 = vld [vmem:[%s0 + $0xf0] sm:$0xf]
  %v75 = vld [vmem:[%s0 + $0xf4] sm:$0xf]
  %v76 = vld [vmem:[%s0 + $0xf8] sm:$0xf]
  %v77 = vld [vmem:[%s0 + $0xfc] sm:$0xf]
  %v78 = vld [vmem:[%s1] sm:$0xf]
  %v79 = vld [vmem:[%s1 + $0x4] sm:$0xf]
  %v144 = vunpack.c.l.b16 %v14
  %v145 = vunpack.c.l.b16 %v15
  %v146 = vunpack.c.l.b16 %v16
  %v147 = vunpack.c.l.b16 %v17
  %v148 = vunpack.c.l.b16 %v18
  %v149 = vunpack.c.l.b16 %v19
  %v150 = vunpack.c.l.b16 %v20
  %v151 = vunpack.c.l.b16 %v21
  %v152 = vunpack.c.l.b16 %v22
  %v153 = vunpack.c.l.b16 %v23
  %v154 = vunpack.c.l.b16 %v24
  %v155 = vunpack.c.l.b16 %v25
  %v156 = vunpack.c.l.b16 %v26
  %v157 = vunpack.c.l.b16 %v27
  %v158 = vunpack.c.l.b16 %v28
  %v159 = vunpack.c.l.b16 %v29
  %v160 = vunpack.c.l.b16 %v30
  %v161 = vunpack.c.l.b16 %v31
  %v162 = vunpack.c.l.b16 %v32
  %v163 = vunpack.c.l.b16 %v33
  %v164 = vunpack.c.l.b16 %v34
  %v165 = vunpack.c.l.b16 %v35
  %v166 = vunpack.c.l.b16 %v36
  %v167 = vunpack.c.l.b16 %v37
  %v168 = vunpack.c.l.b16 %v38
  %v169 = vunpack.c.l.b16 %v39
  %v170 = vunpack.c.l.b16 %v40
  %v171 = vunpack.c.l.b16 %v41
  %v172 = vunpack.c.l.b16 %v42
  %v173 = vunpack.c.l.b16 %v43
  %v174 = vunpack.c.l.b16 %v44
  %v175 = vunpack.c.l.b16 %v45
  %v176 = vunpack.c.l.b16 %v46
  %v177 = vunpack.c.l.b16 %v47
  %v178 = vunpack.c.l.b16 %v48
  %v179 = vunpack.c.l.b16 %v49
  %v180 = vunpack.c.l.b16 %v50
  %v181 = vunpack.c.l.b16 %v51
  %v182 = vunpack.c.l.b16 %v52
  %v183 = vunpack.c.l.b16 %v53
  %v184 = vunpack.c.l.b16 %v54
  %v185 = vunpack.c.l.b16 %v55
  %v186 = vunpack.c.l.b16 %v56
  %v187 = vunpack.c.l.b16 %v57
  %v188 = vunpack.c.l.b16 %v58
  %v189 = vunpack.c.l.b16 %v59
  %v190 = vunpack.c.l.b16 %v60
  %v191 = vunpack.c.l.b16 %v61
  %v192 = vunpack.c.l.b16 %v62
  %v193 = vunpack.c.l.b16 %v63
  %v194 = vunpack.c.l.b16 %v64
  %v195 = vunpack.c.l.b16 %v65
  %v196 = vunpack.c.l.b16 %v66
  %v197 = vunpack.c.l.b16 %v67
  %v198 = vunpack.c.l.b16 %v68
  %v199 = vunpack.c.l.b16 %v69
  %v200 = vunpack.c.l.b16 %v70
  %v201 = vunpack.c.l.b16 %v71
  %v202 = vunpack.c.l.b16 %v72
  %v203 = vunpack.c.l.b16 %v73
  %v204 = vunpack.c.l.b16 %v74
  %v205 = vunpack.c.l.b16 %v75
  %v206 = vunpack.c.l.b16 %v76
  %v207 = vunpack.c.l.b16 %v77
  %v208 = vpack.c.b16 %v145, %v144
  %v209 = vpack.c.b16 %v147, %v146
  %v210 = vpack.c.b16 %v149, %v148
  %v211 = vpack.c.b16 %v151, %v150
  %v212 = vpack.c.b16 %v153, %v152
  %v213 = vpack.c.b16 %v155, %v154
  %v214 = vpack.c.b16 %v157, %v156
  %v215 = vpack.c.b16 %v159, %v158
  %v216 = vpack.c.b16 %v161, %v160
  %v217 = vpack.c.b16 %v163, %v162
  %v218 = vpack.c.b16 %v165, %v164
  %v219 = vpack.c.b16 %v167, %v166
  %v220 = vpack.c.b16 %v169, %v168
  %v221 = vpack.c.b16 %v171, %v170
  %v222 = vpack.c.b16 %v173, %v172
  %v223 = vpack.c.b16 %v175, %v174
  %v224 = vpack.c.b16 %v177, %v176
  %v225 = vpack.c.b16 %v179, %v178
  %v226 = vpack.c.b16 %v181, %v180
  %v227 = vpack.c.b16 %v183, %v182
  %v228 = vpack.c.b16 %v185, %v184
  %v229 = vpack.c.b16 %v187, %v186
  %v230 = vpack.c.b16 %v189, %v188
  %v231 = vpack.c.b16 %v191, %v190
  %v232 = vpack.c.b16 %v193, %v192
  %v233 = vpack.c.b16 %v195, %v194
  %v234 = vpack.c.b16 %v197, %v196
  %v235 = vpack.c.b16 %v199, %v198
  %v236 = vpack.c.b16 %v201, %v200
  %v237 = vpack.c.b16 %v203, %v202
  %v238 = vpack.c.b16 %v205, %v204
  %v239 = vpack.c.b16 %v207, %v206
  %v242 = vunpack.c.l.b16 %v78
  %v243 = vunpack.c.l.b16 %v79
  %v244 = vpack.c.b16 %v243, %v242
  %vm246 = vcmask 130048
  %v248 = vsel %vm246, %v208, 0
  %v251 = vsel %vm246, %v209, 0
  %v254 = vsel %vm246, %v210, 0
  %v257 = vsel %vm246, %v211, 0
  %v260 = vsel %vm246, %v212, 0
  %v263 = vsel %vm246, %v213, 0
  %v266 = vsel %vm246, %v214, 0
  %v269 = vsel %vm246, %v215, 0
  %v272 = vsel %vm246, %v216, 0
  %v275 = vsel %vm246, %v217, 0
  %v278 = vsel %vm246, %v218, 0
  %v281 = vsel %vm246, %v219, 0
  %v284 = vsel %vm246, %v220, 0
  %v287 = vsel %vm246, %v221, 0
  %v290 = vsel %vm246, %v222, 0
  %v293 = vsel %vm246, %v223, 0
  %v296 = vsel %vm246, %v224, 0
  %v299 = vsel %vm246, %v225, 0
  %v302 = vsel %vm246, %v226, 0
  %v305 = vsel %vm246, %v227, 0
  %v308 = vsel %vm246, %v228, 0
  %v311 = vsel %vm246, %v229, 0
  %v314 = vsel %vm246, %v230, 0
  %v317 = vsel %vm246, %v231, 0
  %v320 = vsel %vm246, %v232, 0
  %v323 = vsel %vm246, %v233, 0
  %v326 = vsel %vm246, %v234, 0
  %v329 = vsel %vm246, %v235, 0
  %v332 = vsel %vm246, %v236, 0
  %v335 = vsel %vm246, %v237, 0
  %v338 = vsel %vm246, %v238, 0
  %v341 = vsel %vm246, %v239, 0
  %343 = vmatprep.subr.bf16.mxu0 0
  %344 = vmatpush1.bf16.msra.mxu0 0
  %345 = vmatprep.subr.bf16.mxu0 0
  %346 = vmatpush1.bf16.msra.mxu0 0
  %347 = vmatprep.subr.bf16.mxu0 0
  %348 = vmatpush1.bf16.msra.mxu0 0
  %349 = vmatprep.subr.bf16.mxu0 0
  %350 = vmatpush1.bf16.msra.mxu0 0
  %351 = vmatprep.subr.bf16.mxu0 0
  %352 = vmatpush1.bf16.msra.mxu0 0
  %353 = vmatprep.subr.bf16.mxu0 0
  %354 = vmatpush1.bf16.msra.mxu0 0
  %355 = vmatprep.subr.bf16.mxu0 0
  %356 = vmatpush1.bf16.msra.mxu0 0
  %357 = vmatprep.subr.bf16.mxu0 0
  %358 = vmatpush1.bf16.msra.mxu0 %v244
  %359 = vmatprep.subr.bf16.mxu0 0
  %360 = vmatpush2.bf16.msra.mxu0 0
  %361 = vmatprep.subr.bf16.mxu0 0
  %362 = vmatpush2.bf16.msra.mxu0 0
  %363 = vmatprep.subr.bf16.mxu0 0
  %364 = vmatpush2.bf16.msra.mxu0 0
  %365 = vmatprep.subr.bf16.mxu0 0
  %366 = vmatpush2.bf16.msra.mxu0 0
  %367 = vmatprep.subr.bf16.mxu0 0
  %368 = vmatpush2.bf16.msra.mxu0 0
  %369 = vmatprep.subr.bf16.mxu0 0
  %370 = vmatpush2.bf16.msra.mxu0 0
  %371 = vmatprep.subr.bf16.mxu0 0
  %372 = vmatpush2.bf16.msra.mxu0 0
  %373 = vmatprep.subr.bf16.mxu0 0
  %374 = vmatpush2.bf16.msra.mxu0 0
  %375 = vmatprep.mubr.bf16.mxu0 0
  %376 = vmatmul.mubr.bf16.gmra.mxu0 %v248
  %v377 = vpop.f32.mrf.mxu0
  %v378 = vadd.f32 0.0, %v377
  %v379 = vpop.f32.mrf.mxu0
  %v380 = vpop.f32.mrf.mxu0
  %v381 = vadd.f32 0.0, %v380
  %v382 = vpop.f32.mrf.mxu0
  %383 = vmatprep.mubr.bf16.mxu0 0
  %384 = vmatmul.mubr.bf16.gmra.mxu0 %v251
  %v385 = vpop.f32.mrf.mxu0
  %v386 = vadd.f32 0.0, %v385
  %v387 = vpop.f32.mrf.mxu0
  %v388 = vpop.f32.mrf.mxu0
  %v389 = vadd.f32 0.0, %v388
  %v390 = vpop.f32.mrf.mxu0
  %391 = vmatprep.mubr.bf16.mxu0 0
  %392 = vmatmul.mubr.bf16.gmra.mxu0 %v254
  %v393 = vpop.f32.mrf.mxu0
  %v394 = vadd.f32 0.0, %v393
  %v395 = vpop.f32.mrf.mxu0
  %v396 = vpop.f32.mrf.mxu0
  %v397 = vadd.f32 0.0, %v396
  %v398 = vpop.f32.mrf.mxu0
  %399 = vmatprep.mubr.bf16.mxu0 0
  %400 = vmatmul.mubr.bf16.gmra.mxu0 %v257
  %v401 = vpop.f32.mrf.mxu0
  %v402 = vadd.f32 0.0, %v401
  %v403 = vpop.f32.mrf.mxu0
  %v404 = vpop.f32.mrf.mxu0
  %v405 = vadd.f32 0.0, %v404
  %v406 = vpop.f32.mrf.mxu0
  %407 = vmatprep.mubr.bf16.mxu0 0
  %408 = vmatmul.mubr.bf16.gmra.mxu0 %v260
  %v409 = vpop.f32.mrf.mxu0
  %v410 = vadd.f32 0.0, %v409
  %v411 = vpop.f32.mrf.mxu0
  %v412 = vpop.f32.mrf.mxu0
  %v413 = vadd.f32 0.0, %v412
  %v414 = vpop.f32.mrf.mxu0
  %415 = vmatprep.mubr.bf16.mxu0 0
  %416 = vmatmul.mubr.bf16.gmra.mxu0 %v263
  %v417 = vpop.f32.mrf.mxu0
  %v418 = vadd.f32 0.0, %v417
  %v419 = vpop.f32.mrf.mxu0
  %v420 = vpop.f32.mrf.mxu0
  %v421 = vadd.f32 0.0, %v420
  %v422 = vpop.f32.mrf.mxu0
  %423 = vmatprep.mubr.bf16.mxu0 0
  %424 = vmatmul.mubr.bf16.gmra.mxu0 %v266
  %v425 = vpop.f32.mrf.mxu0
  %v426 = vadd.f32 0.0, %v425
  %v427 = vpop.f32.mrf.mxu0
  %v428 = vpop.f32.mrf.mxu0
  %v429 = vadd.f32 0.0, %v428
  %v430 = vpop.f32.mrf.mxu0
  %431 = vmatprep.mubr.bf16.mxu0 0
  %432 = vmatmul.mubr.bf16.gmra.mxu0 %v269
  %v433 = vpop.f32.mrf.mxu0
  %v434 = vadd.f32 0.0, %v433
  %v435 = vpop.f32.mrf.mxu0
  %v436 = vpop.f32.mrf.mxu0
  %v437 = vadd.f32 0.0, %v436
  %v438 = vpop.f32.mrf.mxu0
  %439 = vmatprep.mubr.bf16.mxu0 0
  %440 = vmatmul.mubr.bf16.gmra.mxu0 %v272
  %v441 = vpop.f32.mrf.mxu0
  %v442 = vadd.f32 0.0, %v441
  %v443 = vpop.f32.mrf.mxu0
  %v444 = vpop.f32.mrf.mxu0
  %v445 = vadd.f32 0.0, %v444
  %v446 = vpop.f32.mrf.mxu0
  %447 = vmatprep.mubr.bf16.mxu0 0
  %448 = vmatmul.mubr.bf16.gmra.mxu0 %v275
  %v449 = vpop.f32.mrf.mxu0
  %v450 = vadd.f32 0.0, %v449
  %v451 = vpop.f32.mrf.mxu0
  %v452 = vpop.f32.mrf.mxu0
  %v453 = vadd.f32 0.0, %v452
  %v454 = vpop.f32.mrf.mxu0
  %455 = vmatprep.mubr.bf16.mxu0 0
  %456 = vmatmul.mubr.bf16.gmra.mxu0 %v278
  %v457 = vpop.f32.mrf.mxu0
  %v458 = vadd.f32 0.0, %v457
  %v459 = vpop.f32.mrf.mxu0
  %v460 = vpop.f32.mrf.mxu0
  %v461 = vadd.f32 0.0, %v460
  %v462 = vpop.f32.mrf.mxu0
  %463 = vmatprep.mubr.bf16.mxu0 0
  %464 = vmatmul.mubr.bf16.gmra.mxu0 %v281
  %v465 = vpop.f32.mrf.mxu0
  %v466 = vadd.f32 0.0, %v465
  %v467 = vpop.f32.mrf.mxu0
  %v468 = vpop.f32.mrf.mxu0
  %v469 = vadd.f32 0.0, %v468
  %v470 = vpop.f32.mrf.mxu0
  %471 = vmatprep.mubr.bf16.mxu0 0
  %472 = vmatmul.mubr.bf16.gmra.mxu0 %v284
  %v473 = vpop.f32.mrf.mxu0
  %v474 = vadd.f32 0.0, %v473
  %v475 = vpop.f32.mrf.mxu0
  %v476 = vpop.f32.mrf.mxu0
  %v477 = vadd.f32 0.0, %v476
  %v478 = vpop.f32.mrf.mxu0
  %479 = vmatprep.mubr.bf16.mxu0 0
  %480 = vmatmul.mubr.bf16.gmra.mxu0 %v287
  %v481 = vpop.f32.mrf.mxu0
  %v482 = vadd.f32 0.0, %v481
  %v483 = vpop.f32.mrf.mxu0
  %v484 = vpop.f32.mrf.mxu0
  %v485 = vadd.f32 0.0, %v484
  %v486 = vpop.f32.mrf.mxu0
  %487 = vmatprep.mubr.bf16.mxu0 0
  %488 = vmatmul.mubr.bf16.gmra.mxu0 %v290
  %v489 = vpop.f32.mrf.mxu0
  %v490 = vadd.f32 0.0, %v489
  %v491 = vpop.f32.mrf.mxu0
  %v492 = vpop.f32.mrf.mxu0
  %v493 = vadd.f32 0.0, %v492
  %v494 = vpop.f32.mrf.mxu0
  %495 = vmatprep.mubr.bf16.mxu0 0
  %496 = vmatmul.mubr.bf16.gmra.mxu0 %v293
  %v497 = vpop.f32.mrf.mxu0
  %v498 = vadd.f32 0.0, %v497
  %v499 = vpop.f32.mrf.mxu0
  %v500 = vpop.f32.mrf.mxu0
  %v501 = vadd.f32 0.0, %v500
  %v502 = vpop.f32.mrf.mxu0
  %503 = vmatprep.mubr.bf16.mxu0 0
  %504 = vmatmul.mubr.bf16.gmra.mxu0 %v296
  %v505 = vpop.f32.mrf.mxu0
  %v506 = vadd.f32 0.0, %v505
  %v507 = vpop.f32.mrf.mxu0
  %v508 = vpop.f32.mrf.mxu0
  %v509 = vadd.f32 0.0, %v508
  %v510 = vpop.f32.mrf.mxu0
  %511 = vmatprep.mubr.bf16.mxu0 0
  %512 = vmatmul.mubr.bf16.gmra.mxu0 %v299
  %v513 = vpop.f32.mrf.mxu0
  %v514 = vadd.f32 0.0, %v513
  %v515 = vpop.f32.mrf.mxu0
  %v516 = vpop.f32.mrf.mxu0
  %v517 = vadd.f32 0.0, %v516
  %v518 = vpop.f32.mrf.mxu0
  %519 = vmatprep.mubr.bf16.mxu0 0
  %520 = vmatmul.mubr.bf16.gmra.mxu0 %v302
  %v521 = vpop.f32.mrf.mxu0
  %v522 = vadd.f32 0.0, %v521
  %v523 = vpop.f32.mrf.mxu0
  %v524 = vpop.f32.mrf.mxu0
  %v525 = vadd.f32 0.0, %v524
  %v526 = vpop.f32.mrf.mxu0
  %527 = vmatprep.mubr.bf16.mxu0 0
  %528 = vmatmul.mubr.bf16.gmra.mxu0 %v305
  %v529 = vpop.f32.mrf.mxu0
  %v530 = vadd.f32 0.0, %v529
  %v531 = vpop.f32.mrf.mxu0
  %v532 = vpop.f32.mrf.mxu0
  %v533 = vadd.f32 0.0, %v532
  %v534 = vpop.f32.mrf.mxu0
  %535 = vmatprep.mubr.bf16.mxu0 0
  %536 = vmatmul.mubr.bf16.gmra.mxu0 %v308
  %v537 = vpop.f32.mrf.mxu0
  %v538 = vadd.f32 0.0, %v537
  %v539 = vpop.f32.mrf.mxu0
  %v540 = vpop.f32.mrf.mxu0
  %v541 = vadd.f32 0.0, %v540
  %v542 = vpop.f32.mrf.mxu0
  %543 = vmatprep.mubr.bf16.mxu0 0
  %544 = vmatmul.mubr.bf16.gmra.mxu0 %v311
  %v545 = vpop.f32.mrf.mxu0
  %v546 = vadd.f32 0.0, %v545
  %v547 = vpop.f32.mrf.mxu0
  %v548 = vpop.f32.mrf.mxu0
  %v549 = vadd.f32 0.0, %v548
  %v550 = vpop.f32.mrf.mxu0
  %551 = vmatprep.mubr.bf16.mxu0 0
  %552 = vmatmul.mubr.bf16.gmra.mxu0 %v314
  %v553 = vpop.f32.mrf.mxu0
  %v554 = vadd.f32 0.0, %v553
  %v555 = vpop.f32.mrf.mxu0
  %v556 = vpop.f32.mrf.mxu0
  %v557 = vadd.f32 0.0, %v556
  %v558 = vpop.f32.mrf.mxu0
  %559 = vmatprep.mubr.bf16.mxu0 0
  %560 = vmatmul.mubr.bf16.gmra.mxu0 %v317
  %v561 = vpop.f32.mrf.mxu0
  %v562 = vadd.f32 0.0, %v561
  %v563 = vpop.f32.mrf.mxu0
  %v564 = vpop.f32.mrf.mxu0
  %v565 = vadd.f32 0.0, %v564
  %v566 = vpop.f32.mrf.mxu0
  %567 = vmatprep.mubr.bf16.mxu0 0
  %568 = vmatmul.mubr.bf16.gmra.mxu0 %v320
  %v569 = vpop.f32.mrf.mxu0
  %v570 = vadd.f32 0.0, %v569
  %v571 = vpop.f32.mrf.mxu0
  %v572 = vpop.f32.mrf.mxu0
  %v573 = vadd.f32 0.0, %v572
  %v574 = vpop.f32.mrf.mxu0
  %575 = vmatprep.mubr.bf16.mxu0 0
  %576 = vmatmul.mubr.bf16.gmra.mxu0 %v323
  %v577 = vpop.f32.mrf.mxu0
  %v578 = vadd.f32 0.0, %v577
  %v579 = vpop.f32.mrf.mxu0
  %v580 = vpop.f32.mrf.mxu0
  %v581 = vadd.f32 0.0, %v580
  %v582 = vpop.f32.mrf.mxu0
  %583 = vmatprep.mubr.bf16.mxu0 0
  %584 = vmatmul.mubr.bf16.gmra.mxu0 %v326
  %v585 = vpop.f32.mrf.mxu0
  %v586 = vadd.f32 0.0, %v585
  %v587 = vpop.f32.mrf.mxu0
  %v588 = vpop.f32.mrf.mxu0
  %v589 = vadd.f32 0.0, %v588
  %v590 = vpop.f32.mrf.mxu0
  %591 = vmatprep.mubr.bf16.mxu0 0
  %592 = vmatmul.mubr.bf16.gmra.mxu0 %v329
  %v593 = vpop.f32.mrf.mxu0
  %v594 = vadd.f32 0.0, %v593
  %v595 = vpop.f32.mrf.mxu0
  %v596 = vpop.f32.mrf.mxu0
  %v597 = vadd.f32 0.0, %v596
  %v598 = vpop.f32.mrf.mxu0
  %599 = vmatprep.mubr.bf16.mxu0 0
  %600 = vmatmul.mubr.bf16.gmra.mxu0 %v332
  %v601 = vpop.f32.mrf.mxu0
  %v602 = vadd.f32 0.0, %v601
  %v603 = vpop.f32.mrf.mxu0
  %v604 = vpop.f32.mrf.mxu0
  %v605 = vadd.f32 0.0, %v604
  %v606 = vpop.f32.mrf.mxu0
  %607 = vmatprep.mubr.bf16.mxu0 0
  %608 = vmatmul.mubr.bf16.gmra.mxu0 %v335
  %v609 = vpop.f32.mrf.mxu0
  %v610 = vadd.f32 0.0, %v609
  %v611 = vpop.f32.mrf.mxu0
  %v612 = vpop.f32.mrf.mxu0
  %v613 = vadd.f32 0.0, %v612
  %v614 = vpop.f32.mrf.mxu0
  %615 = vmatprep.mubr.bf16.mxu0 0
  %616 = vmatmul.mubr.bf16.gmra.mxu0 %v338
  %v617 = vpop.f32.mrf.mxu0
  %v618 = vadd.f32 0.0, %v617
  %v619 = vpop.f32.mrf.mxu0
  %v620 = vpop.f32.mrf.mxu0
  %v621 = vadd.f32 0.0, %v620
  %v622 = vpop.f32.mrf.mxu0
  %623 = vmatprep.mubr.bf16.mxu0 0
  %624 = vmatmul.mubr.bf16.gmra.mxu0 %v341
  %v625 = vpop.f32.mrf.mxu0
  %v626 = vadd.f32 0.0, %v625
  %v627 = vpop.f32.mrf.mxu0
  %v628 = vpop.f32.mrf.mxu0
  %v629 = vadd.f32 0.0, %v628
  %v630 = vpop.f32.mrf.mxu0
  %631 = vdwg.mxu0
  %v632 = vpack.c.bf16 %v381, %v378
  %v633 = vpack.c.bf16 %v389, %v386
  %v634 = vpack.c.bf16 %v397, %v394
  %v635 = vpack.c.bf16 %v405, %v402
  %v636 = vpack.c.bf16 %v413, %v410
  %v637 = vpack.c.bf16 %v421, %v418
  %v638 = vpack.c.bf16 %v429, %v426
  %v639 = vpack.c.bf16 %v437, %v434
  %v640 = vpack.c.bf16 %v445, %v442
  %v641 = vpack.c.bf16 %v453, %v450
  %v642 = vpack.c.bf16 %v461, %v458
  %v643 = vpack.c.bf16 %v469, %v466
  %v644 = vpack.c.bf16 %v477, %v474
  %v645 = vpack.c.bf16 %v485, %v482
  %v646 = vpack.c.bf16 %v493, %v490
  %v647 = vpack.c.bf16 %v501, %v498
  %v648 = vpack.c.bf16 %v509, %v506
  %v649 = vpack.c.bf16 %v517, %v514
  %v650 = vpack.c.bf16 %v525, %v522
  %v651 = vpack.c.bf16 %v533, %v530
  %v652 = vpack.c.bf16 %v541, %v538
  %v653 = vpack.c.bf16 %v549, %v546
  %v654 = vpack.c.bf16 %v557, %v554
  %v655 = vpack.c.bf16 %v565, %v562
  %v656 = vpack.c.bf16 %v573, %v570
  %v657 = vpack.c.bf16 %v581, %v578
  %v658 = vpack.c.bf16 %v589, %v586
  %v659 = vpack.c.bf16 %v597, %v594
  %v660 = vpack.c.bf16 %v605, %v602
  %v661 = vpack.c.bf16 %v613, %v610
  %v662 = vpack.c.bf16 %v621, %v618
  %v663 = vpack.c.bf16 %v629, %v626
  %v696 = vunpack.c.l.b16 %v632
  %v697 = vunpack.c.h.b16 %v632
  %v698 = vunpack.c.l.b16 %v633
  %v699 = vunpack.c.h.b16 %v633
  %v700 = vunpack.c.l.b16 %v634
  %v701 = vunpack.c.h.b16 %v634
  %v702 = vunpack.c.l.b16 %v635
  %v703 = vunpack.c.h.b16 %v635
  %v704 = vunpack.c.l.b16 %v636
  %v705 = vunpack.c.h.b16 %v636
  %v706 = vunpack.c.l.b16 %v637
  %v707 = vunpack.c.h.b16 %v637
  %v708 = vunpack.c.l.b16 %v638
  %v709 = vunpack.c.h.b16 %v638
  %v710 = vunpack.c.l.b16 %v639
  %v711 = vunpack.c.h.b16 %v639
  %v712 = vunpack.c.l.b16 %v640
  %v713 = vunpack.c.h.b16 %v640
  %v714 = vunpack.c.l.b16 %v641
  %v715 = vunpack.c.h.b16 %v641
  %v716 = vunpack.c.l.b16 %v642
  %v717 = vunpack.c.h.b16 %v642
  %v718 = vunpack.c.l.b16 %v643
  %v719 = vunpack.c.h.b16 %v643
  %v720 = vunpack.c.l.b16 %v644
  %v721 = vunpack.c.h.b16 %v644
  %v722 = vunpack.c.l.b16 %v645
  %v723 = vunpack.c.h.b16 %v645
  %v724 = vunpack.c.l.b16 %v646
  %v725 = vunpack.c.h.b16 %v646
  %v726 = vunpack.c.l.b16 %v647
  %v727 = vunpack.c.h.b16 %v647
  %v728 = vunpack.c.l.b16 %v648
  %v729 = vunpack.c.h.b16 %v648
  %v730 = vunpack.c.l.b16 %v649
  %v731 = vunpack.c.h.b16 %v649
  %v732 = vunpack.c.l.b16 %v650
  %v733 = vunpack.c.h.b16 %v650
  %v734 = vunpack.c.l.b16 %v651
  %v735 = vunpack.c.h.b16 %v651
  %v736 = vunpack.c.l.b16 %v652
  %v737 = vunpack.c.h.b16 %v652
  %v738 = vunpack.c.l.b16 %v653
  %v739 = vunpack.c.h.b16 %v653
  %v740 = vunpack.c.l.b16 %v654
  %v741 = vunpack.c.h.b16 %v654
  %v742 = vunpack.c.l.b16 %v655
  %v743 = vunpack.c.h.b16 %v655
  %v744 = vunpack.c.l.b16 %v656
  %v745 = vunpack.c.h.b16 %v656
  %v746 = vunpack.c.l.b16 %v657
  %v747 = vunpack.c.h.b16 %v657
  %v748 = vunpack.c.l.b16 %v658
  %v749 = vunpack.c.h.b16 %v658
  %v750 = vunpack.c.l.b16 %v659
  %v751 = vunpack.c.h.b16 %v659
  %v752 = vunpack.c.l.b16 %v660
  %v753 = vunpack.c.h.b16 %v660
  %v754 = vunpack.c.l.b16 %v661
  %v755 = vunpack.c.h.b16 %v661
  %v756 = vunpack.c.l.b16 %v662
  %v757 = vunpack.c.h.b16 %v662
  %v758 = vunpack.c.l.b16 %v663
  %v759 = vunpack.c.h.b16 %v663
  %v760 = vpack.c.b16 %v696, %v696
  %v761 = vpack.c.b16 %v697, %v697
  %v762 = vpack.c.b16 %v698, %v698
  %v763 = vpack.c.b16 %v699, %v699
  %v764 = vpack.c.b16 %v700, %v700
  %v765 = vpack.c.b16 %v701, %v701
  %v766 = vpack.c.b16 %v702, %v702
  %v767 = vpack.c.b16 %v703, %v703
  %v768 = vpack.c.b16 %v704, %v704
  %v769 = vpack.c.b16 %v705, %v705
  %v770 = vpack.c.b16 %v706, %v706
  %v771 = vpack.c.b16 %v707, %v707
  %v772 = vpack.c.b16 %v708, %v708
  %v773 = vpack.c.b16 %v709, %v709
  %v774 = vpack.c.b16 %v710, %v710
  %v775 = vpack.c.b16 %v711, %v711
  %v776 = vpack.c.b16 %v712, %v712
  %v777 = vpack.c.b16 %v713, %v713
  %v778 = vpack.c.b16 %v714, %v714
  %v779 = vpack.c.b16 %v715, %v715
  %v780 = vpack.c.b16 %v716, %v716
  %v781 = vpack.c.b16 %v717, %v717
  %v782 = vpack.c.b16 %v718, %v718
  %v783 = vpack.c.b16 %v719, %v719
  %v784 = vpack.c.b16 %v720, %v720
  %v785 = vpack.c.b16 %v721, %v721
  %v786 = vpack.c.b16 %v722, %v722
  %v787 = vpack.c.b16 %v723, %v723
  %v788 = vpack.c.b16 %v724, %v724
  %v789 = vpack.c.b16 %v725, %v725
  %v790 = vpack.c.b16 %v726, %v726
  %v791 = vpack.c.b16 %v727, %v727
  %v792 = vpack.c.b16 %v728, %v728
  %v793 = vpack.c.b16 %v729, %v729
  %v794 = vpack.c.b16 %v730, %v730
  %v795 = vpack.c.b16 %v731, %v731
  %v796 = vpack.c.b16 %v732, %v732
  %v797 = vpack.c.b16 %v733, %v733
  %v798 = vpack.c.b16 %v734, %v734
  %v799 = vpack.c.b16 %v735, %v735
  %v800 = vpack.c.b16 %v736, %v736
  %v801 = vpack.c.b16 %v737, %v737
  %v802 = vpack.c.b16 %v738, %v738
  %v803 = vpack.c.b16 %v739, %v739
  %v804 = vpack.c.b16 %v740, %v740
  %v805 = vpack.c.b16 %v741, %v741
  %v806 = vpack.c.b16 %v742, %v742
  %v807 = vpack.c.b16 %v743, %v743
  %v808 = vpack.c.b16 %v744, %v744
  %v809 = vpack.c.b16 %v745, %v745
  %v810 = vpack.c.b16 %v746, %v746
  %v811 = vpack.c.b16 %v747, %v747
  %v812 = vpack.c.b16 %v748, %v748
  %v813 = vpack.c.b16 %v749, %v749
  %v814 = vpack.c.b16 %v750, %v750
  %v815 = vpack.c.b16 %v751, %v751
  %v816 = vpack.c.b16 %v752, %v752
  %v817 = vpack.c.b16 %v753, %v753
  %v818 = vpack.c.b16 %v754, %v754
  %v819 = vpack.c.b16 %v755, %v755
  %v820 = vpack.c.b16 %v756, %v756
  %v821 = vpack.c.b16 %v757, %v757
  %v822 = vpack.c.b16 %v758, %v758
  %v823 = vpack.c.b16 %v759, %v759
  %vm888 = vcmask 60416
  %889 = vst.msk [vmem:[%s2] sm:$0xf] %vm888, %v760
  %890 = vst.msk [vmem:[%s2 + $0x4] sm:$0xf] %vm888, %v761
  %891 = vst.msk [vmem:[%s2 + $0x8] sm:$0xf] %vm888, %v762
  %892 = vst.msk [vmem:[%s2 + $0xc] sm:$0xf] %vm888, %v763
  %893 = vst.msk [vmem:[%s2 + $0x10] sm:$0xf] %vm888, %v764
  %894 = vst.msk [vmem:[%s2 + $0x14] sm:$0xf] %vm888, %v765
  %895 = vst.msk [vmem:[%s2 + $0x18] sm:$0xf] %vm888, %v766
  %896 = vst.msk [vmem:[%s2 + $0x1c] sm:$0xf] %vm888, %v767
  %897 = vst.msk [vmem:[%s2 + $0x20] sm:$0xf] %vm888, %v768
  %898 = vst.msk [vmem:[%s2 + $0x24] sm:$0xf] %vm888, %v769
  %899 = vst.msk [vmem:[%s2 + $0x28] sm:$0xf] %vm888, %v770
  %900 = vst.msk [vmem:[%s2 + $0x2c] sm:$0xf] %vm888, %v771
  %901 = vst.msk [vmem:[%s2 + $0x30] sm:$0xf] %vm888, %v772
  %902 = vst.msk [vmem:[%s2 + $0x34] sm:$0xf] %vm888, %v773
  %903 = vst.msk [vmem:[%s2 + $0x38] sm:$0xf] %vm888, %v774
  %904 = vst.msk [vmem:[%s2 + $0x3c] sm:$0xf] %vm888, %v775
  %905 = vst.msk [vmem:[%s2 + $0x40] sm:$0xf] %vm888, %v776
  %906 = vst.msk [vmem:[%s2 + $0x44] sm:$0xf] %vm888, %v777
  %907 = vst.msk [vmem:[%s2 + $0x48] sm:$0xf] %vm888, %v778
  %908 = vst.msk [vmem:[%s2 + $0x4c] sm:$0xf] %vm888, %v779
  %909 = vst.msk [vmem:[%s2 + $0x50] sm:$0xf] %vm888, %v780
  %910 = vst.msk [vmem:[%s2 + $0x54] sm:$0xf] %vm888, %v781
  %911 = vst.msk [vmem:[%s2 + $0x58] sm:$0xf] %vm888, %v782
  %912 = vst.msk [vmem:[%s2 + $0x5c] sm:$0xf] %vm888, %v783
  %913 = vst.msk [vmem:[%s2 + $0x60] sm:$0xf] %vm888, %v784
  %914 = vst.msk [vmem:[%s2 + $0x64] sm:$0xf] %vm888, %v785
  %915 = vst.msk [vmem:[%s2 + $0x68] sm:$0xf] %vm888, %v786
  %916 = vst.msk [vmem:[%s2 + $0x6c] sm:$0xf] %vm888, %v787
  %917 = vst.msk [vmem:[%s2 + $0x70] sm:$0xf] %vm888, %v788
  %918 = vst.msk [vmem:[%s2 + $0x74] sm:$0xf] %vm888, %v789
  %919 = vst.msk [vmem:[%s2 + $0x78] sm:$0xf] %vm888, %v790
  %920 = vst.msk [vmem:[%s2 + $0x7c] sm:$0xf] %vm888, %v791
  %921 = vst.msk [vmem:[%s2 + $0x80] sm:$0xf] %vm888, %v792
  %922 = vst.msk [vmem:[%s2 + $0x84] sm:$0xf] %vm888, %v793
  %923 = vst.msk [vmem:[%s2 + $0x88] sm:$0xf] %vm888, %v794
  %924 = vst.msk [vmem:[%s2 + $0x8c] sm:$0xf] %vm888, %v795
  %925 = vst.msk [vmem:[%s2 + $0x90] sm:$0xf] %vm888, %v796
  %926 = vst.msk [vmem:[%s2 + $0x94] sm:$0xf] %vm888, %v797
  %927 = vst.msk [vmem:[%s2 + $0x98] sm:$0xf] %vm888, %v798
  %928 = vst.msk [vmem:[%s2 + $0x9c] sm:$0xf] %vm888, %v799
  %929 = vst.msk [vmem:[%s2 + $0xa0] sm:$0xf] %vm888, %v800
  %930 = vst.msk [vmem:[%s2 + $0xa4] sm:$0xf] %vm888, %v801
  %931 = vst.msk [vmem:[%s2 + $0xa8] sm:$0xf] %vm888, %v802
  %932 = vst.msk [vmem:[%s2 + $0xac] sm:$0xf] %vm888, %v803
  %933 = vst.msk [vmem:[%s2 + $0xb0] sm:$0xf] %vm888, %v804
  %934 = vst.msk [vmem:[%s2 + $0xb4] sm:$0xf] %vm888, %v805
  %935 = vst.msk [vmem:[%s2 + $0xb8] sm:$0xf] %vm888, %v806
  %936 = vst.msk [vmem:[%s2 + $0xbc] sm:$0xf] %vm888, %v807
  %937 = vst.msk [vmem:[%s2 + $0xc0] sm:$0xf] %vm888, %v808
  %938 = vst.msk [vmem:[%s2 + $0xc4] sm:$0xf] %vm888, %v809
  %939 = vst.msk [vmem:[%s2 + $0xc8] sm:$0xf] %vm888, %v810
  %940 = vst.msk [vmem:[%s2 + $0xcc] sm:$0xf] %vm888, %v811
  %941 = vst.msk [vmem:[%s2 + $0xd0] sm:$0xf] %vm888, %v812
  %942 = vst.msk [vmem:[%s2 + $0xd4] sm:$0xf] %vm888, %v813
  %943 = vst.msk [vmem:[%s2 + $0xd8] sm:$0xf] %vm888, %v814
  %944 = vst.msk [vmem:[%s2 + $0xdc] sm:$0xf] %vm888, %v815
  %945 = vst.msk [vmem:[%s2 + $0xe0] sm:$0xf] %vm888, %v816
  %946 = vst.msk [vmem:[%s2 + $0xe4] sm:$0xf] %vm888, %v817
  %947 = vst.msk [vmem:[%s2 + $0xe8] sm:$0xf] %vm888, %v818
  %948 = vst.msk [vmem:[%s2 + $0xec] sm:$0xf] %vm888, %v819
  %949 = vst.msk [vmem:[%s2 + $0xf0] sm:$0xf] %vm888, %v820
  %950 = vst.msk [vmem:[%s2 + $0xf4] sm:$0xf] %vm888, %v821
  %951 = vst.msk [vmem:[%s2 + $0xf8] sm:$0xf] %vm888, %v822
  %952 = vst.msk [vmem:[%s2 + $0xfc] sm:$0xf] %vm888, %v823
  %vm953 = vcmask 64512
  %v954 = vsel %vm953, %v378, 0.0
  %v955 = vsel %vm953, %v381, 0.0
  %v956 = vadd.f32 %v954, %v955
  %v957 = vsel %vm953, %v386, 0.0
  %v958 = vadd.f32 %v956, %v957
  %v959 = vsel %vm953, %v389, 0.0
  %v960 = vadd.f32 %v958, %v959
  %v961 = vsel %vm953, %v394, 0.0
  %v962 = vadd.f32 %v960, %v961
  %v963 = vsel %vm953, %v397, 0.0
  %v964 = vadd.f32 %v962, %v963
  %v965 = vsel %vm953, %v402, 0.0
  %v966 = vadd.f32 %v964, %v965
  %v967 = vsel %vm953, %v405, 0.0
  %v968 = vadd.f32 %v966, %v967
  %v969 = vsel %vm953, %v410, 0.0
  %v970 = vadd.f32 %v968, %v969
  %v971 = vsel %vm953, %v413, 0.0
  %v972 = vadd.f32 %v970, %v971
  %v973 = vsel %vm953, %v418, 0.0
  %v974 = vadd.f32 %v972, %v973
  %v975 = vsel %vm953, %v421, 0.0
  %v976 = vadd.f32 %v974, %v975
  %v977 = vsel %vm953, %v426, 0.0
  %v978 = vadd.f32 %v976, %v977
  %v979 = vsel %vm953, %v429, 0.0
  %v980 = vadd.f32 %v978, %v979
  %v981 = vsel %vm953, %v434, 0.0
  %v982 = vadd.f32 %v980, %v981
  %v983 = vsel %vm953, %v437, 0.0
  %v984 = vadd.f32 %v982, %v983
  %v985 = vsel %vm953, %v442, 0.0
  %v986 = vadd.f32 %v984, %v985
  %v987 = vsel %vm953, %v445, 0.0
  %v988 = vadd.f32 %v986, %v987
  %v989 = vsel %vm953, %v450, 0.0
  %v990 = vadd.f32 %v988, %v989
  %v991 = vsel %vm953, %v453, 0.0
  %v992 = vadd.f32 %v990, %v991
  %v993 = vsel %vm953, %v458, 0.0
  %v994 = vadd.f32 %v992, %v993
  %v995 = vsel %vm953, %v461, 0.0
  %v996 = vadd.f32 %v994, %v995
  %v997 = vsel %vm953, %v466, 0.0
  %v998 = vadd.f32 %v996, %v997
  %v999 = vsel %vm953, %v469, 0.0
  %v1000 = vadd.f32 %v998, %v999
  %v1001 = vsel %vm953, %v474, 0.0
  %v1002 = vadd.f32 %v1000, %v1001
  %v1003 = vsel %vm953, %v477, 0.0
  %v1004 = vadd.f32 %v1002, %v1003
  %v1005 = vsel %vm953, %v482, 0.0
  %v1006 = vadd.f32 %v1004, %v1005
  %v1007 = vsel %vm953, %v485, 0.0
  %v1008 = vadd.f32 %v1006, %v1007
  %v1009 = vsel %vm953, %v490, 0.0
  %v1010 = vadd.f32 %v1008, %v1009
  %v1011 = vsel %vm953, %v493, 0.0
  %v1012 = vadd.f32 %v1010, %v1011
  %v1013 = vsel %vm953, %v498, 0.0
  %v1014 = vadd.f32 %v1012, %v1013
  %v1015 = vsel %vm953, %v501, 0.0
  %v1016 = vadd.f32 %v1014, %v1015
  %v1017 = vsel %vm953, %v506, 0.0
  %v1018 = vadd.f32 %v1016, %v1017
  %v1019 = vsel %vm953, %v509, 0.0
  %v1020 = vadd.f32 %v1018, %v1019
  %v1021 = vsel %vm953, %v514, 0.0
  %v1022 = vadd.f32 %v1020, %v1021
  %v1023 = vsel %vm953, %v517, 0.0
  %v1024 = vadd.f32 %v1022, %v1023
  %v1025 = vsel %vm953, %v522, 0.0
  %v1026 = vadd.f32 %v1024, %v1025
  %v1027 = vsel %vm953, %v525, 0.0
  %v1028 = vadd.f32 %v1026, %v1027
  %v1029 = vsel %vm953, %v530, 0.0
  %v1030 = vadd.f32 %v1028, %v1029
  %v1031 = vsel %vm953, %v533, 0.0
  %v1032 = vadd.f32 %v1030, %v1031
  %v1033 = vsel %vm953, %v538, 0.0
  %v1034 = vadd.f32 %v1032, %v1033
  %v1035 = vsel %vm953, %v541, 0.0
  %v1036 = vadd.f32 %v1034, %v1035
  %v1037 = vsel %vm953, %v546, 0.0
  %v1038 = vadd.f32 %v1036, %v1037
  %v1039 = vsel %vm953, %v549, 0.0
  %v1040 = vadd.f32 %v1038, %v1039
  %v1041 = vsel %vm953, %v554, 0.0
  %v1042 = vadd.f32 %v1040, %v1041
  %v1043 = vsel %vm953, %v557, 0.0
  %v1044 = vadd.f32 %v1042, %v1043
  %v1045 = vsel %vm953, %v562, 0.0
  %v1046 = vadd.f32 %v1044, %v1045
  %v1047 = vsel %vm953, %v565, 0.0
  %v1048 = vadd.f32 %v1046, %v1047
  %v1049 = vsel %vm953, %v570, 0.0
  %v1050 = vadd.f32 %v1048, %v1049
  %v1051 = vsel %vm953, %v573, 0.0
  %v1052 = vadd.f32 %v1050, %v1051
  %v1053 = vsel %vm953, %v578, 0.0
  %v1054 = vadd.f32 %v1052, %v1053
  %v1055 = vsel %vm953, %v581, 0.0
  %v1056 = vadd.f32 %v1054, %v1055
  %v1057 = vsel %vm953, %v586, 0.0
  %v1058 = vadd.f32 %v1056, %v1057
  %v1059 = vsel %vm953, %v589, 0.0
  %v1060 = vadd.f32 %v1058, %v1059
  %v1061 = vsel %vm953, %v594, 0.0
  %v1062 = vadd.f32 %v1060, %v1061
  %v1063 = vsel %vm953, %v597, 0.0
  %v1064 = vadd.f32 %v1062, %v1063
  %v1065 = vsel %vm953, %v602, 0.0
  %v1066 = vadd.f32 %v1064, %v1065
  %v1067 = vsel %vm953, %v605, 0.0
  %v1068 = vadd.f32 %v1066, %v1067
  %v1069 = vsel %vm953, %v610, 0.0
  %v1070 = vadd.f32 %v1068, %v1069
  %v1071 = vsel %vm953, %v613, 0.0
  %v1072 = vadd.f32 %v1070, %v1071
  %v1073 = vsel %vm953, %v618, 0.0
  %v1074 = vadd.f32 %v1072, %v1073
  %v1075 = vsel %vm953, %v621, 0.0
  %v1076 = vadd.f32 %v1074, %v1075
  %v1077 = vsel %vm953, %v626, 0.0
  %v1078 = vadd.f32 %v1076, %v1077
  %v1079 = vsel %vm953, %v629, 0.0
  %v1080 = vadd.f32 %v1078, %v1079
  %v1081 = vrot.slane %v1080, 4
  %v1082 = vadd.f32 %v1080, %v1081
  %v1083 = vrot.slane %v1082, 2
  %v1084 = vadd.f32 %v1082, %v1083
  %v1085 = vrot.slane %v1084, 1
  %v1086 = vadd.f32 %v1084, %v1085
  %v1087 = vmul.f32 %v378, %v378
  %v1088 = vmul.f32 %v381, %v381
  %v1089 = vmul.f32 %v386, %v386
  %v1090 = vmul.f32 %v389, %v389
  %v1091 = vmul.f32 %v394, %v394
  %v1092 = vmul.f32 %v397, %v397
  %v1093 = vmul.f32 %v402, %v402
  %v1094 = vmul.f32 %v405, %v405
  %v1095 = vmul.f32 %v410, %v410
  %v1096 = vmul.f32 %v413, %v413
  %v1097 = vmul.f32 %v418, %v418
  %v1098 = vmul.f32 %v421, %v421
  %v1099 = vmul.f32 %v426, %v426
  %v1100 = vmul.f32 %v429, %v429
  %v1101 = vmul.f32 %v434, %v434
  %v1102 = vmul.f32 %v437, %v437
  %v1103 = vmul.f32 %v442, %v442
  %v1104 = vmul.f32 %v445, %v445
  %v1105 = vmul.f32 %v450, %v450
  %v1106 = vmul.f32 %v453, %v453
  %v1107 = vmul.f32 %v458, %v458
  %v1108 = vmul.f32 %v461, %v461
  %v1109 = vmul.f32 %v466, %v466
  %v1110 = vmul.f32 %v469, %v469
  %v1111 = vmul.f32 %v474, %v474
  %v1112 = vmul.f32 %v477, %v477
  %v1113 = vmul.f32 %v482, %v482
  %v1114 = vmul.f32 %v485, %v485
  %v1115 = vmul.f32 %v490, %v490
  %v1116 = vmul.f32 %v493, %v493
  %v1117 = vmul.f32 %v498, %v498
  %v1118 = vmul.f32 %v501, %v501
  %v1119 = vmul.f32 %v506, %v506
  %v1120 = vmul.f32 %v509, %v509
  %v1121 = vmul.f32 %v514, %v514
  %v1122 = vmul.f32 %v517, %v517
  %v1123 = vmul.f32 %v522, %v522
  %v1124 = vmul.f32 %v525, %v525
  %v1125 = vmul.f32 %v530, %v530
  %v1126 = vmul.f32 %v533, %v533
  %v1127 = vmul.f32 %v538, %v538
  %v1128 = vmul.f32 %v541, %v541
  %v1129 = vmul.f32 %v546, %v546
  %v1130 = vmul.f32 %v549, %v549
  %v1131 = vmul.f32 %v554, %v554
  %v1132 = vmul.f32 %v557, %v557
  %v1133 = vmul.f32 %v562, %v562
  %v1134 = vmul.f32 %v565, %v565
  %v1135 = vmul.f32 %v570, %v570
  %v1136 = vmul.f32 %v573, %v573
  %v1137 = vmul.f32 %v578, %v578
  %v1138 = vmul.f32 %v581, %v581
  %v1139 = vmul.f32 %v586, %v586
  %v1140 = vmul.f32 %v589, %v589
  %v1141 = vmul.f32 %v594, %v594
  %v1142 = vmul.f32 %v597, %v597
  %v1143 = vmul.f32 %v602, %v602
  %v1144 = vmul.f32 %v605, %v605
  %v1145 = vmul.f32 %v610, %v610
  %v1146 = vmul.f32 %v613, %v613
  %v1147 = vmul.f32 %v618, %v618
  %v1148 = vmul.f32 %v621, %v621
  %v1149 = vmul.f32 %v626, %v626
  %v1150 = vmul.f32 %v629, %v629
  %v1151 = vsel %vm953, %v1087, 0.0
  %v1152 = vsel %vm953, %v1088, 0.0
  %v1153 = vadd.f32 %v1151, %v1152
  %v1154 = vsel %vm953, %v1089, 0.0
  %v1155 = vadd.f32 %v1153, %v1154
  %v1156 = vsel %vm953, %v1090, 0.0
  %v1157 = vadd.f32 %v1155, %v1156
  %v1158 = vsel %vm953, %v1091, 0.0
  %v1159 = vadd.f32 %v1157, %v1158
  %v1160 = vsel %vm953, %v1092, 0.0
  %v1161 = vadd.f32 %v1159, %v1160
  %v1162 = vsel %vm953, %v1093, 0.0
  %v1163 = vadd.f32 %v1161, %v1162
  %v1164 = vsel %vm953, %v1094, 0.0
  %v1165 = vadd.f32 %v1163, %v1164
  %v1166 = vsel %vm953, %v1095, 0.0
  %v1167 = vadd.f32 %v1165, %v1166
  %v1168 = vsel %vm953, %v1096, 0.0
  %v1169 = vadd.f32 %v1167, %v1168
  %v1170 = vsel %vm953, %v1097, 0.0
  %v1171 = vadd.f32 %v1169, %v1170
  %v1172 = vsel %vm953, %v1098, 0.0
  %v1173 = vadd.f32 %v1171, %v1172
  %v1174 = vsel %vm953, %v1099, 0.0
  %v1175 = vadd.f32 %v1173, %v1174
  %v1176 = vsel %vm953, %v1100, 0.0
  %v1177 = vadd.f32 %v1175, %v1176
  %v1178 = vsel %vm953, %v1101, 0.0
  %v1179 = vadd.f32 %v1177, %v1178
  %v1180 = vsel %vm953, %v1102, 0.0
  %v1181 = vadd.f32 %v1179, %v1180
  %v1182 = vsel %vm953, %v1103, 0.0
  %v1183 = vadd.f32 %v1181, %v1182
  %v1184 = vsel %vm953, %v1104, 0.0
  %v1185 = vadd.f32 %v1183, %v1184
  %v1186 = vsel %vm953, %v1105, 0.0
  %v1187 = vadd.f32 %v1185, %v1186
  %v1188 = vsel %vm953, %v1106, 0.0
  %v1189 = vadd.f32 %v1187, %v1188
  %v1190 = vsel %vm953, %v1107, 0.0
  %v1191 = vadd.f32 %v1189, %v1190
  %v1192 = vsel %vm953, %v1108, 0.0
  %v1193 = vadd.f32 %v1191, %v1192
  %v1194 = vsel %vm953, %v1109, 0.0
  %v1195 = vadd.f32 %v1193, %v1194
  %v1196 = vsel %vm953, %v1110, 0.0
  %v1197 = vadd.f32 %v1195, %v1196
  %v1198 = vsel %vm953, %v1111, 0.0
  %v1199 = vadd.f32 %v1197, %v1198
  %v1200 = vsel %vm953, %v1112, 0.0
  %v1201 = vadd.f32 %v1199, %v1200
  %v1202 = vsel %vm953, %v1113, 0.0
  %v1203 = vadd.f32 %v1201, %v1202
  %v1204 = vsel %vm953, %v1114, 0.0
  %v1205 = vadd.f32 %v1203, %v1204
  %v1206 = vsel %vm953, %v1115, 0.0
  %v1207 = vadd.f32 %v1205, %v1206
  %v1208 = vsel %vm953, %v1116, 0.0
  %v1209 = vadd.f32 %v1207, %v1208
  %v1210 = vsel %vm953, %v1117, 0.0
  %v1211 = vadd.f32 %v1209, %v1210
  %v1212 = vsel %vm953, %v1118, 0.0
  %v1213 = vadd.f32 %v1211, %v1212
  %v1214 = vsel %vm953, %v1119, 0.0
  %v1215 = vadd.f32 %v1213, %v1214
  %v1216 = vsel %vm953, %v1120, 0.0
  %v1217 = vadd.f32 %v1215, %v1216
  %v1218 = vsel %vm953, %v1121, 0.0
  %v1219 = vadd.f32 %v1217, %v1218
  %v1220 = vsel %vm953, %v1122, 0.0
  %v1221 = vadd.f32 %v1219, %v1220
  %v1222 = vsel %vm953, %v1123, 0.0
  %v1223 = vadd.f32 %v1221, %v1222
  %v1224 = vsel %vm953, %v1124, 0.0
  %v1225 = vadd.f32 %v1223, %v1224
  %v1226 = vsel %vm953, %v1125, 0.0
  %v1227 = vadd.f32 %v1225, %v1226
  %v1228 = vsel %vm953, %v1126, 0.0
  %v1229 = vadd.f32 %v1227, %v1228
  %v1230 = vsel %vm953, %v1127, 0.0
  %v1231 = vadd.f32 %v1229, %v1230
  %v1232 = vsel %vm953, %v1128, 0.0
  %v1233 = vadd.f32 %v1231, %v1232
  %v1234 = vsel %vm953, %v1129, 0.0
  %v1235 = vadd.f32 %v1233, %v1234
  %v1236 = vsel %vm953, %v1130, 0.0
  %v1237 = vadd.f32 %v1235, %v1236
  %v1238 = vsel %vm953, %v1131, 0.0
  %v1239 = vadd.f32 %v1237, %v1238
  %v1240 = vsel %vm953, %v1132, 0.0
  %v1241 = vadd.f32 %v1239, %v1240
  %v1242 = vsel %vm953, %v1133, 0.0
  %v1243 = vadd.f32 %v1241, %v1242
  %v1244 = vsel %vm953, %v1134, 0.0
  %v1245 = vadd.f32 %v1243, %v1244
  %v1246 = vsel %vm953, %v1135, 0.0
  %v1247 = vadd.f32 %v1245, %v1246
  %v1248 = vsel %vm953, %v1136, 0.0
  %v1249 = vadd.f32 %v1247, %v1248
  %v1250 = vsel %vm953, %v1137, 0.0
  %v1251 = vadd.f32 %v1249, %v1250
  %v1252 = vsel %vm953, %v1138, 0.0
  %v1253 = vadd.f32 %v1251, %v1252
  %v1254 = vsel %vm953, %v1139, 0.0
  %v1255 = vadd.f32 %v1253, %v1254
  %v1256 = vsel %vm953, %v1140, 0.0
  %v1257 = vadd.f32 %v1255, %v1256
  %v1258 = vsel %vm953, %v1141, 0.0
  %v1259 = vadd.f32 %v1257, %v1258
  %v1260 = vsel %vm953, %v1142, 0.0
  %v1261 = vadd.f32 %v1259, %v1260
  %v1262 = vsel %vm953, %v1143, 0.0
  %v1263 = vadd.f32 %v1261, %v1262
  %v1264 = vsel %vm953, %v1144, 0.0
  %v1265 = vadd.f32 %v1263, %v1264
  %v1266 = vsel %vm953, %v1145, 0.0
  %v1267 = vadd.f32 %v1265, %v1266
  %v1268 = vsel %vm953, %v1146, 0.0
  %v1269 = vadd.f32 %v1267, %v1268
  %v1270 = vsel %vm953, %v1147, 0.0
  %v1271 = vadd.f32 %v1269, %v1270
  %v1272 = vsel %vm953, %v1148, 0.0
  %v1273 = vadd.f32 %v1271, %v1272
  %v1274 = vsel %vm953, %v1149, 0.0
  %v1275 = vadd.f32 %v1273, %v1274
  %v1276 = vsel %vm953, %v1150, 0.0
  %v1277 = vadd.f32 %v1275, %v1276
  %v1278 = vrot.slane %v1277, 4
  %v1279 = vadd.f32 %v1277, %v1278
  %v1280 = vrot.slane %v1279, 2
  %v1281 = vadd.f32 %v1279, %v1280
  %v1282 = vrot.slane %v1281, 1
  %v1283 = vadd.f32 %v1281, %v1282
  %vm1284 = vcmask 1040384
  %v1285 = vsel %vm1284, %v1086, %v1283
  %vm1286 = vcmask 58368
  %1287 = vst.msk [vmem:[%s3] sm:$0x3] %vm1286, %v1285
  // Predicated region
  $region10: #{bottleneck_forward.4} parent=0 // pred_check
    _
  $region11: #{bottleneck_forward.4} parent=0 // pred_check_branch
    %1289 = sbr.rel (0) target = $region13
  $region12: #{bottleneck_forward.4} parent=0 // pred_region
    _
  $region13: #{bottleneck_forward.4} parent=0 // pred_fallthru
    _
  // Predicated region
  $region14: #{bottleneck_forward.4} parent=0 // pred_check
    _
  $region15: #{bottleneck_forward.4} parent=0 // pred_check_branch
    %1291 = sbr.rel (0) target = $region17
  $region16: #{bottleneck_forward.4} parent=0 // pred_region
    _
  $region17: #{bottleneck_forward.4} parent=0 // pred_fallthru
    _
  // Predicated region
  $region18: #{bottleneck_forward.4} parent=0 // pred_check
    _
  $region19: #{bottleneck_forward.4} parent=0 // pred_check_branch
    %1293 = sbr.rel (0) target = $region21
  $region20: #{bottleneck_forward.4} parent=0 // pred_region
    _
  $region21: #{bottleneck_forward.4} parent=0 // pred_fallthru
    _
  // Predicated region
  $region22: #{bottleneck_forward.4} parent=0 // pred_check
    _
  $region23: #{bottleneck_forward.4} parent=0 // pred_check_branch
    %1295 = sbr.rel (0) target = $region25
  $region24: #{bottleneck_forward.4} parent=0 // pred_region
    _
  $region25: #{bottleneck_forward.4} parent=0 // pred_fallthru
    _

// kernel: bottleneck_forward.5
$region0: #{bottleneck_forward.5}
  #allocation0 [shape = 'u32[]', space=smem, size = 0x4, offset = 0x4, fixed_abs, tag = 'smem constant byte address 0x4 - core index']
  #allocation1 [shape = 'u32[144,128]{1,0:T(1,128)}', space=vmem, size = 0x12000, scoped, tag = 'internal scratch']
  #allocation2 [shape = 'f32[72,8]{1,0:T(8,128)}', space=vmem, size = 0x9000, scoped, tag = 'scratch operand']
  %s0 = inlined_call_operand.vmem [shape: bf16[2,4,90,8], index: 0, kind: input, shape index: {}]
  %s1 = inlined_call_operand.vmem [shape: bf16[9,8,8], index: 1, kind: input, shape index: {}]
  %s2 = inlined_call_operand.vmem [shape: bf16[2,8,8,8], index: 2, kind: output, shape index: {0}]
  %s3 = inlined_call_operand.vmem [shape: f32[2,2,8], index: 3, kind: output, shape index: {1}]
  %4 = xla_tuple %s2, %s3
  %s5 = sld [smem:[#allocation0]]
  $region49: #{bottleneck_forward.5} parent=0
    _
  %s7 = ssub.s32 1, %s5
  %s8 = scalar_select 0, %s7, %s5
  loop: start=0, step=1, limit=4
  $region2: #{bottleneck_forward.5} parent=0 // loop_pre_header
    _
  $region3: #{bottleneck_forward.5} parent=0 // loop_header
    %s10 = sphi 0, %s14
    %p11 = scmp.ge.s32.totalorder %s10, 4
    %s20 = sphi 0, %s22
    %s23 = sphi 0, %s20
    %s24 = sphi 0, %s23
    %s40 = sphi 0, %s24
    %s44 = sphi 0, %s44
    %s46 = sphi 0, %s44
    %s47 = sphi 0, %s46
    %s61 = sphi 0, %s47
    %s67 = sphi 0, %s69
    %s70 = sphi 0, %s67
    %s71 = sphi 0, %s70
    %s87 = sphi 0, %s71
    %s93 = sphi 0, %s95
    %s96 = sphi 0, %s93
    %s97 = sphi 0, %s96
    %s113 = sphi 0, %s97
  $region4: #{bottleneck_forward.5} parent=0 // loop_header_branch
    %13 = sbr.rel (%p11) target = $region8
  $region5: #{bottleneck_forward.5} parent=0 // loop_body
    %s15 = ssub.s32 %s10, 1
    %s16 = ssub.s32 %s10, 2
    %s17 = sadd.s32 %s10, 1
    %s18 = ssub.s32 %s10, %s17
    %p19 = scmp.eq.s32.totalorder %s18, 0
    %s21 = sadd.s32 %s20, 1
    %s22 = scalar_select %p19, %s20, %s21
    %p25 = pneg %p19
    %p26 = scmp.eq.s32.totalorder %s10, 1
    %p27 = por %p25, %p26
    %p28 = scmp.ne.s32.totalorder %s20, %s23
    %p29 = scmp.eq.s32.totalorder %s10, 0
    %p30 = por %p28, %p29
    %p31 = scmp.ne.s32.totalorder %s20, %s23
    %p32 = scmp.eq.s32.totalorder %s15, 1
    %p33 = por %p31, %p32
    %p34 = scmp.ne.s32.totalorder %s23, %s24
    %p35 = scmp.eq.s32.totalorder %s15, 0
    %p36 = por %p34, %p35
    %p37 = scmp.ne.s32.totalorder %s23, %s24
    %p38 = scmp.eq.s32.totalorder %s16, 1
    %p39 = por %p37, %p38
    %p41 = scmp.ne.s32.totalorder %s24, %s40
    %p42 = scmp.eq.s32.totalorder %s16, 0
    %p43 = por %p41, %p42
    %s45 = sadd.s32 %s44, 1
    %p48 = scmp.eq.s32.totalorder %s10, 1
    %p49 = scmp.ne.s32.totalorder %s44, %s46
    %p50 = scmp.eq.s32.totalorder %s10, 0
    %p51 = por %p49, %p50
    %p52 = scmp.ne.s32.totalorder %s44, %s46
    %p53 = scmp.eq.s32.totalorder %s15, 1
    %p54 = por %p52, %p53
    %p55 = scmp.ne.s32.totalorder %s46, %s47
    %p56 = scmp.eq.s32.totalorder %s15, 0
    %p57 = por %p55, %p56
    %p58 = scmp.ne.s32.totalorder %s46, %s47
    %p59 = scmp.eq.s32.totalorder %s16, 1
    %p60 = por %p58, %p59
    %p62 = scmp.ne.s32.totalorder %s47, %s61
    %p63 = scmp.eq.s32.totalorder %s16, 0
    %p64 = por %p62, %p63
    %s65 = ssub.s32 %s10, %s17
    %p66 = scmp.eq.s32.totalorder %s65, 0
    %s68 = sadd.s32 %s67, 1
    %s69 = scalar_select %p66, %s67, %s68
    %p72 = pneg %p66
    %p73 = scmp.eq.s32.totalorder %s10, 1
    %p74 = por %p72, %p73
    %p75 = scmp.ne.s32.totalorder %s67, %s70
    %p76 = scmp.eq.s32.totalorder %s10, 0
    %p77 = por %p75, %p76
    %p78 = scmp.ne.s32.totalorder %s67, %s70
    %p79 = scmp.eq.s32.totalorder %s15, 1
    %p80 = por %p78, %p79
    %p81 = scmp.ne.s32.totalorder %s70, %s71
    %p82 = scmp.eq.s32.totalorder %s15, 0
    %p83 = por %p81, %p82
    %p84 = scmp.ne.s32.totalorder %s70, %s71
    %p85 = scmp.eq.s32.totalorder %s16, 1
    %p86 = por %p84, %p85
    %p88 = scmp.ne.s32.totalorder %s71, %s87
    %p89 = scmp.eq.s32.totalorder %s16, 0
    %p90 = por %p88, %p89
    %s91 = ssub.s32 %s10, %s17
    %p92 = scmp.eq.s32.totalorder %s91, 0
    %s94 = sadd.s32 %s93, 1
    %s95 = scalar_select %p92, %s93, %s94
    %p98 = pneg %p92
    %p99 = scmp.eq.s32.totalorder %s10, 1
    %p100 = por %p98, %p99
    %p101 = scmp.ne.s32.totalorder %s93, %s96
    %p102 = scmp.eq.s32.totalorder %s10, 0
    %p103 = por %p101, %p102
    %p104 = scmp.ne.s32.totalorder %s93, %s96
    %p105 = scmp.eq.s32.totalorder %s15, 1
    %p106 = por %p104, %p105
    %p107 = scmp.ne.s32.totalorder %s96, %s97
    %p108 = scmp.eq.s32.totalorder %s15, 0
    %p109 = por %p107, %p108
    %p110 = scmp.ne.s32.totalorder %s96, %s97
    %p111 = scmp.eq.s32.totalorder %s16, 1
    %p112 = por %p110, %p111
    %p114 = scmp.ne.s32.totalorder %s97, %s113
    %p115 = scmp.eq.s32.totalorder %s16, 0
    %p116 = por %p114, %p115
    %p117 = scmp.le.s32.totalorder 1, %s10
    %p118 = scmp.lt.s32.totalorder %s10, 3
    %p119 = pnand %p117, %p118
    %p120 = pneg %p119
    // Predicated region
    $region9: #{bottleneck_forward.5} parent=5 // pred_check
      _
    $region10: #{bottleneck_forward.5} parent=5 // pred_check_branch
      %122 = sbr.rel (%p119) target = $region12
    $region11: #{bottleneck_forward.5} parent=5 // pred_region
      %s123 = ssub.s32 %s10, 1
      // Predicated region
      $region13: #{bottleneck_forward.5} parent=11 // pred_check
        %p124 = pneg %p57
      $region14: #{bottleneck_forward.5} parent=11 // pred_check_branch
        %126 = sbr.rel (%p124) target = $region16
      $region15: #{bottleneck_forward.5} parent=11 // pred_region
        _
      $region16: #{bottleneck_forward.5} parent=11 // pred_fallthru
        _
    $region12: #{bottleneck_forward.5} parent=5 // pred_fallthru
      _
    %p127 = scmp.lt.s32.totalorder %s10, 2
    // Predicated region
    $region17: #{bottleneck_forward.5} parent=5 // pred_check
      %p128 = pneg %p127
    $region18: #{bottleneck_forward.5} parent=5 // pred_check_branch
      %130 = sbr.rel (%p128) target = $region20
    $region19: #{bottleneck_forward.5} parent=5 // pred_region
      // Predicated region
      $region21: #{bottleneck_forward.5} parent=19 // pred_check
        %p131 = pneg %p30
      $region22: #{bottleneck_forward.5} parent=19 // pred_check_branch
        %133 = sbr.rel (%p131) target = $region24
      $region23: #{bottleneck_forward.5} parent=19 // pred_region
        %p134 = scmp.lt.s32.totalorder %s10, 1
        %s135 = scalar_select %p134, %s10, 1
        %s136 = smul.addr %s135, 48
        %s137 = smul.addr %s136, 4
        %s138 = scalar_lea.vmem %s0, %s137
      $region24: #{bottleneck_forward.5} parent=19 // pred_fallthru
        _
    $region20: #{bottleneck_forward.5} parent=5 // pred_fallthru
      _
    %p139 = scmp.le.s32.totalorder 1, %s10
    %p140 = scmp.lt.s32.totalorder %s10, 3
    %p141 = pnand %p139, %p140
    %p142 = pneg %p141
    // Predicated region
    $region25: #{bottleneck_forward.5} parent=5 // pred_check
      _
    $region26: #{bottleneck_forward.5} parent=5 // pred_check_branch
      %144 = sbr.rel (%p141) target = $region28
    $region27: #{bottleneck_forward.5} parent=5 // pred_region
      %s145 = ssub.s32 %s10, 1
      %p146 = scmp.lt.s32.totalorder %s15, 1
      %s147 = scalar_select %p146, %s15, 1
      %s148 = smul.addr %s147, 48
      %s149 = smul.addr %s148, 4
      %s150 = scalar_lea.vmem %s0, %s149
      %p151 = pneg %p36
      %p152 = pneg %p33
      %p153 = pneg %p57
      %p154 = pneg %p54
      %p155 = pneg %p83
      %p156 = pneg %p80
      %p157 = scmp.lt.s32.totalorder %s15, 1
      %s158 = scalar_select %p157, %s15, 1
      %s159 = smul.addr %s158, 8
      %s160 = smul.addr %s159, 4
      %s161 = scalar_lea.vmem %s2, %s160
      %p162 = pneg %p109
      %p163 = pneg %p106
      %p164 = scmp.lt.s32.totalorder %s15, 1
      %s165 = scalar_select %p164, %s15, 1
      %s166 = smul.addr %s165, 2
      %s167 = scalar_lea.vmem %s3, %s166
      %p168 = scmp.lt.s32.totalorder %s15, 1
      %s169 = scalar_select %p168, %s15, 1
      %s170 = smul.addr %s169, 48
      %s171 = smul.addr %s170, 4
      %s172 = scalar_lea.vmem %s0, %s171
      %p173 = scmp.lt.s32.totalorder %s15, 1
      %s174 = scalar_select %p173, %s15, 1
      %s175 = smul.addr %s174, 8
      %s176 = smul.addr %s175, 4
      %s177 = scalar_lea.vmem %s2, %s176
      %p178 = scmp.lt.s32.totalorder %s15, 1
      %s179 = scalar_select %p178, %s15, 1
      %s180 = smul.addr %s179, 2
      %s181 = scalar_lea.vmem %s3, %s180
      %vm183 = vcmask 64512
      %184 = vst.msk [vmem:[#allocation2] sm:$0xff] %vm183, 0.0
      %185 = vst.msk [vmem:[#allocation2 + $0x8] sm:$0xff] %vm183, 0.0
      %186 = vst.msk [vmem:[#allocation2 + $0x10] sm:$0xff] %vm183, 0.0
      %187 = vst.msk [vmem:[#allocation2 + $0x18] sm:$0xff] %vm183, 0.0
      %188 = vst.msk [vmem:[#allocation2 + $0x20] sm:$0xff] %vm183, 0.0
      %189 = vst.msk [vmem:[#allocation2 + $0x28] sm:$0xff] %vm183, 0.0
      %190 = vst.msk [vmem:[#allocation2 + $0x30] sm:$0xff] %vm183, 0.0
      %191 = vst.msk [vmem:[#allocation2 + $0x38] sm:$0xff] %vm183, 0.0
      %192 = vst.msk [vmem:[#allocation2 + $0x40] sm:$0xff] %vm183, 0.0
      %v193 = vld [vmem:[%s172] sm:$0xf]
      %v194 = vld [vmem:[%s172 + $0x4] sm:$0xf]
      %v195 = vld [vmem:[%s172 + $0x8] sm:$0xf]
      %v196 = vld [vmem:[%s172 + $0xc] sm:$0xf]
      %v197 = vld [vmem:[%s172 + $0x10] sm:$0xf]
      %v198 = vld [vmem:[%s172 + $0x14] sm:$0xf]
      %v199 = vld [vmem:[%s172 + $0x18] sm:$0xf]
      %v200 = vld [vmem:[%s172 + $0x1c] sm:$0xf]
      %v201 = vld [vmem:[%s172 + $0x20] sm:$0xf]
      %v202 = vld [vmem:[%s172 + $0x24] sm:$0xf]
      %v203 = vld [vmem:[%s172 + $0x28] sm:$0xf]
      %v204 = vld [vmem:[#allocation2] sm:$0xff]
      %v205 = vld [vmem:[#allocation2 + $0x8] sm:$0xff]
      %v206 = vld [vmem:[#allocation2 + $0x10] sm:$0xff]
      %v207 = vld [vmem:[#allocation2 + $0x18] sm:$0xff]
      %v208 = vld [vmem:[#allocation2 + $0x20] sm:$0xff]
      %v209 = vld [vmem:[#allocation2 + $0x28] sm:$0xff]
      %v210 = vld [vmem:[#allocation2 + $0x30] sm:$0xff]
      %v211 = vld [vmem:[#allocation2 + $0x38] sm:$0xff]
      %v212 = vld [vmem:[#allocation2 + $0x40] sm:$0xff]
      %v213 = vld [vmem:[%s1] sm:$0xf]
      %v223 = vunpack.c.l.b16 %v193
      %v224 = vunpack.c.l.b16 %v194
      %v225 = vunpack.c.l.b16 %v195
      %v226 = vunpack.c.l.b16 %v196
      %v227 = vunpack.c.l.b16 %v197
      %v228 = vunpack.c.l.b16 %v198
      %v229 = vunpack.c.l.b16 %v199
      %v230 = vunpack.c.l.b16 %v200
      %v231 = vunpack.c.l.b16 %v201
      %v232 = vpack.c.b16 %v224, %v223
      %v233 = vpack.c.b16 %v226, %v225
      %v234 = vpack.c.b16 %v228, %v227
      %v235 = vpack.c.b16 %v230, %v229
      %v236 = vpack.c.b16 %v231, %v231
      %v238 = vsel %vm183, %v232, 0
      %v241 = vsel %vm183, %v233, 0
      %v244 = vsel %vm183, %v234, 0
      %v247 = vsel %vm183, %v235, 0
      %v250 = vsel %vm183, %v236, 0
      %vm252 = vcmask 1043456
      %v254 = vsel %vm252, %v213, 0
      %256 = vmatprep.subr.bf16.mxu0 0
      %257 = vmatpush1.bf16.msra.mxu0 0
      %258 = vmatprep.subr.bf16.mxu0 0
      %259 = vmatpush1.bf16.msra.mxu0 0
      %260 = vmatprep.subr.bf16.mxu0 0
      %261 = vmatpush1.bf16.msra.mxu0 0
      %262 = vmatprep.subr.bf16.mxu0 0
      %263 = vmatpush1.bf16.msra.mxu0 0
      %264 = vmatprep.subr.bf16.mxu0 0
      %265 = vmatpush1.bf16.msra.mxu0 0
      %266 = vmatprep.subr.bf16.mxu0 0
      %267 = vmatpush1.bf16.msra.mxu0 0
      %268 = vmatprep.subr.bf16.mxu0 0
      %269 = vmatpush1.bf16.msra.mxu0 0
      %270 = vmatprep.subr.bf16.mxu0 0
      %271 = vmatpush1.bf16.msra.mxu0 %v254
      %272 = vmatprep.subr.bf16.mxu0 0
      %273 = vmatpush2.bf16.msra.mxu0 0
      %274 = vmatprep.subr.bf16.mxu0 0
      %275 = vmatpush2.bf16.msra.mxu0 0
      %276 = vmatprep.subr.bf16.mxu0 0
      %277 = vmatpush2.bf16.msra.mxu0 0
      %278 = vmatprep.subr.bf16.mxu0 0
      %279 = vmatpush2.bf16.msra.mxu0 0
      %280 = vmatprep.subr.bf16.mxu0 0
      %281 = vmatpush2.bf16.msra.mxu0 0
      %282 = vmatprep.subr.bf16.mxu0 0
      %283 = vmatpush2.bf16.msra.mxu0 0
      %284 = vmatprep.subr.bf16.mxu0 0
      %285 = vmatpush2.bf16.msra.mxu0 0
      %286 = vmatprep.subr.bf16.mxu0 0
      %287 = vmatpush2.bf16.msra.mxu0 0
      %288 = vmatprep.mubr.bf16.mxu0 0
      %289 = vmatmul.mubr.bf16.gmra.mxu0 %v238
      %v290 = vpop.f32.mrf.mxu0
      %v291 = vadd.f32 0.0, %v290
      %v292 = vpop.f32.mrf.mxu0
      %v293 = vpop.f32.mrf.mxu0
      %v294 = vadd.f32 0.0, %v293
      %v295 = vpop.f32.mrf.mxu0
      %296 = vmatprep.mubr.bf16.mxu0 0
      %297 = vmatmul.mubr.bf16.gmra.mxu0 %v241
      %v298 = vpop.f32.mrf.mxu0
      %v299 = vadd.f32 0.0, %v298
      %v300 = vpop.f32.mrf.mxu0
      %v301 = vpop.f32.mrf.mxu0
      %v302 = vadd.f32 0.0, %v301
      %v303 = vpop.f32.mrf.mxu0
      %304 = vmatprep.mubr.bf16.mxu0 0
      %305 = vmatmul.mubr.bf16.gmra.mxu0 %v244
      %v306 = vpop.f32.mrf.mxu0
      %v307 = vadd.f32 0.0, %v306
      %v308 = vpop.f32.mrf.mxu0
      %v309 = vpop.f32.mrf.mxu0
      %v310 = vadd.f32 0.0, %v309
      %v311 = vpop.f32.mrf.mxu0
      %312 = vmatprep.mubr.bf16.mxu0 0
      %313 = vmatmul.mubr.bf16.gmra.mxu0 %v247
      %v314 = vpop.f32.mrf.mxu0
      %v315 = vadd.f32 0.0, %v314
      %v316 = vpop.f32.mrf.mxu0
      %v317 = vpop.f32.mrf.mxu0
      %v318 = vadd.f32 0.0, %v317
      %v319 = vpop.f32.mrf.mxu0
      %320 = vmatprep.mubr.bf16.mxu0 0
      %321 = vmatmul.mubr.bf16.gmra.mxu0 %v250
      %v322 = vpop.f32.mrf.mxu0
      %v323 = vadd.f32 0.0, %v322
      %v324 = vpop.f32.mrf.mxu0
      %v325 = vpop.f32.mrf.mxu0
      %v326 = vpop.f32.mrf.mxu0
      %327 = vdwg.mxu0
      %v328 = vadd.f32 %v204, %v291
      %v329 = vadd.f32 %v205, %v294
      %v330 = vadd.f32 %v206, %v299
      %v331 = vadd.f32 %v207, %v302
      %v332 = vadd.f32 %v208, %v307
      %v333 = vadd.f32 %v209, %v310
      %v334 = vadd.f32 %v210, %v315
      %v335 = vadd.f32 %v211, %v318
      %v336 = vadd.f32 %v212, %v323
      %337 = vst.msk [vmem:[#allocation2] sm:$0xff] %vm183, %v328
      %338 = vst.msk [vmem:[#allocation2 + $0x8] sm:$0xff] %vm183, %v329
      %339 = vst.msk [vmem:[#allocation2 + $0x10] sm:$0xff] %vm183, %v330
      %340 = vst.msk [vmem:[#allocation2 + $0x18] sm:$0xff] %vm183, %v331
      %341 = vst.msk [vmem:[#allocation2 + $0x20] sm:$0xff] %vm183, %v332
      %342 = vst.msk [vmem:[#allocation2 + $0x28] sm:$0xff] %vm183, %v333
      %343 = vst.msk [vmem:[#allocation2 + $0x30] sm:$0xff] %vm183, %v334
      %344 = vst.msk [vmem:[#allocation2 + $0x38] sm:$0xff] %vm183, %v335
      %345 = vst.msk [vmem:[#allocation2 + $0x40] sm:$0xff] %vm183, %v336
      %v346 = vld [vmem:[#allocation2] sm:$0xff]
      %v347 = vld [vmem:[#allocation2 + $0x8] sm:$0xff]
      %v348 = vld [vmem:[#allocation2 + $0x10] sm:$0xff]
      %v349 = vld [vmem:[#allocation2 + $0x18] sm:$0xff]
      %v350 = vld [vmem:[#allocation2 + $0x20] sm:$0xff]
      %v351 = vld [vmem:[#allocation2 + $0x28] sm:$0xff]
      %v352 = vld [vmem:[#allocation2 + $0x30] sm:$0xff]
      %v353 = vld [vmem:[#allocation2 + $0x38] sm:$0xff]
      %v354 = vld [vmem:[#allocation2 + $0x40] sm:$0xff]
      %s355 = scalar_lea.vmem %s1, 8
      %v356 = vld [vmem:[%s355] sm:$0xf]
      %v358 = vunpack.c.l.b16 %v202
      %v359 = vpack.c.b16 %v358, %v231
      %vm360 = vsmask.f32 7424
      %v361 = vshrl.u32 %v232, 16
      %v363 = vshll.u32 %v232, 16
      %v365 = vrot.slane %v363, 1
      %v366 = vor.u32 %v361, %v365
      %v367 = vshll.u32 %v233, 16
      %v369 = vrot.slane %v367, 1
      %v370 = vsel %vm360, %v366, %v369
      %v371 = vshrl.u32 %v233, 16
      %v373 = vor.u32 %v371, %v369
      %v374 = vshll.u32 %v234, 16
      %v376 = vrot.slane %v374, 1
      %v377 = vsel %vm360, %v373, %v376
      %v378 = vshrl.u32 %v234, 16
      %v380 = vor.u32 %v378, %v376
      %v381 = vshll.u32 %v235, 16
      %v383 = vrot.slane %v381, 1
      %v384 = vsel %vm360, %v380, %v383
      %v385 = vshrl.u32 %v235, 16
      %v387 = vor.u32 %v385, %v383
      %v389 = vshll.u32 %v359, 16
      %v391 = vrot.slane %v389, 1
      %v392 = vsel %vm360, %v387, %v391
      %v393 = vshrl.u32 %v359, 16
      %v395 = vor.u32 %v393, %v391
      %v397 = vsel %vm183, %v370, 0
      %v400 = vsel %vm183, %v377, 0
      %v403 = vsel %vm183, %v384, 0
      %v406 = vsel %vm183, %v392, 0
      %v409 = vsel %vm183, %v395, 0
      %v412 = vsel %vm252, %v356, 0
      %414 = vmatprep.subr.bf16.mxu0 0
      %415 = vmatpush1.bf16.msra.mxu0 0
      %416 = vmatprep.subr.bf16.mxu0 0
      %417 = vmatpush1.bf16.msra.mxu0 0
      %418 = vmatprep.subr.bf16.mxu0 0
      %419 = vmatpush1.bf16.msra.mxu0 0
      %420 = vmatprep.subr.bf16.mxu0 0
      %421 = vmatpush1.bf16.msra.mxu0 0
      %422 = vmatprep.subr.bf16.mxu0 0
      %423 = vmatpush1.bf16.msra.mxu0 0
      %424 = vmatprep.subr.bf16.mxu0 0
      %425 = vmatpush1.bf16.msra.mxu0 0
      %426 = vmatprep.subr.bf16.mxu0 0
      %427 = vmatpush1.bf16.msra.mxu0 0
      %428 = vmatprep.subr.bf16.mxu0 0
      %429 = vmatpush1.bf16.msra.mxu0 %v412
      %430 = vmatprep.subr.bf16.mxu0 0
      %431 = vmatpush2.bf16.msra.mxu0 0
      %432 = vmatprep.subr.bf16.mxu0 0
      %433 = vmatpush2.bf16.msra.mxu0 0
      %434 = vmatprep.subr.bf16.mxu0 0
      %435 = vmatpush2.bf16.msra.mxu0 0
      %436 = vmatprep.subr.bf16.mxu0 0
      %437 = vmatpush2.bf16.msra.mxu0 0
      %438 = vmatprep.subr.bf16.mxu0 0
      %439 = vmatpush2.bf16.msra.mxu0 0
      %440 = vmatprep.subr.bf16.mxu0 0
      %441 = vmatpush2.bf16.msra.mxu0 0
      %442 = vmatprep.subr.bf16.mxu0 0
      %443 = vmatpush2.bf16.msra.mxu0 0
      %444 = vmatprep.subr.bf16.mxu0 0
      %445 = vmatpush2.bf16.msra.mxu0 0
      %446 = vmatprep.mubr.bf16.mxu0 0
      %447 = vmatmul.mubr.bf16.gmra.mxu0 %v397
      %v448 = vpop.f32.mrf.mxu0
      %v449 = vadd.f32 0.0, %v448
      %v450 = vpop.f32.mrf.mxu0
      %v451 = vpop.f32.mrf.mxu0
      %v452 = vadd.f32 0.0, %v451
      %v453 = vpop.f32.mrf.mxu0
      %454 = vmatprep.mubr.bf16.mxu0 0
      %455 = vmatmul.mubr.bf16.gmra.mxu0 %v400
      %v456 = vpop.f32.mrf.mxu0
      %v457 = vadd.f32 0.0, %v456
      %v458 = vpop.f32.mrf.mxu0
      %v459 = vpop.f32.mrf.mxu0
      %v460 = vadd.f32 0.0, %v459
      %v461 = vpop.f32.mrf.mxu0
      %462 = vmatprep.mubr.bf16.mxu0 0
      %463 = vmatmul.mubr.bf16.gmra.mxu0 %v403
      %v464 = vpop.f32.mrf.mxu0
      %v465 = vadd.f32 0.0, %v464
      %v466 = vpop.f32.mrf.mxu0
      %v467 = vpop.f32.mrf.mxu0
      %v468 = vadd.f32 0.0, %v467
      %v469 = vpop.f32.mrf.mxu0
      %470 = vmatprep.mubr.bf16.mxu0 0
      %471 = vmatmul.mubr.bf16.gmra.mxu0 %v406
      %v472 = vpop.f32.mrf.mxu0
      %v473 = vadd.f32 0.0, %v472
      %v474 = vpop.f32.mrf.mxu0
      %v475 = vpop.f32.mrf.mxu0
      %v476 = vadd.f32 0.0, %v475
      %v477 = vpop.f32.mrf.mxu0
      %478 = vmatprep.mubr.bf16.mxu0 0
      %479 = vmatmul.mubr.bf16.gmra.mxu0 %v409
      %v480 = vpop.f32.mrf.mxu0
      %v481 = vadd.f32 0.0, %v480
      %v482 = vpop.f32.mrf.mxu0
      %v483 = vpop.f32.mrf.mxu0
      %v484 = vpop.f32.mrf.mxu0
      %485 = vdwg.mxu0
      %v486 = vadd.f32 %v346, %v449
      %v487 = vadd.f32 %v347, %v452
      %v488 = vadd.f32 %v348, %v457
      %v489 = vadd.f32 %v349, %v460
      %v490 = vadd.f32 %v350, %v465
      %v491 = vadd.f32 %v351, %v468
      %v492 = vadd.f32 %v352, %v473
      %v493 = vadd.f32 %v353, %v476
      %v494 = vadd.f32 %v354, %v481
      %495 = vst.msk [vmem:[#allocation2] sm:$0xff] %vm183, %v486
      %496 = vst.msk [vmem:[#allocation2 + $0x8] sm:$0xff] %vm183, %v487
      %497 = vst.msk [vmem:[#allocation2 + $0x10] sm:$0xff] %vm183, %v488
      %498 = vst.msk [vmem:[#allocation2 + $0x18] sm:$0xff] %vm183, %v489
      %499 = vst.msk [vmem:[#allocation2 + $0x20] sm:$0xff] %vm183, %v490
      %500 = vst.msk [vmem:[#allocation2 + $0x28] sm:$0xff] %vm183, %v491
      %501 = vst.msk [vmem:[#allocation2 + $0x30] sm:$0xff] %vm183, %v492
      %502 = vst.msk [vmem:[#allocation2 + $0x38] sm:$0xff] %vm183, %v493
      %503 = vst.msk [vmem:[#allocation2 + $0x40] sm:$0xff] %vm183, %v494
      %v504 = vld [vmem:[#allocation2] sm:$0xff]
      %v505 = vld [vmem:[#allocation2 + $0x8] sm:$0xff]
      %v506 = vld [vmem:[#allocation2 + $0x10] sm:$0xff]
      %v507 = vld [vmem:[#allocation2 + $0x18] sm:$0xff]
      %v508 = vld [vmem:[#allocation2 + $0x20] sm:$0xff]
      %v509 = vld [vmem:[#allocation2 + $0x28] sm:$0xff]
      %v510 = vld [vmem:[#allocation2 + $0x30] sm:$0xff]
      %v511 = vld [vmem:[#allocation2 + $0x38] sm:$0xff]
      %v512 = vld [vmem:[#allocation2 + $0x40] sm:$0xff]
      %s513 = scalar_lea.vmem %s1, 24
      %v514 = vld [vmem:[%s513] sm:$0xf]
      %v516 = vunpack.c.l.b16 %v203
      %v517 = vpack.c.b16 %v225, %v224
      %v518 = vpack.c.b16 %v227, %v226
      %v519 = vpack.c.b16 %v229, %v228
      %v520 = vpack.c.b16 %v231, %v230
      %v521 = vpack.c.b16 %v516, %v358
      %v523 = vshrl.u32 %v517, 16
      %v525 = vshll.u32 %v517, 16
      %v527 = vrot.slane %v525, 1
      %v528 = vor.u32 %v523, %v527
      %v530 = vshll.u32 %v518, 16
      %v532 = vrot.slane %v530, 1
      %v533 = vsel %vm360, %v528, %v532
      %v534 = vshrl.u32 %v518, 16
      %v536 = vor.u32 %v534, %v532
      %v538 = vshll.u32 %v519, 16
      %v540 = vrot.slane %v538, 1
      %v541 = vsel %vm360, %v536, %v540
      %v542 = vshrl.u32 %v519, 16
      %v544 = vor.u32 %v542, %v540
      %v546 = vshll.u32 %v520, 16
      %v548 = vrot.slane %v546, 1
      %v549 = vsel %vm360, %v544, %v548
      %v550 = vshrl.u32 %v520, 16
      %v552 = vor.u32 %v550, %v548
      %v554 = vshll.u32 %v521, 16
      %v556 = vrot.slane %v554, 1
      %v557 = vsel %vm360, %v552, %v556
      %v558 = vshrl.u32 %v521, 16
      %v560 = vor.u32 %v558, %v556
      %v562 = vsel %vm183, %v533, 0
      %v565 = vsel %vm183, %v541, 0
      %v568 = vsel %vm183, %v549, 0
      %v571 = vsel %vm183, %v557, 0
      %v574 = vsel %vm183, %v560, 0
      %v577 = vsel %vm252, %v514, 0
      %579 = vmatprep.subr.bf16.mxu0 0
      %580 = vmatpush1.bf16.msra.mxu0 0
      %581 = vmatprep.subr.bf16.mxu0 0
      %582 = vmatpush1.bf16.msra.mxu0 0
      %583 = vmatprep.subr.bf16.mxu0 0
      %584 = vmatpush1.bf16.msra.mxu0 0
      %585 = vmatprep.subr.bf16.mxu0 0
      %586 = vmatpush1.bf16.msra.mxu0 0
      %587 = vmatprep.subr.bf16.mxu0 0
      %588 = vmatpush1.bf16.msra.mxu0 0
      %589 = vmatprep.subr.bf16.mxu0 0
      %590 = vmatpush1.bf16.msra.mxu0 0
      %591 = vmatprep.subr.bf16.mxu0 0
      %592 = vmatpush1.bf16.msra.mxu0 0
      %593 = vmatprep.subr.bf16.mxu0 0
      %594 = vmatpush1.bf16.msra.mxu0 %v577
      %595 = vmatprep.subr.bf16.mxu0 0
      %596 = vmatpush2.bf16.msra.mxu0 0
      %597 = vmatprep.subr.bf16.mxu0 0
      %598 = vmatpush2.bf16.msra.mxu0 0
      %599 = vmatprep.subr.bf16.mxu0 0
      %600 = vmatpush2.bf16.msra.mxu0 0
      %601 = vmatprep.subr.bf16.mxu0 0
      %602 = vmatpush2.bf16.msra.mxu0 0
      %603 = vmatprep.subr.bf16.mxu0 0
      %604 = vmatpush2.bf16.msra.mxu0 0
      %605 = vmatprep.subr.bf16.mxu0 0
      %606 = vmatpush2.bf16.msra.mxu0 0
      %607 = vmatprep.subr.bf16.mxu0 0
      %608 = vmatpush2.bf16.msra.mxu0 0
      %609 = vmatprep.subr.bf16.mxu0 0
      %610 = vmatpush2.bf16.msra.mxu0 0
      %611 = vmatprep.mubr.bf16.mxu0 0
      %612 = vmatmul.mubr.bf16.gmra.mxu0 %v562
      %v613 = vpop.f32.mrf.mxu0
      %v614 = vadd.f32 0.0, %v613
      %v615 = vpop.f32.mrf.mxu0
      %v616 = vpop.f32.mrf.mxu0
      %v617 = vadd.f32 0.0, %v616
      %v618 = vpop.f32.mrf.mxu0
      %619 = vmatprep.mubr.bf16.mxu0 0
      %620 = vmatmul.mubr.bf16.gmra.mxu0 %v565
      %v621 = vpop.f32.mrf.mxu0
      %v622 = vadd.f32 0.0, %v621
      %v623 = vpop.f32.mrf.mxu0
      %v624 = vpop.f32.mrf.mxu0
      %v625 = vadd.f32 0.0, %v624
      %v626 = vpop.f32.mrf.mxu0
      %627 = vmatprep.mubr.bf16.mxu0 0
      %628 = vmatmul.mubr.bf16.gmra.mxu0 %v568
      %v629 = vpop.f32.mrf.mxu0
      %v630 = vadd.f32 0.0, %v629
      %v631 = vpop.f32.mrf.mxu0
      %v632 = vpop.f32.mrf.mxu0
      %v633 = vadd.f32 0.0, %v632
      %v634 = vpop.f32.mrf.mxu0
      %635 = vmatprep.mubr.bf16.mxu0 0
      %636 = vmatmul.mubr.bf16.gmra.mxu0 %v571
      %v637 = vpop.f32.mrf.mxu0
      %v638 = vadd.f32 0.0, %v637
      %v639 = vpop.f32.mrf.mxu0
      %v640 = vpop.f32.mrf.mxu0
      %v641 = vadd.f32 0.0, %v640
      %v642 = vpop.f32.mrf.mxu0
      %643 = vmatprep.mubr.bf16.mxu0 0
      %644 = vmatmul.mubr.bf16.gmra.mxu0 %v574
      %v645 = vpop.f32.mrf.mxu0
      %v646 = vadd.f32 0.0, %v645
      %v647 = vpop.f32.mrf.mxu0
      %v648 = vpop.f32.mrf.mxu0
      %v649 = vpop.f32.mrf.mxu0
      %650 = vdwg.mxu0
      %v651 = vadd.f32 %v504, %v614
      %v652 = vadd.f32 %v505, %v617
      %v653 = vadd.f32 %v506, %v622
      %v654 = vadd.f32 %v507, %v625
      %v655 = vadd.f32 %v508, %v630
      %v656 = vadd.f32 %v509, %v633
      %v657 = vadd.f32 %v510, %v638
      %v658 = vadd.f32 %v511, %v641
      %v659 = vadd.f32 %v512, %v646
      %660 = vst.msk [vmem:[#allocation2] sm:$0xff] %vm183, %v651
      %661 = vst.msk [vmem:[#allocation2 + $0x8] sm:$0xff] %vm183, %v652
      %662 = vst.msk [vmem:[#allocation2 + $0x10] sm:$0xff] %vm183, %v653
      %663 = vst.msk [vmem:[#allocation2 + $0x18] sm:$0xff] %vm183, %v654
      %664 = vst.msk [vmem:[#allocation2 + $0x20] sm:$0xff] %vm183, %v655
      %665 = vst.msk [vmem:[#allocation2 + $0x28] sm:$0xff] %vm183, %v656
      %666 = vst.msk [vmem:[#allocation2 + $0x30] sm:$0xff] %vm183, %v657
      %667 = vst.msk [vmem:[#allocation2 + $0x38] sm:$0xff] %vm183, %v658
      %668 = vst.msk [vmem:[#allocation2 + $0x40] sm:$0xff] %vm183, %v659
      %v669 = vld [vmem:[#allocation2] sm:$0xff]
      %v670 = vld [vmem:[#allocation2 + $0x8] sm:$0xff]
      %v671 = vld [vmem:[#allocation2 + $0x10] sm:$0xff]
      %v672 = vld [vmem:[#allocation2 + $0x18] sm:$0xff]
      %v673 = vld [vmem:[#allocation2 + $0x20] sm:$0xff]
      %v674 = vld [vmem:[#allocation2 + $0x28] sm:$0xff]
      %v675 = vld [vmem:[#allocation2 + $0x30] sm:$0xff]
      %v676 = vld [vmem:[#allocation2 + $0x38] sm:$0xff]
      %v677 = vld [vmem:[#allocation2 + $0x40] sm:$0xff]
      %s678 = scalar_lea.vmem %s1, 32
      %v679 = vld [vmem:[%s678] sm:$0xf]
      %vm680 = vcmask 1046528
      %v681 = vrot.slane %v517, 1
      %v682 = vrot.slane %v518, 1
      %v683 = vsel %vm680, %v681, %v682
      %v684 = vrot.slane %v519, 1
      %v685 = vsel %vm680, %v682, %v684
      %v686 = vrot.slane %v520, 1
      %v687 = vsel %vm680, %v684, %v686
      %v688 = vrot.slane %v521, 1
      %v689 = vsel %vm680, %v686, %v688
      %v691 = vsel %vm183, %v683, 0
      %v694 = vsel %vm183, %v685, 0
      %v697 = vsel %vm183, %v687, 0
      %v700 = vsel %vm183, %v689, 0
      %v703 = vsel %vm183, %v688, 0
      %v706 = vsel %vm252, %v679, 0
      %708 = vmatprep.subr.bf16.mxu0 0
      %709 = vmatpush1.bf16.msra.mxu0 0
      %710 = vmatprep.subr.bf16.mxu0 0
      %711 = vmatpush1.bf16.msra.mxu0 0
      %712 = vmatprep.subr.bf16.mxu0 0
      %713 = vmatpush1.bf16.msra.mxu0 0
      %714 = vmatprep.subr.bf16.mxu0 0
      %715 = vmatpush1.bf16.msra.mxu0 0
      %716 = vmatprep.subr.bf16.mxu0 0
      %717 = vmatpush1.bf16.msra.mxu0 0
      %718 = vmatprep.subr.bf16.mxu0 0
      %719 = vmatpush1.bf16.msra.mxu0 0
      %720 = vmatprep.subr.bf16.mxu0 0
      %721 = vmatpush1.bf16.msra.mxu0 0
      %722 = vmatprep.subr.bf16.mxu0 0
      %723 = vmatpush1.bf16.msra.mxu0 %v706
      %724 = vmatprep.subr.bf16.mxu0 0
      %725 = vmatpush2.bf16.msra.mxu0 0
      %726 = vmatprep.subr.bf16.mxu0 0
      %727 = vmatpush2.bf16.msra.mxu0 0
      %728 = vmatprep.subr.bf16.mxu0 0
      %729 = vmatpush2.bf16.msra.mxu0 0
      %730 = vmatprep.subr.bf16.mxu0 0
      %731 = vmatpush2.bf16.msra.mxu0 0
      %732 = vmatprep.subr.bf16.mxu0 0
      %733 = vmatpush2.bf16.msra.mxu0 0
      %734 = vmatprep.subr.bf16.mxu0 0
      %735 = vmatpush2.bf16.msra.mxu0 0
      %736 = vmatprep.subr.bf16.mxu0 0
      %737 = vmatpush2.bf16.msra.mxu0 0
      %738 = vmatprep.subr.bf16.mxu0 0
      %739 = vmatpush2.bf16.msra.mxu0 0
      %740 = vmatprep.mubr.bf16.mxu0 0
      %741 = vmatmul.mubr.bf16.gmra.mxu0 %v691
      %v742 = vpop.f32.mrf.mxu0
      %v743 = vadd.f32 0.0, %v742
      %v744 = vpop.f32.mrf.mxu0
      %v745 = vpop.f32.mrf.mxu0
      %v746 = vadd.f32 0.0, %v745
      %v747 = vpop.f32.mrf.mxu0
      %748 = vmatprep.mubr.bf16.mxu0 0
      %749 = vmatmul.mubr.bf16.gmra.mxu0 %v694
      %v750 = vpop.f32.mrf.mxu0
      %v751 = vadd.f32 0.0, %v750
      %v752 = vpop.f32.mrf.mxu0
      %v753 = vpop.f32.mrf.mxu0
      %v754 = vadd.f32 0.0, %v753
      %v755 = vpop.f32.mrf.mxu0
      %756 = vmatprep.mubr.bf16.mxu0 0
      %757 = vmatmul.mubr.bf16.gmra.mxu0 %v697
      %v758 = vpop.f32.mrf.mxu0
      %v759 = vadd.f32 0.0, %v758
      %v760 = vpop.f32.mrf.mxu0
      %v761 = vpop.f32.mrf.mxu0
      %v762 = vadd.f32 0.0, %v761
      %v763 = vpop.f32.mrf.mxu0
      %764 = vmatprep.mubr.bf16.mxu0 0
      %765 = vmatmul.mubr.bf16.gmra.mxu0 %v700
      %v766 = vpop.f32.mrf.mxu0
      %v767 = vadd.f32 0.0, %v766
      %v768 = vpop.f32.mrf.mxu0
      %v769 = vpop.f32.mrf.mxu0
      %v770 = vadd.f32 0.0, %v769
      %v771 = vpop.f32.mrf.mxu0
      %772 = vmatprep.mubr.bf16.mxu0 0
      %773 = vmatmul.mubr.bf16.gmra.mxu0 %v703
      %v774 = vpop.f32.mrf.mxu0
      %v775 = vadd.f32 0.0, %v774
      %v776 = vpop.f32.mrf.mxu0
      %v777 = vpop.f32.mrf.mxu0
      %v778 = vpop.f32.mrf.mxu0
      %779 = vdwg.mxu0
      %v780 = vadd.f32 %v669, %v743
      %v781 = vadd.f32 %v670, %v746
      %v782 = vadd.f32 %v671, %v751
      %v783 = vadd.f32 %v672, %v754
      %v784 = vadd.f32 %v673, %v759
      %v785 = vadd.f32 %v674, %v762
      %v786 = vadd.f32 %v675, %v767
      %v787 = vadd.f32 %v676, %v770
      %v788 = vadd.f32 %v677, %v775
      %789 = vst.msk [vmem:[#allocation2] sm:$0xff] %vm183, %v780
      %790 = vst.msk [vmem:[#allocation2 + $0x8] sm:$0xff] %vm183, %v781
      %791 = vst.msk [vmem:[#allocation2 + $0x10] sm:$0xff] %vm183, %v782
      %792 = vst.msk [vmem:[#allocation2 + $0x18] sm:$0xff] %vm183, %v783
      %793 = vst.msk [vmem:[#allocation2 + $0x20] sm:$0xff] %vm183, %v784
      %794 = vst.msk [vmem:[#allocation2 + $0x28] sm:$0xff] %vm183, %v785
      %795 = vst.msk [vmem:[#allocation2 + $0x30] sm:$0xff] %vm183, %v786
      %796 = vst.msk [vmem:[#allocation2 + $0x38] sm:$0xff] %vm183, %v787
      %797 = vst.msk [vmem:[#allocation2 + $0x40] sm:$0xff] %vm183, %v788
      %s798 = scalar_lea.vmem %s172, 48
      %v799 = vld [vmem:[%s798] sm:$0xf]
      %v800 = vld [vmem:[%s798 + $0x4] sm:$0xf]
      %v801 = vld [vmem:[%s798 + $0x8] sm:$0xf]
      %v802 = vld [vmem:[%s798 + $0xc] sm:$0xf]
      %v803 = vld [vmem:[%s798 + $0x10] sm:$0xf]
      %v804 = vld [vmem:[%s798 + $0x14] sm:$0xf]
      %v805 = vld [vmem:[%s798 + $0x18] sm:$0xf]
      %v806 = vld [vmem:[%s798 + $0x1c] sm:$0xf]
      %v807 = vld [vmem:[%s798 + $0x20] sm:$0xf]
      %v808 = vld [vmem:[%s798 + $0x24] sm:$0xf]
      %v809 = vld [vmem:[%s798 + $0x28] sm:$0xf]
      %v810 = vld [vmem:[#allocation2] sm:$0xff]
      %v811 = vld [vmem:[#allocation2 + $0x8] sm:$0xff]
      %v812 = vld [vmem:[#allocation2 + $0x10] sm:$0xff]
      %v813 = vld [vmem:[#allocation2 + $0x18] sm:$0xff]
      %v814 = vld [vmem:[#allocation2 + $0x20] sm:$0xff]
      %v815 = vld [vmem:[#allocation2 + $0x28] sm:$0xff]
      %v816 = vld [vmem:[#allocation2 + $0x30] sm:$0xff]
      %v817 = vld [vmem:[#allocation2 + $0x38] sm:$0xff]
      %v818 = vld [vmem:[#allocation2 + $0x40] sm:$0xff]
      %s819 = scalar_lea.vmem %s1, 4
      %v820 = vld [vmem:[%s819] sm:$0xf]
      %v830 = vunpack.c.l.b16 %v799
      %v831 = vunpack.c.l.b16 %v800
      %v832 = vunpack.c.l.b16 %v801
      %v833 = vunpack.c.l.b16 %v802
      %v834 = vunpack.c.l.b16 %v803
      %v835 = vunpack.c.l.b16 %v804
      %v836 = vunpack.c.l.b16 %v805
      %v837 = vunpack.c.l.b16 %v806
      %v838 = vunpack.c.l.b16 %v807
      %v839 = vpack.c.b16 %v831, %v830
      %v840 = vpack.c.b16 %v833, %v832
      %v841 = vpack.c.b16 %v835, %v834
      %v842 = vpack.c.b16 %v837, %v836
      %v843 = vpack.c.b16 %v838, %v838
      %v845 = vsel %vm183, %v839, 0
      %v848 = vsel %vm183, %v840, 0
      %v851 = vsel %vm183, %v841, 0
      %v854 = vsel %vm183, %v842, 0
      %v857 = vsel %vm183, %v843, 0
      %v860 = vsel %vm252, %v820, 0
      %862 = vmatprep.subr.bf16.mxu0 0
      %863 = vmatpush1.bf16.msra.mxu0 0
      %864 = vmatprep.subr.bf16.mxu0 0
      %865 = vmatpush1.bf16.msra.mxu0 0
      %866 = vmatprep.subr.bf16.mxu0 0
      %867 = vmatpush1.bf16.msra.mxu0 0
      %868 = vmatprep.subr.bf16.mxu0 0
      %869 = vmatpush1.bf16.msra.mxu0 0
      %870 = vmatprep.subr.bf16.mxu0 0
      %871 = vmatpush1.bf16.msra.mxu0 0
      %872 = vmatprep.subr.bf16.mxu0 0
      %873 = vmatpush1.bf16.msra.mxu0 0
      %874 = vmatprep.subr.bf16.mxu0 0
      %875 = vmatpush1.bf16.msra.mxu0 0
      %876 = vmatprep.subr.bf16.mxu0 0
      %877 = vmatpush1.bf16.msra.mxu0 %v860
      %878 = vmatprep.subr.bf16.mxu0 0
      %879 = vmatpush2.bf16.msra.mxu0 0
      %880 = vmatprep.subr.bf16.mxu0 0
      %881 = vmatpush2.bf16.msra.mxu0 0
      %882 = vmatprep.subr.bf16.mxu0 0
      %883 = vmatpush2.bf16.msra.mxu0 0
      %884 = vmatprep.subr.bf16.mxu0 0
      %885 = vmatpush2.bf16.msra.mxu0 0
      %886 = vmatprep.subr.bf16.mxu0 0
      %887 = vmatpush2.bf16.msra.mxu0 0
      %888 = vmatprep.subr.bf16.mxu0 0
      %889 = vmatpush2.bf16.msra.mxu0 0
      %890 = vmatprep.subr.bf16.mxu0 0
      %891 = vmatpush2.bf16.msra.mxu0 0
      %892 = vmatprep.subr.bf16.mxu0 0
      %893 = vmatpush2.bf16.msra.mxu0 0
      %894 = vmatprep.mubr.bf16.mxu0 0
      %895 = vmatmul.mubr.bf16.gmra.mxu0 %v845
      %v896 = vpop.f32.mrf.mxu0
      %v897 = vadd.f32 0.0, %v896
      %v898 = vpop.f32.mrf.mxu0
      %v899 = vpop.f32.mrf.mxu0
      %v900 = vadd.f32 0.0, %v899
      %v901 = vpop.f32.mrf.mxu0
      %902 = vmatprep.mubr.bf16.mxu0 0
      %903 = vmatmul.mubr.bf16.gmra.mxu0 %v848
      %v904 = vpop.f32.mrf.mxu0
      %v905 = vadd.f32 0.0, %v904
      %v906 = vpop.f32.mrf.mxu0
      %v907 = vpop.f32.mrf.mxu0
      %v908 = vadd.f32 0.0, %v907
      %v909 = vpop.f32.mrf.mxu0
      %910 = vmatprep.mubr.bf16.mxu0 0
      %911 = vmatmul.mubr.bf16.gmra.mxu0 %v851
      %v912 = vpop.f32.mrf.mxu0
      %v913 = vadd.f32 0.0, %v912
      %v914 = vpop.f32.mrf.mxu0
      %v915 = vpop.f32.mrf.mxu0
      %v916 = vadd.f32 0.0, %v915
      %v917 = vpop.f32.mrf.mxu0
      %918 = vmatprep.mubr.bf16.mxu0 0
      %919 = vmatmul.mubr.bf16.gmra.mxu0 %v854
      %v920 = vpop.f32.mrf.mxu0
      %v921 = vadd.f32 0.0, %v920
      %v922 = vpop.f32.mrf.mxu0
      %v923 = vpop.f32.mrf.mxu0
      %v924 = vadd.f32 0.0, %v923
      %v925 = vpop.f32.mrf.mxu0
      %926 = vmatprep.mubr.bf16.mxu0 0
      %927 = vmatmul.mubr.bf16.gmra.mxu0 %v857
      %v928 = vpop.f32.mrf.mxu0
      %v929 = vadd.f32 0.0, %v928
      %v930 = vpop.f32.mrf.mxu0
      %v931 = vpop.f32.mrf.mxu0
      %v932 = vpop.f32.mrf.mxu0
      %933 = vdwg.mxu0
      %v934 = vadd.f32 %v810, %v897
      %v935 = vadd.f32 %v811, %v900
      %v936 = vadd.f32 %v812, %v905
      %v937 = vadd.f32 %v813, %v908
      %v938 = vadd.f32 %v814, %v913
      %v939 = vadd.f32 %v815, %v916
      %v940 = vadd.f32 %v816, %v921
      %v941 = vadd.f32 %v817, %v924
      %v942 = vadd.f32 %v818, %v929
      %943 = vst.msk [vmem:[#allocation2] sm:$0xff] %vm183, %v934
      %944 = vst.msk [vmem:[#allocation2 + $0x8] sm:$0xff] %vm183, %v935
      %945 = vst.msk [vmem:[#allocation2 + $0x10] sm:$0xff] %vm183, %v936
      %946 = vst.msk [vmem:[#allocation2 + $0x18] sm:$0xff] %vm183, %v937
      %947 = vst.msk [vmem:[#allocation2 + $0x20] sm:$0xff] %vm183, %v938
      %948 = vst.msk [vmem:[#allocation2 + $0x28] sm:$0xff] %vm183, %v939
      %949 = vst.msk [vmem:[#allocation2 + $0x30] sm:$0xff] %vm183, %v940
      %950 = vst.msk [vmem:[#allocation2 + $0x38] sm:$0xff] %vm183, %v941
      %951 = vst.msk [vmem:[#allocation2 + $0x40] sm:$0xff] %vm183, %v942
      %v952 = vld [vmem:[#allocation2] sm:$0xff]
      %v953 = vld [vmem:[#allocation2 + $0x8] sm:$0xff]
      %v954 = vld [vmem:[#allocation2 + $0x10] sm:$0xff]
      %v955 = vld [vmem:[#allocation2 + $0x18] sm:$0xff]
      %v956 = vld [vmem:[#allocation2 + $0x20] sm:$0xff]
      %v957 = vld [vmem:[#allocation2 + $0x28] sm:$0xff]
      %v958 = vld [vmem:[#allocation2 + $0x30] sm:$0xff]
      %v959 = vld [vmem:[#allocation2 + $0x38] sm:$0xff]
      %v960 = vld [vmem:[#allocation2 + $0x40] sm:$0xff]
      %s961 = scalar_lea.vmem %s1, 28
      %v962 = vld [vmem:[%s961] sm:$0xf]
      %v965 = vunpack.c.l.b16 %v808
      %v966 = vunpack.c.l.b16 %v809
      %v967 = vpack.c.b16 %v832, %v831
      %v968 = vpack.c.b16 %v834, %v833
      %v969 = vpack.c.b16 %v836, %v835
      %v970 = vpack.c.b16 %v838, %v837
      %v971 = vpack.c.b16 %v966, %v965
      %v973 = vshrl.u32 %v967, 16
      %v975 = vshll.u32 %v967, 16
      %v977 = vrot.slane %v975, 1
      %v978 = vor.u32 %v973, %v977
      %v980 = vshll.u32 %v968, 16
      %v982 = vrot.slane %v980, 1
      %v983 = vsel %vm360, %v978, %v982
      %v984 = vshrl.u32 %v968, 16
      %v986 = vor.u32 %v984, %v982
      %v988 = vshll.u32 %v969, 16
      %v990 = vrot.slane %v988, 1
      %v991 = vsel %vm360, %v986, %v990
      %v992 = vshrl.u32 %v969, 16
      %v994 = vor.u32 %v992, %v990
      %v996 = vshll.u32 %v970, 16
      %v998 = vrot.slane %v996, 1
      %v999 = vsel %vm360, %v994, %v998
      %v1000 = vshrl.u32 %v970, 16
      %v1002 = vor.u32 %v1000, %v998
      %v1004 = vshll.u32 %v971, 16
      %v1006 = vrot.slane %v1004, 1
      %v1007 = vsel %vm360, %v1002, %v1006
      %v1008 = vshrl.u32 %v971, 16
      %v1010 = vor.u32 %v1008, %v1006
      %v1012 = vsel %vm183, %v983, 0
      %v1015 = vsel %vm183, %v991, 0
      %v1018 = vsel %vm183, %v999, 0
      %v1021 = vsel %vm183, %v1007, 0
      %v1024 = vsel %vm183, %v1010, 0
      %v1027 = vsel %vm252, %v962, 0
      %1029 = vmatprep.subr.bf16.mxu0 0
      %1030 = vmatpush1.bf16.msra.mxu0 0
      %1031 = vmatprep.subr.bf16.mxu0 0
      %1032 = vmatpush1.bf16.msra.mxu0 0
      %1033 = vmatprep.subr.bf16.mxu0 0
      %1034 = vmatpush1.bf16.msra.mxu0 0
      %1035 = vmatprep.subr.bf16.mxu0 0
      %1036 = vmatpush1.bf16.msra.mxu0 0
      %1037 = vmatprep.subr.bf16.mxu0 0
      %1038 = vmatpush1.bf16.msra.mxu0 0
      %1039 = vmatprep.subr.bf16.mxu0 0
      %1040 = vmatpush1.bf16.msra.mxu0 0
      %1041 = vmatprep.subr.bf16.mxu0 0
      %1042 = vmatpush1.bf16.msra.mxu0 0
      %1043 = vmatprep.subr.bf16.mxu0 0
      %1044 = vmatpush1.bf16.msra.mxu0 %v1027
      %1045 = vmatprep.subr.bf16.mxu0 0
      %1046 = vmatpush2.bf16.msra.mxu0 0
      %1047 = vmatprep.subr.bf16.mxu0 0
      %1048 = vmatpush2.bf16.msra.mxu0 0
      %1049 = vmatprep.subr.bf16.mxu0 0
      %1050 = vmatpush2.bf16.msra.mxu0 0
      %1051 = vmatprep.subr.bf16.mxu0 0
      %1052 = vmatpush2.bf16.msra.mxu0 0
      %1053 = vmatprep.subr.bf16.mxu0 0
      %1054 = vmatpush2.bf16.msra.mxu0 0
      %1055 = vmatprep.subr.bf16.mxu0 0
      %1056 = vmatpush2.bf16.msra.mxu0 0
      %1057 = vmatprep.subr.bf16.mxu0 0
      %1058 = vmatpush2.bf16.msra.mxu0 0
      %1059 = vmatprep.subr.bf16.mxu0 0
      %1060 = vmatpush2.bf16.msra.mxu0 0
      %1061 = vmatprep.mubr.bf16.mxu0 0
      %1062 = vmatmul.mubr.bf16.gmra.mxu0 %v1012
      %v1063 = vpop.f32.mrf.mxu0
      %v1064 = vadd.f32 0.0, %v1063
      %v1065 = vpop.f32.mrf.mxu0
      %v1066 = vpop.f32.mrf.mxu0
      %v1067 = vadd.f32 0.0, %v1066
      %v1068 = vpop.f32.mrf.mxu0
      %1069 = vmatprep.mubr.bf16.mxu0 0
      %1070 = vmatmul.mubr.bf16.gmra.mxu0 %v1015
      %v1071 = vpop.f32.mrf.mxu0
      %v1072 = vadd.f32 0.0, %v1071
      %v1073 = vpop.f32.mrf.mxu0
      %v1074 = vpop.f32.mrf.mxu0
      %v1075 = vadd.f32 0.0, %v1074
      %v1076 = vpop.f32.mrf.mxu0
      %1077 = vmatprep.mubr.bf16.mxu0 0
      %1078 = vmatmul.mubr.bf16.gmra.mxu0 %v1018
      %v1079 = vpop.f32.mrf.mxu0
      %v1080 = vadd.f32 0.0, %v1079
      %v1081 = vpop.f32.mrf.mxu0
      %v1082 = vpop.f32.mrf.mxu0
      %v1083 = vadd.f32 0.0, %v1082
      %v1084 = vpop.f32.mrf.mxu0
      %1085 = vmatprep.mubr.bf16.mxu0 0
      %1086 = vmatmul.mubr.bf16.gmra.mxu0 %v1021
      %v1087 = vpop.f32.mrf.mxu0
      %v1088 = vadd.f32 0.0, %v1087
      %v1089 = vpop.f32.mrf.mxu0
      %v1090 = vpop.f32.mrf.mxu0
      %v1091 = vadd.f32 0.0, %v1090
      %v1092 = vpop.f32.mrf.mxu0
      %1093 = vmatprep.mubr.bf16.mxu0 0
      %1094 = vmatmul.mubr.bf16.gmra.mxu0 %v1024
      %v1095 = vpop.f32.mrf.mxu0
      %v1096 = vadd.f32 0.0, %v1095
      %v1097 = vpop.f32.mrf.mxu0
      %v1098 = vpop.f32.mrf.mxu0
      %v1099 = vpop.f32.mrf.mxu0
      %1100 = vdwg.mxu0
      %v1101 = vadd.f32 %v952, %v1064
      %v1102 = vadd.f32 %v953, %v1067
      %v1103 = vadd.f32 %v954, %v1072
      %v1104 = vadd.f32 %v955, %v1075
      %v1105 = vadd.f32 %v956, %v1080
      %v1106 = vadd.f32 %v957, %v1083
      %v1107 = vadd.f32 %v958, %v1088
      %v1108 = vadd.f32 %v959, %v1091
      %v1109 = vadd.f32 %v960, %v1096
      %1110 = vst.msk [vmem:[#allocation2] sm:$0xff] %vm183, %v1101
      %1111 = vst.msk [vmem:[#allocation2 + $0x8] sm:$0xff] %vm183, %v1102
      %1112 = vst.msk [vmem:[#allocation2 + $0x10] sm:$0xff] %vm183, %v1103
      %1113 = vst.msk [vmem:[#allocation2 + $0x18] sm:$0xff] %vm183, %v1104
      %1114 = vst.msk [vmem:[#allocation2 + $0x20] sm:$0xff] %vm183, %v1105
      %1115 = vst.msk [vmem:[#allocation2 + $0x28] sm:$0xff] %vm183, %v1106
      %1116 = vst.msk [vmem:[#allocation2 + $0x30] sm:$0xff] %vm183, %v1107
      %1117 = vst.msk [vmem:[#allocation2 + $0x38] sm:$0xff] %vm183, %v1108
      %1118 = vst.msk [vmem:[#allocation2 + $0x40] sm:$0xff] %vm183, %v1109
      %s1119 = scalar_lea.vmem %s172, 96
      %v1120 = vld [vmem:[%s1119] sm:$0xf]
      %v1121 = vld [vmem:[%s1119 + $0x4] sm:$0xf]
      %v1122 = vld [vmem:[%s1119 + $0x8] sm:$0xf]
      %v1123 = vld [vmem:[%s1119 + $0xc] sm:$0xf]
      %v1124 = vld [vmem:[%s1119 + $0x10] sm:$0xf]
      %v1125 = vld [vmem:[%s1119 + $0x14] sm:$0xf]
      %v1126 = vld [vmem:[%s1119 + $0x18] sm:$0xf]
      %v1127 = vld [vmem:[%s1119 + $0x1c] sm:$0xf]
      %v1128 = vld [vmem:[%s1119 + $0x20] sm:$0xf]
      %v1129 = vld [vmem:[%s1119 + $0x24] sm:$0xf]
      %v1130 = vld [vmem:[#allocation2] sm:$0xff]
      %v1131 = vld [vmem:[#allocation2 + $0x8] sm:$0xff]
      %v1132 = vld [vmem:[#allocation2 + $0x10] sm:$0xff]
      %v1133 = vld [vmem:[#allocation2 + $0x18] sm:$0xff]
      %v1134 = vld [vmem:[#allocation2 + $0x20] sm:$0xff]
      %v1135 = vld [vmem:[#allocation2 + $0x28] sm:$0xff]
      %v1136 = vld [vmem:[#allocation2 + $0x30] sm:$0xff]
      %v1137 = vld [vmem:[#allocation2 + $0x38] sm:$0xff]
      %v1138 = vld [vmem:[#allocation2 + $0x40] sm:$0xff]
      %s1139 = scalar_lea.vmem %s1, 12
      %v1140 = vld [vmem:[%s1139] sm:$0xf]
      %v1150 = vunpack.c.l.b16 %v1120
      %v1151 = vunpack.c.l.b16 %v1121
      %v1152 = vunpack.c.l.b16 %v1122
      %v1153 = vunpack.c.l.b16 %v1123
      %v1154 = vunpack.c.l.b16 %v1124
      %v1155 = vunpack.c.l.b16 %v1125
      %v1156 = vunpack.c.l.b16 %v1126
      %v1157 = vunpack.c.l.b16 %v1127
      %v1158 = vunpack.c.l.b16 %v1128
      %v1159 = vpack.c.b16 %v1151, %v1150
      %v1160 = vpack.c.b16 %v1153, %v1152
      %v1161 = vpack.c.b16 %v1155, %v1154
      %v1162 = vpack.c.b16 %v1157, %v1156
      %v1163 = vpack.c.b16 %v1158, %v1158
      %v1165 = vsel %vm183, %v1159, 0
      %v1168 = vsel %vm183, %v1160, 0
      %v1171 = vsel %vm183, %v1161, 0
      %v1174 = vsel %vm183, %v1162, 0
      %v1177 = vsel %vm183, %v1163, 0
      %v1180 = vsel %vm252, %v1140, 0
      %1182 = vmatprep.subr.bf16.mxu0 0
      %1183 = vmatpush1.bf16.msra.mxu0 0
      %1184 = vmatprep.subr.bf16.mxu0 0
      %1185 = vmatpush1.bf16.msra.mxu0 0
      %1186 = vmatprep.subr.bf16.mxu0 0
      %1187 = vmatpush1.bf16.msra.mxu0 0
      %1188 = vmatprep.subr.bf16.mxu0 0
      %1189 = vmatpush1.bf16.msra.mxu0 0
      %1190 = vmatprep.subr.bf16.mxu0 0
      %1191 = vmatpush1.bf16.msra.mxu0 0
      %1192 = vmatprep.subr.bf16.mxu0 0
      %1193 = vmatpush1.bf16.msra.mxu0 0
      %1194 = vmatprep.subr.bf16.mxu0 0
      %1195 = vmatpush1.bf16.msra.mxu0 0
      %1196 = vmatprep.subr.bf16.mxu0 0
      %1197 = vmatpush1.bf16.msra.mxu0 %v1180
      %1198 = vmatprep.subr.bf16.mxu0 0
      %1199 = vmatpush2.bf16.msra.mxu0 0
      %1200 = vmatprep.subr.bf16.mxu0 0
      %1201 = vmatpush2.bf16.msra.mxu0 0
      %1202 = vmatprep.subr.bf16.mxu0 0
      %1203 = vmatpush2.bf16.msra.mxu0 0
      %1204 = vmatprep.subr.bf16.mxu0 0
      %1205 = vmatpush2.bf16.msra.mxu0 0
      %1206 = vmatprep.subr.bf16.mxu0 0
      %1207 = vmatpush2.bf16.msra.mxu0 0
      %1208 = vmatprep.subr.bf16.mxu0 0
      %1209 = vmatpush2.bf16.msra.mxu0 0
      %1210 = vmatprep.subr.bf16.mxu0 0
      %1211 = vmatpush2.bf16.msra.mxu0 0
      %1212 = vmatprep.subr.bf16.mxu0 0
      %1213 = vmatpush2.bf16.msra.mxu0 0
      %1214 = vmatprep.mubr.bf16.mxu0 0
      %1215 = vmatmul.mubr.bf16.gmra.mxu0 %v1165
      %v1216 = vpop.f32.mrf.mxu0
      %v1217 = vadd.f32 0.0, %v1216
      %v1218 = vpop.f32.mrf.mxu0
      %v1219 = vpop.f32.mrf.mxu0
      %v1220 = vadd.f32 0.0, %v1219
      %v1221 = vpop.f32.mrf.mxu0
      %1222 = vmatprep.mubr.bf16.mxu0 0
      %1223 = vmatmul.mubr.bf16.gmra.mxu0 %v1168
      %v1224 = vpop.f32.mrf.mxu0
      %v1225 = vadd.f32 0.0, %v1224
      %v1226 = vpop.f32.mrf.mxu0
      %v1227 = vpop.f32.mrf.mxu0
      %v1228 = vadd.f32 0.0, %v1227
      %v1229 = vpop.f32.mrf.mxu0
      %1230 = vmatprep.mubr.bf16.mxu0 0
      %1231 = vmatmul.mubr.bf16.gmra.mxu0 %v1171
      %v1232 = vpop.f32.mrf.mxu0
      %v1233 = vadd.f32 0.0, %v1232
      %v1234 = vpop.f32.mrf.mxu0
      %v1235 = vpop.f32.mrf.mxu0
      %v1236 = vadd.f32 0.0, %v1235
      %v1237 = vpop.f32.mrf.mxu0
      %1238 = vmatprep.mubr.bf16.mxu0 0
      %1239 = vmatmul.mubr.bf16.gmra.mxu0 %v1174
      %v1240 = vpop.f32.mrf.mxu0
      %v1241 = vadd.f32 0.0, %v1240
      %v1242 = vpop.f32.mrf.mxu0
      %v1243 = vpop.f32.mrf.mxu0
      %v1244 = vadd.f32 0.0, %v1243
      %v1245 = vpop.f32.mrf.mxu0
      %1246 = vmatprep.mubr.bf16.mxu0 0
      %1247 = vmatmul.mubr.bf16.gmra.mxu0 %v1177
      %v1248 = vpop.f32.mrf.mxu0
      %v1249 = vadd.f32 0.0, %v1248
      %v1250 = vpop.f32.mrf.mxu0
      %v1251 = vpop.f32.mrf.mxu0
      %v1252 = vpop.f32.mrf.mxu0
      %1253 = vdwg.mxu0
      %v1254 = vadd.f32 %v1130, %v1217
      %v1255 = vadd.f32 %v1131, %v1220
      %v1256 = vadd.f32 %v1132, %v1225
      %v1257 = vadd.f32 %v1133, %v1228
      %v1258 = vadd.f32 %v1134, %v1233
      %v1259 = vadd.f32 %v1135, %v1236
      %v1260 = vadd.f32 %v1136, %v1241
      %v1261 = vadd.f32 %v1137, %v1244
      %v1262 = vadd.f32 %v1138, %v1249
      %1263 = vst.msk [vmem:[#allocation2] sm:$0xff] %vm183, %v1254
      %1264 = vst.msk [vmem:[#allocation2 + $0x8] sm:$0xff] %vm183, %v1255
      %1265 = vst.msk [vmem:[#allocation2 + $0x10] sm:$0xff] %vm183, %v1256
      %1266 = vst.msk [vmem:[#allocation2 + $0x18] sm:$0xff] %vm183, %v1257
      %1267 = vst.msk [vmem:[#allocation2 + $0x20] sm:$0xff] %vm183, %v1258
      %1268 = vst.msk [vmem:[#allocation2 + $0x28] sm:$0xff] %vm183, %v1259
      %1269 = vst.msk [vmem:[#allocation2 + $0x30] sm:$0xff] %vm183, %v1260
      %1270 = vst.msk [vmem:[#allocation2 + $0x38] sm:$0xff] %vm183, %v1261
      %1271 = vst.msk [vmem:[#allocation2 + $0x40] sm:$0xff] %vm183, %v1262
      %v1272 = vld [vmem:[#allocation2] sm:$0xff]
      %v1273 = vld [vmem:[#allocation2 + $0x8] sm:$0xff]
      %v1274 = vld [vmem:[#allocation2 + $0x10] sm:$0xff]
      %v1275 = vld [vmem:[#allocation2 + $0x18] sm:$0xff]
      %v1276 = vld [vmem:[#allocation2 + $0x20] sm:$0xff]
      %v1277 = vld [vmem:[#allocation2 + $0x28] sm:$0xff]
      %v1278 = vld [vmem:[#allocation2 + $0x30] sm:$0xff]
      %v1279 = vld [vmem:[#allocation2 + $0x38] sm:$0xff]
      %v1280 = vld [vmem:[#allocation2 + $0x40] sm:$0xff]
      %s1281 = scalar_lea.vmem %s1, 20
      %v1282 = vld [vmem:[%s1281] sm:$0xf]
      %v1284 = vunpack.c.l.b16 %v1129
      %v1285 = vpack.c.b16 %v1284, %v1158
      %v1286 = vshrl.u32 %v1159, 16
      %v1288 = vshll.u32 %v1159, 16
      %v1290 = vrot.slane %v1288, 1
      %v1291 = vor.u32 %v1286, %v1290
      %v1292 = vshll.u32 %v1160, 16
      %v1294 = vrot.slane %v1292, 1
      %v1295 = vsel %vm360, %v1291, %v1294
      %v1296 = vshrl.u32 %v1160, 16
      %v1298 = vor.u32 %v1296, %v1294
      %v1299 = vshll.u32 %v1161, 16
      %v1301 = vrot.slane %v1299, 1
      %v1302 = vsel %vm360, %v1298, %v1301
      %v1303 = vshrl.u32 %v1161, 16
      %v1305 = vor.u32 %v1303, %v1301
      %v1306 = vshll.u32 %v1162, 16
      %v1308 = vrot.slane %v1306, 1
      %v1309 = vsel %vm360, %v1305, %v1308
      %v1310 = vshrl.u32 %v1162, 16
      %v1312 = vor.u32 %v1310, %v1308
      %v1314 = vshll.u32 %v1285, 16
      %v1316 = vrot.slane %v1314, 1
      %v1317 = vsel %vm360, %v1312, %v1316
      %v1318 = vshrl.u32 %v1285, 16
      %v1320 = vor.u32 %v1318, %v1316
      %v1322 = vsel %vm183, %v1295, 0
      %v1325 = vsel %vm183, %v1302, 0
      %v1328 = vsel %vm183, %v1309, 0
      %v1331 = vsel %vm183, %v1317, 0
      %v1334 = vsel %vm183, %v1320, 0
      %v1337 = vsel %vm252, %v1282, 0
      %1339 = vmatprep.subr.bf16.mxu0 0
      %1340 = vmatpush1.bf16.msra.mxu0 0
      %1341 = vmatprep.subr.bf16.mxu0 0
      %1342 = vmatpush1.bf16.msra.mxu0 0
      %1343 = vmatprep.subr.bf16.mxu0 0
      %1344 = vmatpush1.bf16.msra.mxu0 0
      %1345 = vmatprep.subr.bf16.mxu0 0
      %1346 = vmatpush1.bf16.msra.mxu0 0
      %1347 = vmatprep.subr.bf16.mxu0 0
      %1348 = vmatpush1.bf16.msra.mxu0 0
      %1349 = vmatprep.subr.bf16.mxu0 0
      %1350 = vmatpush1.bf16.msra.mxu0 0
      %1351 = vmatprep.subr.bf16.mxu0 0
      %1352 = vmatpush1.bf16.msra.mxu0 0
      %1353 = vmatprep.subr.bf16.mxu0 0
      %1354 = vmatpush1.bf16.msra.mxu0 %v1337
      %1355 = vmatprep.subr.bf16.mxu0 0
      %1356 = vmatpush2.bf16.msra.mxu0 0
      %1357 = vmatprep.subr.bf16.mxu0 0
      %1358 = vmatpush2.bf16.msra.mxu0 0
      %1359 = vmatprep.subr.bf16.mxu0 0
      %1360 = vmatpush2.bf16.msra.mxu0 0
      %1361 = vmatprep.subr.bf16.mxu0 0
      %1362 = vmatpush2.bf16.msra.mxu0 0
      %1363 = vmatprep.subr.bf16.mxu0 0
      %1364 = vmatpush2.bf16.msra.mxu0 0
      %1365 = vmatprep.subr.bf16.mxu0 0
      %1366 = vmatpush2.bf16.msra.mxu0 0
      %1367 = vmatprep.subr.bf16.mxu0 0
      %1368 = vmatpush2.bf16.msra.mxu0 0
      %1369 = vmatprep.subr.bf16.mxu0 0
      %1370 = vmatpush2.bf16.msra.mxu0 0
      %1371 = vmatprep.mubr.bf16.mxu0 0
      %1372 = vmatmul.mubr.bf16.gmra.mxu0 %v1322
      %v1373 = vpop.f32.mrf.mxu0
      %v1374 = vadd.f32 0.0, %v1373
      %v1375 = vpop.f32.mrf.mxu0
      %v1376 = vpop.f32.mrf.mxu0
      %v1377 = vadd.f32 0.0, %v1376
      %v1378 = vpop.f32.mrf.mxu0
      %1379 = vmatprep.mubr.bf16.mxu0 0
      %1380 = vmatmul.mubr.bf16.gmra.mxu0 %v1325
      %v1381 = vpop.f32.mrf.mxu0
      %v1382 = vadd.f32 0.0, %v1381
      %v1383 = vpop.f32.mrf.mxu0
      %v1384 = vpop.f32.mrf.mxu0
      %v1385 = vadd.f32 0.0, %v1384
      %v1386 = vpop.f32.mrf.mxu0
      %1387 = vmatprep.mubr.bf16.mxu0 0
      %1388 = vmatmul.mubr.bf16.gmra.mxu0 %v1328
      %v1389 = vpop.f32.mrf.mxu0
      %v1390 = vadd.f32 0.0, %v1389
      %v1391 = vpop.f32.mrf.mxu0
      %v1392 = vpop.f32.mrf.mxu0
      %v1393 = vadd.f32 0.0, %v1392
      %v1394 = vpop.f32.mrf.mxu0
      %1395 = vmatprep.mubr.bf16.mxu0 0
      %1396 = vmatmul.mubr.bf16.gmra.mxu0 %v1331
      %v1397 = vpop.f32.mrf.mxu0
      %v1398 = vadd.f32 0.0, %v1397
      %v1399 = vpop.f32.mrf.mxu0
      %v1400 = vpop.f32.mrf.mxu0
      %v1401 = vadd.f32 0.0, %v1400
      %v1402 = vpop.f32.mrf.mxu0
      %1403 = vmatprep.mubr.bf16.mxu0 0
      %1404 = vmatmul.mubr.bf16.gmra.mxu0 %v1334
      %v1405 = vpop.f32.mrf.mxu0
      %v1406 = vadd.f32 0.0, %v1405
      %v1407 = vpop.f32.mrf.mxu0
      %v1408 = vpop.f32.mrf.mxu0
      %v1409 = vpop.f32.mrf.mxu0
      %1410 = vdwg.mxu0
      %v1411 = vadd.f32 %v1272, %v1374
      %v1412 = vadd.f32 %v1273, %v1377
      %v1413 = vadd.f32 %v1274, %v1382
      %v1414 = vadd.f32 %v1275, %v1385
      %v1415 = vadd.f32 %v1276, %v1390
      %v1416 = vadd.f32 %v1277, %v1393
      %v1417 = vadd.f32 %v1278, %v1398
      %v1418 = vadd.f32 %v1279, %v1401
      %v1419 = vadd.f32 %v1280, %v1406
      %1420 = vst.msk [vmem:[#allocation2] sm:$0xff] %vm183, %v1411
      %1421 = vst.msk [vmem:[#allocation2 + $0x8] sm:$0xff] %vm183, %v1412
      %1422 = vst.msk [vmem:[#allocation2 + $0x10] sm:$0xff] %vm183, %v1413
      %1423 = vst.msk [vmem:[#allocation2 + $0x18] sm:$0xff] %vm183, %v1414
      %1424 = vst.msk [vmem:[#allocation2 + $0x20] sm:$0xff] %vm183, %v1415
      %1425 = vst.msk [vmem:[#allocation2 + $0x28] sm:$0xff] %vm183, %v1416
      %1426 = vst.msk [vmem:[#allocation2 + $0x30] sm:$0xff] %vm183, %v1417
      %1427 = vst.msk [vmem:[#allocation2 + $0x38] sm:$0xff] %vm183, %v1418
      %1428 = vst.msk [vmem:[#allocation2 + $0x40] sm:$0xff] %vm183, %v1419
      %s1429 = scalar_lea.vmem %s172, 144
      %v1430 = vld [vmem:[%s1429] sm:$0xf]
      %v1431 = vld [vmem:[%s1429 + $0x4] sm:$0xf]
      %v1432 = vld [vmem:[%s1429 + $0x8] sm:$0xf]
      %v1433 = vld [vmem:[%s1429 + $0xc] sm:$0xf]
      %v1434 = vld [vmem:[%s1429 + $0x10] sm:$0xf]
      %v1435 = vld [vmem:[%s1429 + $0x14] sm:$0xf]
      %v1436 = vld [vmem:[%s1429 + $0x18] sm:$0xf]
      %v1437 = vld [vmem:[%s1429 + $0x1c] sm:$0xf]
      %v1438 = vld [vmem:[%s1429 + $0x20] sm:$0xf]
      %v1439 = vld [vmem:[#allocation2] sm:$0xff]
      %v1440 = vld [vmem:[#allocation2 + $0x8] sm:$0xff]
      %v1441 = vld [vmem:[#allocation2 + $0x10] sm:$0xff]
      %v1442 = vld [vmem:[#allocation2 + $0x18] sm:$0xff]
      %v1443 = vld [vmem:[#allocation2 + $0x20] sm:$0xff]
      %v1444 = vld [vmem:[#allocation2 + $0x28] sm:$0xff]
      %v1445 = vld [vmem:[#allocation2 + $0x30] sm:$0xff]
      %v1446 = vld [vmem:[#allocation2 + $0x38] sm:$0xff]
      %v1447 = vld [vmem:[#allocation2 + $0x40] sm:$0xff]
      %s1448 = scalar_lea.vmem %s1, 16
      %v1449 = vld [vmem:[%s1448] sm:$0xf]
      %v1459 = vunpack.c.l.b16 %v1430
      %v1460 = vunpack.c.l.b16 %v1431
      %v1461 = vunpack.c.l.b16 %v1432
      %v1462 = vunpack.c.l.b16 %v1433
      %v1463 = vunpack.c.l.b16 %v1434
      %v1464 = vunpack.c.l.b16 %v1435
      %v1465 = vunpack.c.l.b16 %v1436
      %v1466 = vunpack.c.l.b16 %v1437
      %v1467 = vunpack.c.l.b16 %v1438
      %v1468 = vpack.c.b16 %v1460, %v1459
      %v1469 = vpack.c.b16 %v1462, %v1461
      %v1470 = vpack.c.b16 %v1464, %v1463
      %v1471 = vpack.c.b16 %v1466, %v1465
      %v1472 = vpack.c.b16 %v1467, %v1467
      %v1474 = vsel %vm183, %v1468, 0
      %v1477 = vsel %vm183, %v1469, 0
      %v1480 = vsel %vm183, %v1470, 0
      %v1483 = vsel %vm183, %v1471, 0
      %v1486 = vsel %vm183, %v1472, 0
      %v1489 = vsel %vm252, %v1449, 0
      %1491 = vmatprep.subr.bf16.mxu0 0
      %1492 = vmatpush1.bf16.msra.mxu0 0
      %1493 = vmatprep.subr.bf16.mxu0 0
      %1494 = vmatpush1.bf16.msra.mxu0 0
      %1495 = vmatprep.subr.bf16.mxu0 0
      %1496 = vmatpush1.bf16.msra.mxu0 0
      %1497 = vmatprep.subr.bf16.mxu0 0
      %1498 = vmatpush1.bf16.msra.mxu0 0
      %1499 = vmatprep.subr.bf16.mxu0 0
      %1500 = vmatpush1.bf16.msra.mxu0 0
      %1501 = vmatprep.subr.bf16.mxu0 0
      %1502 = vmatpush1.bf16.msra.mxu0 0
      %1503 = vmatprep.subr.bf16.mxu0 0
      %1504 = vmatpush1.bf16.msra.mxu0 0
      %1505 = vmatprep.subr.bf16.mxu0 0
      %1506 = vmatpush1.bf16.msra.mxu0 %v1489
      %1507 = vmatprep.subr.bf16.mxu0 0
      %1508 = vmatpush2.bf16.msra.mxu0 0
      %1509 = vmatprep.subr.bf16.mxu0 0
      %1510 = vmatpush2.bf16.msra.mxu0 0
      %1511 = vmatprep.subr.bf16.mxu0 0
      %1512 = vmatpush2.bf16.msra.mxu0 0
      %1513 = vmatprep.subr.bf16.mxu0 0
      %1514 = vmatpush2.bf16.msra.mxu0 0
      %1515 = vmatprep.subr.bf16.mxu0 0
      %1516 = vmatpush2.bf16.msra.mxu0 0
      %1517 = vmatprep.subr.bf16.mxu0 0
      %1518 = vmatpush2.bf16.msra.mxu0 0
      %1519 = vmatprep.subr.bf16.mxu0 0
      %1520 = vmatpush2.bf16.msra.mxu0 0
      %1521 = vmatprep.subr.bf16.mxu0 0
      %1522 = vmatpush2.bf16.msra.mxu0 0
      %1523 = vmatprep.mubr.bf16.mxu0 0
      %1524 = vmatmul.mubr.bf16.gmra.mxu0 %v1474
      %v1525 = vpop.f32.mrf.mxu0
      %v1526 = vadd.f32 0.0, %v1525
      %v1527 = vpop.f32.mrf.mxu0
      %v1528 = vpop.f32.mrf.mxu0
      %v1529 = vadd.f32 0.0, %v1528
      %v1530 = vpop.f32.mrf.mxu0
      %1531 = vmatprep.mubr.bf16.mxu0 0
      %1532 = vmatmul.mubr.bf16.gmra.mxu0 %v1477
      %v1533 = vpop.f32.mrf.mxu0
      %v1534 = vadd.f32 0.0, %v1533
      %v1535 = vpop.f32.mrf.mxu0
      %v1536 = vpop.f32.mrf.mxu0
      %v1537 = vadd.f32 0.0, %v1536
      %v1538 = vpop.f32.mrf.mxu0
      %1539 = vmatprep.mubr.bf16.mxu0 0
      %1540 = vmatmul.mubr.bf16.gmra.mxu0 %v1480
      %v1541 = vpop.f32.mrf.mxu0
      %v1542 = vadd.f32 0.0, %v1541
      %v1543 = vpop.f32.mrf.mxu0
      %v1544 = vpop.f32.mrf.mxu0
      %v1545 = vadd.f32 0.0, %v1544
      %v1546 = vpop.f32.mrf.mxu0
      %1547 = vmatprep.mubr.bf16.mxu0 0
      %1548 = vmatmul.mubr.bf16.gmra.mxu0 %v1483
      %v1549 = vpop.f32.mrf.mxu0
      %v1550 = vadd.f32 0.0, %v1549
      %v1551 = vpop.f32.mrf.mxu0
      %v1552 = vpop.f32.mrf.mxu0
      %v1553 = vadd.f32 0.0, %v1552
      %v1554 = vpop.f32.mrf.mxu0
      %1555 = vmatprep.mubr.bf16.mxu0 0
      %1556 = vmatmul.mubr.bf16.gmra.mxu0 %v1486
      %v1557 = vpop.f32.mrf.mxu0
      %v1558 = vadd.f32 0.0, %v1557
      %v1559 = vpop.f32.mrf.mxu0
      %v1560 = vpop.f32.mrf.mxu0
      %v1561 = vpop.f32.mrf.mxu0
      %1562 = vdwg.mxu0
      %v1563 = vadd.f32 %v1439, %v1526
      %v1564 = vadd.f32 %v1440, %v1529
      %v1565 = vadd.f32 %v1441, %v1534
      %v1566 = vadd.f32 %v1442, %v1537
      %v1567 = vadd.f32 %v1443, %v1542
      %v1568 = vadd.f32 %v1444, %v1545
      %v1569 = vadd.f32 %v1445, %v1550
      %v1570 = vadd.f32 %v1446, %v1553
      %v1571 = vadd.f32 %v1447, %v1558
      %1572 = vst.msk [vmem:[#allocation2] sm:$0xff] %vm183, %v1563
      %1573 = vst.msk [vmem:[#allocation2 + $0x8] sm:$0xff] %vm183, %v1564
      %1574 = vst.msk [vmem:[#allocation2 + $0x10] sm:$0xff] %vm183, %v1565
      %1575 = vst.msk [vmem:[#allocation2 + $0x18] sm:$0xff] %vm183, %v1566
      %1576 = vst.msk [vmem:[#allocation2 + $0x20] sm:$0xff] %vm183, %v1567
      %1577 = vst.msk [vmem:[#allocation2 + $0x28] sm:$0xff] %vm183, %v1568
      %1578 = vst.msk [vmem:[#allocation2 + $0x30] sm:$0xff] %vm183, %v1569
      %1579 = vst.msk [vmem:[#allocation2 + $0x38] sm:$0xff] %vm183, %v1570
      %1580 = vst.msk [vmem:[#allocation2 + $0x40] sm:$0xff] %vm183, %v1571
      %v1581 = vld [vmem:[#allocation2] sm:$0xff]
      %v1582 = vld [vmem:[#allocation2 + $0x8] sm:$0xff]
      %v1583 = vld [vmem:[#allocation2 + $0x10] sm:$0xff]
      %v1584 = vld [vmem:[#allocation2 + $0x18] sm:$0xff]
      %v1585 = vld [vmem:[#allocation2 + $0x20] sm:$0xff]
      %v1586 = vld [vmem:[#allocation2 + $0x28] sm:$0xff]
      %v1587 = vld [vmem:[#allocation2 + $0x30] sm:$0xff]
      %v1588 = vld [vmem:[#allocation2 + $0x38] sm:$0xff]
      %v1589 = vld [vmem:[#allocation2 + $0x40] sm:$0xff]
      %v1590 = vlaneseq
      %v1591 = vshrl.u32 %v1590, 7
      %v1592 = vadd.s32 %v1591, 8
      %v1593 = vadd.s32 %v1591, 16
      %v1594 = vadd.s32 %v1591, 24
      %v1595 = vadd.s32 %v1591, 32
      %v1596 = vadd.s32 %v1591, 40
      %v1597 = vadd.s32 %v1591, 48
      %v1598 = vadd.s32 %v1591, 56
      %v1599 = vadd.s32 %v1591, 64
      %vm1600 = vcmp.lt.s32.totalorder %v1591, 0
      %v1601 = vsub.s32 0, %v1591
      %v1602 = vsel %vm1600, %v1601, %v1591
      %v1603 = vmul.u32.u64.compose %v1602, 3817748708
      %v1604 = vextract.low.u32 %v1603
      %v1605 = vextract.high.u32 %v1603
      %v1606 = vshrl.u32 %v1605, 3
      %v1607 = vmul.u32 %v1606, 9
      %v1608 = vsub.s32 %v1602, %v1607
      %v1609 = vsub.s32 0, %v1608
      %v1610 = vsel %vm1600, %v1609, %v1608
      %vm1611 = vcmp.lt.s32.totalorder %v1592, 0
      %v1612 = vsub.s32 0, %v1592
      %v1613 = vsel %vm1611, %v1612, %v1592
      %v1614 = vmul.u32.u64.compose %v1613, 3817748708
      %v1615 = vextract.low.u32 %v1614
      %v1616 = vextract.high.u32 %v1614
      %v1617 = vshrl.u32 %v1616, 3
      %v1618 = vmul.u32 %v1617, 9
      %v1619 = vsub.s32 %v1613, %v1618
      %v1620 = vsub.s32 0, %v1619
      %v1621 = vsel %vm1611, %v1620, %v1619
      %vm1622 = vcmp.lt.s32.totalorder %v1593, 0
      %v1623 = vsub.s32 0, %v1593
      %v1624 = vsel %vm1622, %v1623, %v1593
      %v1625 = vmul.u32.u64.compose %v1624, 3817748708
      %v1626 = vextract.low.u32 %v1625
      %v1627 = vextract.high.u32 %v1625
      %v1628 = vshrl.u32 %v1627, 3
      %v1629 = vmul.u32 %v1628, 9
      %v1630 = vsub.s32 %v1624, %v1629
      %v1631 = vsub.s32 0, %v1630
      %v1632 = vsel %vm1622, %v1631, %v1630
      %vm1633 = vcmp.lt.s32.totalorder %v1594, 0
      %v1634 = vsub.s32 0, %v1594
      %v1635 = vsel %vm1633, %v1634, %v1594
      %v1636 = vmul.u32.u64.compose %v1635, 3817748708
      %v1637 = vextract.low.u32 %v1636
      %v1638 = vextract.high.u32 %v1636
      %v1639 = vshrl.u32 %v1638, 3
      %v1640 = vmul.u32 %v1639, 9
      %v1641 = vsub.s32 %v1635, %v1640
      %v1642 = vsub.s32 0, %v1641
      %v1643 = vsel %vm1633, %v1642, %v1641
      %vm1644 = vcmp.lt.s32.totalorder %v1595, 0
      %v1645 = vsub.s32 0, %v1595
      %v1646 = vsel %vm1644, %v1645, %v1595
      %v1647 = vmul.u32.u64.compose %v1646, 3817748708
      %v1648 = vextract.low.u32 %v1647
      %v1649 = vextract.high.u32 %v1647
      %v1650 = vshrl.u32 %v1649, 3
      %v1651 = vmul.u32 %v1650, 9
      %v1652 = vsub.s32 %v1646, %v1651
      %v1653 = vsub.s32 0, %v1652
      %v1654 = vsel %vm1644, %v1653, %v1652
      %vm1655 = vcmp.lt.s32.totalorder %v1596, 0
      %v1656 = vsub.s32 0, %v1596
      %v1657 = vsel %vm1655, %v1656, %v1596
      %v1658 = vmul.u32.u64.compose %v1657, 3817748708
      %v1659 = vextract.low.u32 %v1658
      %v1660 = vextract.high.u32 %v1658
      %v1661 = vshrl.u32 %v1660, 3
      %v1662 = vmul.u32 %v1661, 9
      %v1663 = vsub.s32 %v1657, %v1662
      %v1664 = vsub.s32 0, %v1663
      %v1665 = vsel %vm1655, %v1664, %v1663
      %vm1666 = vcmp.lt.s32.totalorder %v1597, 0
      %v1667 = vsub.s32 0, %v1597
      %v1668 = vsel %vm1666, %v1667, %v1597
      %v1669 = vmul.u32.u64.compose %v1668, 3817748708
      %v1670 = vextract.low.u32 %v1669
      %v1671 = vextract.high.u32 %v1669
      %v1672 = vshrl.u32 %v1671, 3
      %v1673 = vmul.u32 %v1672, 9
      %v1674 = vsub.s32 %v1668, %v1673
      %v1675 = vsub.s32 0, %v1674
      %v1676 = vsel %vm1666, %v1675, %v1674
      %vm1677 = vcmp.lt.s32.totalorder %v1598, 0
      %v1678 = vsub.s32 0, %v1598
      %v1679 = vsel %vm1677, %v1678, %v1598
      %v1680 = vmul.u32.u64.compose %v1679, 3817748708
      %v1681 = vextract.low.u32 %v1680
      %v1682 = vextract.high.u32 %v1680
      %v1683 = vshrl.u32 %v1682, 3
      %v1684 = vmul.u32 %v1683, 9
      %v1685 = vsub.s32 %v1679, %v1684
      %v1686 = vsub.s32 0, %v1685
      %v1687 = vsel %vm1677, %v1686, %v1685
      %vm1688 = vcmp.lt.s32.totalorder %v1599, 0
      %v1689 = vsub.s32 0, %v1599
      %v1690 = vsel %vm1688, %v1689, %v1599
      %v1691 = vmul.u32.u64.compose %v1690, 3817748708
      %v1692 = vextract.low.u32 %v1691
      %v1693 = vextract.high.u32 %v1691
      %v1694 = vshrl.u32 %v1693, 3
      %v1695 = vmul.u32 %v1694, 9
      %v1696 = vsub.s32 %v1690, %v1695
      %v1697 = vsub.s32 0, %v1696
      %v1698 = vsel %vm1688, %v1697, %v1696
      %vm1699 = vcmp.ne.s32.totalorder %v1610, 0
      %vm1700 = vcmp.ne.s32.totalorder %v1621, 0
      %vm1701 = vcmp.ne.s32.totalorder %v1632, 0
      %vm1702 = vcmp.ne.s32.totalorder %v1643, 0
      %vm1703 = vcmp.ne.s32.totalorder %v1654, 0
      %vm1704 = vcmp.ne.s32.totalorder %v1665, 0
      %vm1705 = vcmp.ne.s32.totalorder %v1676, 0
      %vm1706 = vcmp.ne.s32.totalorder %v1687, 0
      %vm1707 = vcmp.ne.s32.totalorder %v1698, 0
      %vm1708 = vcmp.lt.s32.totalorder %v1610, 0
      %vm1709 = vcmp.lt.s32.totalorder %v1621, 0
      %vm1710 = vcmp.lt.s32.totalorder %v1632, 0
      %vm1711 = vcmp.lt.s32.totalorder %v1643, 0
      %vm1712 = vcmp.lt.s32.totalorder %v1654, 0
      %vm1713 = vcmp.lt.s32.totalorder %v1665, 0
      %vm1714 = vcmp.lt.s32.totalorder %v1676, 0
      %vm1715 = vcmp.lt.s32.totalorder %v1687, 0
      %vm1716 = vcmp.lt.s32.totalorder %v1698, 0
      %vm1717 = vmand %vm1708, %vm1699
      %vm1718 = vmand %vm1709, %vm1700
      %vm1719 = vmand %vm1710, %vm1701
      %vm1720 = vmand %vm1711, %vm1702
      %vm1721 = vmand %vm1712, %vm1703
      %vm1722 = vmand %vm1713, %vm1704
      %vm1723 = vmand %vm1714, %vm1705
      %vm1724 = vmand %vm1715, %vm1706
      %vm1725 = vmand %vm1716, %vm1707
      %v1726 = vadd.s32 %v1610, 9
      %v1727 = vadd.s32 %v1621, 9
      %v1728 = vadd.s32 %v1632, 9
      %v1729 = vadd.s32 %v1643, 9
      %v1730 = vadd.s32 %v1654, 9
      %v1731 = vadd.s32 %v1665, 9
      %v1732 = vadd.s32 %v1676, 9
      %v1733 = vadd.s32 %v1687, 9
      %v1734 = vadd.s32 %v1698, 9
      %v1735 = vsel %vm1717, %v1726, %v1610
      %v1736 = vsel %vm1718, %v1727, %v1621
      %v1737 = vsel %vm1719, %v1728, %v1632
      %v1738 = vsel %vm1720, %v1729, %v1643
      %v1739 = vsel %vm1721, %v1730, %v1654
      %v1740 = vsel %vm1722, %v1731, %v1665
      %v1741 = vsel %vm1723, %v1732, %v1676
      %v1742 = vsel %vm1724, %v1733, %v1687
      %v1743 = vsel %vm1725, %v1734, %v1698
      %vm1744 = vcmp.lt.s32.totalorder %v1735, 8
      %vm1745 = vcmp.lt.s32.totalorder %v1736, 8
      %vm1746 = vcmp.lt.s32.totalorder %v1737, 8
      %vm1747 = vcmp.lt.s32.totalorder %v1738, 8
      %vm1748 = vcmp.lt.s32.totalorder %v1739, 8
      %vm1749 = vcmp.lt.s32.totalorder %v1740, 8
      %vm1750 = vcmp.lt.s32.totalorder %v1741, 8
      %vm1751 = vcmp.lt.s32.totalorder %v1742, 8
      %vm1752 = vcmp.lt.s32.totalorder %v1743, 8
      %v1753 = vsel %vm1744, 1, 0
      %v1754 = vsel %vm1745, 1, 0
      %v1755 = vsel %vm1746, 1, 0
      %v1756 = vsel %vm1747, 1, 0
      %v1757 = vsel %vm1748, 1, 0
      %v1758 = vsel %vm1749, 1, 0
      %v1759 = vsel %vm1750, 1, 0
      %v1760 = vsel %vm1751, 1, 0
      %v1761 = vsel %vm1752, 1, 0
      %v1762 = vcvt.s32.f32 %v1753
      %v1763 = vcvt.s32.f32 %v1754
      %v1764 = vcvt.s32.f32 %v1755
      %v1765 = vcvt.s32.f32 %v1756
      %v1766 = vcvt.s32.f32 %v1757
      %v1767 = vcvt.s32.f32 %v1758
      %v1768 = vcvt.s32.f32 %v1759
      %v1769 = vcvt.s32.f32 %v1760
      %v1770 = vcvt.s32.f32 %v1761
      %v1771 = vmul.f32 %v1581, %v1762
      %v1772 = vmul.f32 %v1582, %v1763
      %v1773 = vmul.f32 %v1583, %v1764
      %v1774 = vmul.f32 %v1584, %v1765
      %v1775 = vmul.f32 %v1585, %v1766
      %v1776 = vmul.f32 %v1586, %v1767
      %v1777 = vmul.f32 %v1587, %v1768
      %v1778 = vmul.f32 %v1588, %v1769
      %v1779 = vmul.f32 %v1589, %v1770
      %v1780 = vsel %vm183, %v1771, 0.0
      %v1781 = vsel %vm183, %v1772, 0.0
      %v1782 = vadd.f32 %v1780, %v1781
      %v1783 = vsel %vm183, %v1773, 0.0
      %v1784 = vadd.f32 %v1782, %v1783
      %v1785 = vsel %vm183, %v1774, 0.0
      %v1786 = vadd.f32 %v1784, %v1785
      %v1787 = vsel %vm183, %v1775, 0.0
      %v1788 = vadd.f32 %v1786, %v1787
      %v1789 = vsel %vm183, %v1776, 0.0
      %v1790 = vadd.f32 %v1788, %v1789
      %v1791 = vsel %vm183, %v1777, 0.0
      %v1792 = vadd.f32 %v1790, %v1791
      %v1793 = vsel %vm183, %v1778, 0.0
      %v1794 = vadd.f32 %v1792, %v1793
      %v1795 = vsel %vm183, %v1779, 0.0
      %v1796 = vadd.f32 %v1794, %v1795
      %v1797 = vrot.slane %v1796, 4
      %v1798 = vadd.f32 %v1796, %v1797
      %v1799 = vrot.slane %v1798, 2
      %v1800 = vadd.f32 %v1798, %v1799
      %v1801 = vrot.slane %v1800, 1
      %v1802 = vadd.f32 %v1800, %v1801
      %v1803 = vmul.f32 %v1771, %v1581
      %v1804 = vmul.f32 %v1772, %v1582
      %v1805 = vmul.f32 %v1773, %v1583
      %v1806 = vmul.f32 %v1774, %v1584
      %v1807 = vmul.f32 %v1775, %v1585
      %v1808 = vmul.f32 %v1776, %v1586
      %v1809 = vmul.f32 %v1777, %v1587
      %v1810 = vmul.f32 %v1778, %v1588
      %v1811 = vmul.f32 %v1779, %v1589
      %v1812 = vsel %vm183, %v1803, 0.0
      %v1813 = vsel %vm183, %v1804, 0.0
      %v1814 = vadd.f32 %v1812, %v1813
      %v1815 = vsel %vm183, %v1805, 0.0
      %v1816 = vadd.f32 %v1814, %v1815
      %v1817 = vsel %vm183, %v1806, 0.0
      %v1818 = vadd.f32 %v1816, %v1817
      %v1819 = vsel %vm183, %v1807, 0.0
      %v1820 = vadd.f32 %v1818, %v1819
      %v1821 = vsel %vm183, %v1808, 0.0
      %v1822 = vadd.f32 %v1820, %v1821
      %v1823 = vsel %vm183, %v1809, 0.0
      %v1824 = vadd.f32 %v1822, %v1823
      %v1825 = vsel %vm183, %v1810, 0.0
      %v1826 = vadd.f32 %v1824, %v1825
      %v1827 = vsel %vm183, %v1811, 0.0
      %v1828 = vadd.f32 %v1826, %v1827
      %v1829 = vrot.slane %v1828, 4
      %v1830 = vadd.f32 %v1828, %v1829
      %v1831 = vrot.slane %v1830, 2
      %v1832 = vadd.f32 %v1830, %v1831
      %v1833 = vrot.slane %v1832, 1
      %v1834 = vadd.f32 %v1832, %v1833
      %vm1835 = vcmask 1040384
      %v1836 = vsel %vm1835, %v1802, %v1834
      %vm1837 = vcmask 58368
      %1838 = vst.msk [vmem:[%s181] sm:$0x3] %vm1837, %v1836
      %v1839 = vld [vmem:[#allocation2] sm:$0xff]
      %v1840 = vpack.c.bf16 %v1839, %v1839
      %vm1841 = vcmask 60416
      %1842 = vst.msk [vmem:[%s177] sm:$0xf] %vm1841, %v1840
      %v1843 = vld [vmem:[#allocation2 + $0x9] sm:$0xff]
      %v1844 = vpack.c.bf16 %v1843, %v1843
      %s1845 = scalar_lea.vmem %s177, 4
      %1846 = vst.msk [vmem:[%s1845] sm:$0xf] %vm1841, %v1844
      %v1847 = vld [vmem:[#allocation2 + $0x12] sm:$0xff]
      %v1848 = vpack.c.bf16 %v1847, %v1847
      %s1849 = scalar_lea.vmem %s177, 8
      %1850 = vst.msk [vmem:[%s1849] sm:$0xf] %vm1841, %v1848
      %v1851 = vld [vmem:[#allocation2 + $0x1b] sm:$0xff]
      %v1852 = vpack.c.bf16 %v1851, %v1851
      %s1853 = scalar_lea.vmem %s177, 12
      %1854 = vst.msk [vmem:[%s1853] sm:$0xf] %vm1841, %v1852
      %v1855 = vld [vmem:[#allocation2 + $0x24] sm:$0xff]
      %v1856 = vpack.c.bf16 %v1855, %v1855
      %s1857 = scalar_lea.vmem %s177, 16
      %1858 = vst.msk [vmem:[%s1857] sm:$0xf] %vm1841, %v1856
      %v1859 = vld [vmem:[#allocation2 + $0x2d] sm:$0xff]
      %v1860 = vpack.c.bf16 %v1859, %v1859
      %s1861 = scalar_lea.vmem %s177, 20
      %1862 = vst.msk [vmem:[%s1861] sm:$0xf] %vm1841, %v1860
      %v1863 = vld [vmem:[#allocation2 + $0x36] sm:$0xff]
      %v1864 = vpack.c.bf16 %v1863, %v1863
      %s1865 = scalar_lea.vmem %s177, 24
      %1866 = vst.msk [vmem:[%s1865] sm:$0xf] %vm1841, %v1864
      %v1867 = vld [vmem:[#allocation2 + $0x3f] sm:$0xff]
      %v1868 = vpack.c.bf16 %v1867, %v1867
      %s1869 = scalar_lea.vmem %s177, 28
      %1870 = vst.msk [vmem:[%s1869] sm:$0xf] %vm1841, %v1868
      %p1871 = scmp.lt.s32.totalorder %s15, 1
      %s1872 = scalar_select %p1871, %s15, 1
      %s1873 = smul.addr %s1872, 8
      %s1874 = smul.addr %s1873, 4
      %s1875 = scalar_lea.vmem %s2, %s1874
      %p1876 = scmp.lt.s32.totalorder %s15, 1
      %s1877 = scalar_select %p1876, %s15, 1
      %s1878 = smul.addr %s1877, 2
      %s1879 = scalar_lea.vmem %s3, %s1878
      // Predicated region
      $region29: #{bottleneck_forward.5} parent=27 // pred_check
        %p1880 = pneg %p80
      $region30: #{bottleneck_forward.5} parent=27 // pred_check_branch
        %1882 = sbr.rel (%p1880) target = $region32
      $region31: #{bottleneck_forward.5} parent=27 // pred_region
        _
      $region32: #{bottleneck_forward.5} parent=27 // pred_fallthru
        _
      // Predicated region
      $region33: #{bottleneck_forward.5} parent=27 // pred_check
        %p1883 = pneg %p106
      $region34: #{bottleneck_forward.5} parent=27 // pred_check_branch
        %1885 = sbr.rel (%p1883) target = $region36
      $region35: #{bottleneck_forward.5} parent=27 // pred_region
        _
      $region36: #{bottleneck_forward.5} parent=27 // pred_fallthru
        _
    $region28: #{bottleneck_forward.5} parent=5 // pred_fallthru
      _
    %p1886 = scmp.le.s32.totalorder 2, %s10
    // Predicated region
    $region37: #{bottleneck_forward.5} parent=5 // pred_check
      %p1887 = pneg %p1886
    $region38: #{bottleneck_forward.5} parent=5 // pred_check_branch
      %1889 = sbr.rel (%p1887) target = $region40
    $region39: #{bottleneck_forward.5} parent=5 // pred_region
      %s1890 = ssub.s32 %s10, 2
      // Predicated region
      $region41: #{bottleneck_forward.5} parent=39 // pred_check
        %p1891 = pneg %p86
      $region42: #{bottleneck_forward.5} parent=39 // pred_check_branch
        %1893 = sbr.rel (%p1891) target = $region44
      $region43: #{bottleneck_forward.5} parent=39 // pred_region
        %p1894 = scmp.lt.s32.totalorder %s16, 1
        %s1895 = scalar_select %p1894, %s16, 1
        %s1896 = smul.addr %s1895, 8
        %s1897 = smul.addr %s1896, 4
        %s1898 = scalar_lea.vmem %s2, %s1897
      $region44: #{bottleneck_forward.5} parent=39 // pred_fallthru
        _
      // Predicated region
      $region45: #{bottleneck_forward.5} parent=39 // pred_check
        %p1899 = pneg %p112
      $region46: #{bottleneck_forward.5} parent=39 // pred_check_branch
        %1901 = sbr.rel (%p1899) target = $region48
      $region47: #{bottleneck_forward.5} parent=39 // pred_region
        %p1902 = scmp.lt.s32.totalorder %s16, 1
        %s1903 = scalar_select %p1902, %s16, 1
        %s1904 = smul.addr %s1903, 2
        %s1905 = scalar_lea.vmem %s3, %s1904
      $region48: #{bottleneck_forward.5} parent=39 // pred_fallthru
        _
    $region40: #{bottleneck_forward.5} parent=5 // pred_fallthru
      _
  $region6: #{bottleneck_forward.5} parent=0 // loop_footer
    %s14 = sadd.s32 1, %s10
  $region7: #{bottleneck_forward.5} parent=0 // loop_footer_branch
    %9 = sbr.rel target = $region3
  $region8: #{bottleneck_forward.5} parent=0 // loop_exit
    _

// kernel: bottleneck_forward.7
$region0: #{bottleneck_forward.7}
  #allocation0 [shape = 'u32[]', space=smem, size = 0x4, offset = 0x4, fixed_abs, tag = 'smem constant byte address 0x4 - core index']
  #allocation1 [shape = 'u32[144,128]{1,0:T(1,128)}', space=vmem, size = 0x12000, scoped, tag = 'internal scratch']
  %s0 = inlined_call_operand.vmem [shape: bf16[128,32], index: 0, kind: input, shape index: {}]
  %s1 = inlined_call_operand.vmem [shape: bf16[128,32], index: 1, kind: input, shape index: {}]
  %s2 = inlined_call_operand.vmem [shape: f32[1,32], index: 2, kind: input, shape index: {}]
  %s3 = inlined_call_operand.vmem [shape: f32[1,32], index: 3, kind: input, shape index: {}]
  %s4 = inlined_call_operand.vmem [shape: f32[1,32], index: 4, kind: input, shape index: {}]
  %s5 = inlined_call_operand.vmem [shape: f32[1,32], index: 5, kind: input, shape index: {}]
  %s6 = inlined_call_operand.hbm [shape: bf16[128,32], index: 6, kind: output, shape index: {}]
  %s7 = sld [smem:[#allocation0]]
  $region34: #{bottleneck_forward.7} parent=0
    _
  %s9 = ssub.s32 1, %s7
  %s10 = scalar_select 0, %s9, %s7
  $region1: #{bottleneck_forward.7} parent=0
    #allocation2 [shape = 'u8[32768]{0}', space=vmem, size = 0x8000, scoped, tag = 'output window, operand 0, single buffered']
    #allocation3 [shape = 's32[1]{0}', space=sflag, size = 0x4, scoped, tag = 'scoped memory for bottleneck_forward.7']
    %11 = vsyncpa [#allocation3], 0
    // Predicated region
    $region2: #{bottleneck_forward.7} parent=1 // pred_check
      _
    $region3: #{bottleneck_forward.7} parent=1 // pred_check_branch
      %13 = sbr.rel (0) target = $region5
    $region4: #{bottleneck_forward.7} parent=1 // pred_region
      _
    $region5: #{bottleneck_forward.7} parent=1 // pred_fallthru
      _
    // Predicated region
    $region6: #{bottleneck_forward.7} parent=1 // pred_check
      _
    $region7: #{bottleneck_forward.7} parent=1 // pred_check_branch
      %15 = sbr.rel (0) target = $region9
    $region8: #{bottleneck_forward.7} parent=1 // pred_region
      _
    $region9: #{bottleneck_forward.7} parent=1 // pred_fallthru
      _
    // Predicated region
    $region10: #{bottleneck_forward.7} parent=1 // pred_check
      _
    $region11: #{bottleneck_forward.7} parent=1 // pred_check_branch
      %17 = sbr.rel (0) target = $region13
    $region12: #{bottleneck_forward.7} parent=1 // pred_region
      _
    $region13: #{bottleneck_forward.7} parent=1 // pred_fallthru
      _
    // Predicated region
    $region14: #{bottleneck_forward.7} parent=1 // pred_check
      _
    $region15: #{bottleneck_forward.7} parent=1 // pred_check_branch
      %19 = sbr.rel (0) target = $region17
    $region16: #{bottleneck_forward.7} parent=1 // pred_region
      _
    $region17: #{bottleneck_forward.7} parent=1 // pred_fallthru
      _
    // Predicated region
    $region18: #{bottleneck_forward.7} parent=1 // pred_check
      _
    $region19: #{bottleneck_forward.7} parent=1 // pred_check_branch
      %21 = sbr.rel (0) target = $region21
    $region20: #{bottleneck_forward.7} parent=1 // pred_region
      _
    $region21: #{bottleneck_forward.7} parent=1 // pred_fallthru
      _
    // Predicated region
    $region22: #{bottleneck_forward.7} parent=1 // pred_check
      _
    $region23: #{bottleneck_forward.7} parent=1 // pred_check_branch
      %23 = sbr.rel (0) target = $region25
    $region24: #{bottleneck_forward.7} parent=1 // pred_region
      _
    $region25: #{bottleneck_forward.7} parent=1 // pred_fallthru
      _
    %v24 = vld [vmem:[%s0] sm:$0xf]
    %v25 = vld [vmem:[%s0 + $0x4] sm:$0xf]
    %v26 = vld [vmem:[%s0 + $0x8] sm:$0xf]
    %v27 = vld [vmem:[%s0 + $0xc] sm:$0xf]
    %v28 = vld [vmem:[%s0 + $0x10] sm:$0xf]
    %v29 = vld [vmem:[%s0 + $0x14] sm:$0xf]
    %v30 = vld [vmem:[%s0 + $0x18] sm:$0xf]
    %v31 = vld [vmem:[%s0 + $0x1c] sm:$0xf]
    %v32 = vld [vmem:[%s0 + $0x20] sm:$0xf]
    %v33 = vld [vmem:[%s0 + $0x24] sm:$0xf]
    %v34 = vld [vmem:[%s0 + $0x28] sm:$0xf]
    %v35 = vld [vmem:[%s0 + $0x2c] sm:$0xf]
    %v36 = vld [vmem:[%s0 + $0x30] sm:$0xf]
    %v37 = vld [vmem:[%s0 + $0x34] sm:$0xf]
    %v38 = vld [vmem:[%s0 + $0x38] sm:$0xf]
    %v39 = vld [vmem:[%s0 + $0x3c] sm:$0xf]
    %v40 = vunpack.c.l.bf16 %v24
    %v41 = vunpack.c.l.bf16 %v25
    %v42 = vunpack.c.l.bf16 %v26
    %v43 = vunpack.c.l.bf16 %v27
    %v44 = vunpack.c.l.bf16 %v28
    %v45 = vunpack.c.l.bf16 %v29
    %v46 = vunpack.c.l.bf16 %v30
    %v47 = vunpack.c.l.bf16 %v31
    %v48 = vunpack.c.l.bf16 %v32
    %v49 = vunpack.c.l.bf16 %v33
    %v50 = vunpack.c.l.bf16 %v34
    %v51 = vunpack.c.l.bf16 %v35
    %v52 = vunpack.c.l.bf16 %v36
    %v53 = vunpack.c.l.bf16 %v37
    %v54 = vunpack.c.l.bf16 %v38
    %v55 = vunpack.c.l.bf16 %v39
    %v56 = vld [vmem:[%s1] sm:$0xf]
    %v57 = vld [vmem:[%s1 + $0x4] sm:$0xf]
    %v58 = vld [vmem:[%s1 + $0x8] sm:$0xf]
    %v59 = vld [vmem:[%s1 + $0xc] sm:$0xf]
    %v60 = vld [vmem:[%s1 + $0x10] sm:$0xf]
    %v61 = vld [vmem:[%s1 + $0x14] sm:$0xf]
    %v62 = vld [vmem:[%s1 + $0x18] sm:$0xf]
    %v63 = vld [vmem:[%s1 + $0x1c] sm:$0xf]
    %v64 = vld [vmem:[%s1 + $0x20] sm:$0xf]
    %v65 = vld [vmem:[%s1 + $0x24] sm:$0xf]
    %v66 = vld [vmem:[%s1 + $0x28] sm:$0xf]
    %v67 = vld [vmem:[%s1 + $0x2c] sm:$0xf]
    %v68 = vld [vmem:[%s1 + $0x30] sm:$0xf]
    %v69 = vld [vmem:[%s1 + $0x34] sm:$0xf]
    %v70 = vld [vmem:[%s1 + $0x38] sm:$0xf]
    %v71 = vld [vmem:[%s1 + $0x3c] sm:$0xf]
    %v72 = vunpack.c.l.bf16 %v56
    %v73 = vunpack.c.l.bf16 %v57
    %v74 = vunpack.c.l.bf16 %v58
    %v75 = vunpack.c.l.bf16 %v59
    %v76 = vunpack.c.l.bf16 %v60
    %v77 = vunpack.c.l.bf16 %v61
    %v78 = vunpack.c.l.bf16 %v62
    %v79 = vunpack.c.l.bf16 %v63
    %v80 = vunpack.c.l.bf16 %v64
    %v81 = vunpack.c.l.bf16 %v65
    %v82 = vunpack.c.l.bf16 %v66
    %v83 = vunpack.c.l.bf16 %v67
    %v84 = vunpack.c.l.bf16 %v68
    %v85 = vunpack.c.l.bf16 %v69
    %v86 = vunpack.c.l.bf16 %v70
    %v87 = vunpack.c.l.bf16 %v71
    %v88 = vld [vmem:[%s2] sm:$0x1]
    %v90 = vlaneseq
    %v91 = vshrl.u32 %v90, 7
    %v92 = vsub.s32 0, %v91
    %v93 = vrot.slane %v88, %v92
    %v95 = vmul.f32 %v40, %v93
    %v96 = vmul.f32 %v41, %v93
    %v97 = vmul.f32 %v42, %v93
    %v98 = vmul.f32 %v43, %v93
    %v99 = vmul.f32 %v44, %v93
    %v100 = vmul.f32 %v45, %v93
    %v101 = vmul.f32 %v46, %v93
    %v102 = vmul.f32 %v47, %v93
    %v103 = vmul.f32 %v48, %v93
    %v104 = vmul.f32 %v49, %v93
    %v105 = vmul.f32 %v50, %v93
    %v106 = vmul.f32 %v51, %v93
    %v107 = vmul.f32 %v52, %v93
    %v108 = vmul.f32 %v53, %v93
    %v109 = vmul.f32 %v54, %v93
    %v110 = vmul.f32 %v55, %v93
    %v111 = vld [vmem:[%s3] sm:$0x1]
    %v113 = vlaneseq
    %v114 = vshrl.u32 %v113, 7
    %v115 = vsub.s32 0, %v114
    %v116 = vrot.slane %v111, %v115
    %v118 = vadd.f32 %v95, %v116
    %v119 = vadd.f32 %v96, %v116
    %v120 = vadd.f32 %v97, %v116
    %v121 = vadd.f32 %v98, %v116
    %v122 = vadd.f32 %v99, %v116
    %v123 = vadd.f32 %v100, %v116
    %v124 = vadd.f32 %v101, %v116
    %v125 = vadd.f32 %v102, %v116
    %v126 = vadd.f32 %v103, %v116
    %v127 = vadd.f32 %v104, %v116
    %v128 = vadd.f32 %v105, %v116
    %v129 = vadd.f32 %v106, %v116
    %v130 = vadd.f32 %v107, %v116
    %v131 = vadd.f32 %v108, %v116
    %v132 = vadd.f32 %v109, %v116
    %v133 = vadd.f32 %v110, %v116
    %v134 = vld [vmem:[%s4] sm:$0x1]
    %v136 = vlaneseq
    %v137 = vshrl.u32 %v136, 7
    %v138 = vsub.s32 0, %v137
    %v139 = vrot.slane %v134, %v138
    %v141 = vmul.f32 %v72, %v139
    %v142 = vmul.f32 %v73, %v139
    %v143 = vmul.f32 %v74, %v139
    %v144 = vmul.f32 %v75, %v139
    %v145 = vmul.f32 %v76, %v139
    %v146 = vmul.f32 %v77, %v139
    %v147 = vmul.f32 %v78, %v139
    %v148 = vmul.f32 %v79, %v139
    %v149 = vmul.f32 %v80, %v139
    %v150 = vmul.f32 %v81, %v139
    %v151 = vmul.f32 %v82, %v139
    %v152 = vmul.f32 %v83, %v139
    %v153 = vmul.f32 %v84, %v139
    %v154 = vmul.f32 %v85, %v139
    %v155 = vmul.f32 %v86, %v139
    %v156 = vmul.f32 %v87, %v139
    %v157 = vadd.f32 %v118, %v141
    %v158 = vadd.f32 %v119, %v142
    %v159 = vadd.f32 %v120, %v143
    %v160 = vadd.f32 %v121, %v144
    %v161 = vadd.f32 %v122, %v145
    %v162 = vadd.f32 %v123, %v146
    %v163 = vadd.f32 %v124, %v147
    %v164 = vadd.f32 %v125, %v148
    %v165 = vadd.f32 %v126, %v149
    %v166 = vadd.f32 %v127, %v150
    %v167 = vadd.f32 %v128, %v151
    %v168 = vadd.f32 %v129, %v152
    %v169 = vadd.f32 %v130, %v153
    %v170 = vadd.f32 %v131, %v154
    %v171 = vadd.f32 %v132, %v155
    %v172 = vadd.f32 %v133, %v156
    %v173 = vld [vmem:[%s5] sm:$0x1]
    %v175 = vlaneseq
    %v176 = vshrl.u32 %v175, 7
    %v177 = vsub.s32 0, %v176
    %v178 = vrot.slane %v173, %v177
    %v180 = vadd.f32 %v157, %v178
    %v181 = vadd.f32 %v158, %v178
    %v182 = vadd.f32 %v159, %v178
    %v183 = vadd.f32 %v160, %v178
    %v184 = vadd.f32 %v161, %v178
    %v185 = vadd.f32 %v162, %v178
    %v186 = vadd.f32 %v163, %v178
    %v187 = vadd.f32 %v164, %v178
    %v188 = vadd.f32 %v165, %v178
    %v189 = vadd.f32 %v166, %v178
    %v190 = vadd.f32 %v167, %v178
    %v191 = vadd.f32 %v168, %v178
    %v192 = vadd.f32 %v169, %v178
    %v193 = vadd.f32 %v170, %v178
    %v194 = vadd.f32 %v171, %v178
    %v195 = vadd.f32 %v172, %v178
    %v196 = vmax.f32 %v180, 0.0
    %v197 = vmax.f32 %v181, 0.0
    %v198 = vmax.f32 %v182, 0.0
    %v199 = vmax.f32 %v183, 0.0
    %v200 = vmax.f32 %v184, 0.0
    %v201 = vmax.f32 %v185, 0.0
    %v202 = vmax.f32 %v186, 0.0
    %v203 = vmax.f32 %v187, 0.0
    %v204 = vmax.f32 %v188, 0.0
    %v205 = vmax.f32 %v189, 0.0
    %v206 = vmax.f32 %v190, 0.0
    %v207 = vmax.f32 %v191, 0.0
    %v208 = vmax.f32 %v192, 0.0
    %v209 = vmax.f32 %v193, 0.0
    %v210 = vmax.f32 %v194, 0.0
    %v211 = vmax.f32 %v195, 0.0
    %v212 = vpack.c.bf16 %v197, %v196
    %v213 = vpack.c.bf16 %v199, %v198
    %v214 = vpack.c.bf16 %v201, %v200
    %v215 = vpack.c.bf16 %v203, %v202
    %v216 = vpack.c.bf16 %v205, %v204
    %v217 = vpack.c.bf16 %v207, %v206
    %v218 = vpack.c.bf16 %v209, %v208
    %v219 = vpack.c.bf16 %v211, %v210
    %v228 = vunpack.c.l.b16 %v212
    %v229 = vunpack.c.h.b16 %v212
    %v230 = vunpack.c.l.b16 %v213
    %v231 = vunpack.c.h.b16 %v213
    %v232 = vunpack.c.l.b16 %v214
    %v233 = vunpack.c.h.b16 %v214
    %v234 = vunpack.c.l.b16 %v215
    %v235 = vunpack.c.h.b16 %v215
    %v236 = vunpack.c.l.b16 %v216
    %v237 = vunpack.c.h.b16 %v216
    %v238 = vunpack.c.l.b16 %v217
    %v239 = vunpack.c.h.b16 %v217
    %v240 = vunpack.c.l.b16 %v218
    %v241 = vunpack.c.h.b16 %v218
    %v242 = vunpack.c.l.b16 %v219
    %v243 = vunpack.c.h.b16 %v219
    %v244 = vpack.c.b16 %v228, %v228
    %v245 = vpack.c.b16 %v229, %v229
    %v246 = vpack.c.b16 %v230, %v230
    %v247 = vpack.c.b16 %v231, %v231
    %v248 = vpack.c.b16 %v232, %v232
    %v249 = vpack.c.b16 %v233, %v233
    %v250 = vpack.c.b16 %v234, %v234
    %v251 = vpack.c.b16 %v235, %v235
    %v252 = vpack.c.b16 %v236, %v236
    %v253 = vpack.c.b16 %v237, %v237
    %v254 = vpack.c.b16 %v238, %v238
    %v255 = vpack.c.b16 %v239, %v239
    %v256 = vpack.c.b16 %v240, %v240
    %v257 = vpack.c.b16 %v241, %v241
    %v258 = vpack.c.b16 %v242, %v242
    %v259 = vpack.c.b16 %v243, %v243
    %vm276 = vcmask 257024
    %277 = vst.msk [vmem:[#allocation2] sm:$0xf] %vm276, %v244
    %278 = vst.msk [vmem:[#allocation2 + $0x4] sm:$0xf] %vm276, %v245
    %279 = vst.msk [vmem:[#allocation2 + $0x8] sm:$0xf] %vm276, %v246
    %280 = vst.msk [vmem:[#allocation2 + $0xc] sm:$0xf] %vm276, %v247
    %281 = vst.msk [vmem:[#allocation2 + $0x10] sm:$0xf] %vm276, %v248
    %282 = vst.msk [vmem:[#allocation2 + $0x14] sm:$0xf] %vm276, %v249
    %283 = vst.msk [vmem:[#allocation2 + $0x18] sm:$0xf] %vm276, %v250
    %284 = vst.msk [vmem:[#allocation2 + $0x1c] sm:$0xf] %vm276, %v251
    %285 = vst.msk [vmem:[#allocation2 + $0x20] sm:$0xf] %vm276, %v252
    %286 = vst.msk [vmem:[#allocation2 + $0x24] sm:$0xf] %vm276, %v253
    %287 = vst.msk [vmem:[#allocation2 + $0x28] sm:$0xf] %vm276, %v254
    %288 = vst.msk [vmem:[#allocation2 + $0x2c] sm:$0xf] %vm276, %v255
    %289 = vst.msk [vmem:[#allocation2 + $0x30] sm:$0xf] %vm276, %v256
    %290 = vst.msk [vmem:[#allocation2 + $0x34] sm:$0xf] %vm276, %v257
    %291 = vst.msk [vmem:[#allocation2 + $0x38] sm:$0xf] %vm276, %v258
    %292 = vst.msk [vmem:[#allocation2 + $0x3c] sm:$0xf] %vm276, %v259
    // Predicated region
    $region26: #{bottleneck_forward.7} parent=1 // pred_check
      _
    $region27: #{bottleneck_forward.7} parent=1 // pred_check_branch
      %294 = sbr.rel (0) target = $region29
    $region28: #{bottleneck_forward.7} parent=1 // pred_region
      %s296 = ssub.s32 1024, 1024
      %297 = vsyncadd [#allocation3], %s296
      %s298 = sshll.u32 [#allocation2], 4
      %s299 = int_to_ptr.vmem [resolvable:$true] %s298
      %304 = dma.vmem_to_hbm [thread:$0]  %s299, 1024, %s6, [#allocation3], 64, 64, 4
    $region29: #{bottleneck_forward.7} parent=1 // pred_fallthru
      _
    // Predicated region
    $region30: #{bottleneck_forward.7} parent=1 // pred_check
      _
    $region31: #{bottleneck_forward.7} parent=1 // pred_check_branch
      %306 = sbr.rel (0) target = $region33
    $region32: #{bottleneck_forward.7} parent=1 // pred_region
      %307 = dma.done [#allocation3], 1024
    $region33: #{bottleneck_forward.7} parent=1 // pred_fallthru
      _
    %308 = vsyncpa [#allocation3], 1

// kernel: bottleneck_forward.6
$region0: #{bottleneck_forward.6}
  #allocation0 [shape = 'u32[]', space=smem, size = 0x4, offset = 0x4, fixed_abs, tag = 'smem constant byte address 0x4 - core index']
  #allocation1 [shape = 'u32[144,128]{1,0:T(1,128)}', space=vmem, size = 0x12000, scoped, tag = 'internal scratch']
  %s0 = inlined_call_operand.vmem [shape: bf16[128,8], index: 0, kind: input, shape index: {}]
  %s1 = inlined_call_operand.vmem [shape: bf16[128,16], index: 1, kind: input, shape index: {}]
  %s2 = inlined_call_operand.vmem [shape: f32[1,8], index: 2, kind: input, shape index: {}]
  %s3 = inlined_call_operand.vmem [shape: f32[1,8], index: 3, kind: input, shape index: {}]
  %s4 = inlined_call_operand.vmem [shape: bf16[8,32], index: 4, kind: input, shape index: {}]
  %s5 = inlined_call_operand.vmem [shape: bf16[16,32], index: 5, kind: input, shape index: {}]
  %s6 = inlined_call_operand.vmem [shape: bf16[128,32], index: 6, kind: output, shape index: {0}]
  %s7 = inlined_call_operand.vmem [shape: bf16[128,32], index: 7, kind: output, shape index: {1}]
  %s8 = inlined_call_operand.vmem [shape: f32[1,4,32], index: 8, kind: output, shape index: {2}]
  %9 = xla_tuple %s6, %s7, %s8
  %s10 = sld [smem:[#allocation0]]
  $region50: #{bottleneck_forward.6} parent=0
    _
  %s12 = ssub.s32 1, %s10
  %s13 = scalar_select 0, %s12, %s10
  // Predicated region
  $region2: #{bottleneck_forward.6} parent=0 // pred_check
    _
  $region3: #{bottleneck_forward.6} parent=0 // pred_check_branch
    %15 = sbr.rel (0) target = $region5
  $region4: #{bottleneck_forward.6} parent=0 // pred_region
    _
  $region5: #{bottleneck_forward.6} parent=0 // pred_fallthru
    _
  // Predicated region
  $region6: #{bottleneck_forward.6} parent=0 // pred_check
    _
  $region7: #{bottleneck_forward.6} parent=0 // pred_check_branch
    %17 = sbr.rel (0) target = $region9
  $region8: #{bottleneck_forward.6} parent=0 // pred_region
    _
  $region9: #{bottleneck_forward.6} parent=0 // pred_fallthru
    _
  // Predicated region
  $region10: #{bottleneck_forward.6} parent=0 // pred_check
    _
  $region11: #{bottleneck_forward.6} parent=0 // pred_check_branch
    %19 = sbr.rel (0) target = $region13
  $region12: #{bottleneck_forward.6} parent=0 // pred_region
    _
  $region13: #{bottleneck_forward.6} parent=0 // pred_fallthru
    _
  // Predicated region
  $region14: #{bottleneck_forward.6} parent=0 // pred_check
    _
  $region15: #{bottleneck_forward.6} parent=0 // pred_check_branch
    %21 = sbr.rel (0) target = $region17
  $region16: #{bottleneck_forward.6} parent=0 // pred_region
    _
  $region17: #{bottleneck_forward.6} parent=0 // pred_fallthru
    _
  // Predicated region
  $region18: #{bottleneck_forward.6} parent=0 // pred_check
    _
  $region19: #{bottleneck_forward.6} parent=0 // pred_check_branch
    %23 = sbr.rel (0) target = $region21
  $region20: #{bottleneck_forward.6} parent=0 // pred_region
    _
  $region21: #{bottleneck_forward.6} parent=0 // pred_fallthru
    _
  // Predicated region
  $region22: #{bottleneck_forward.6} parent=0 // pred_check
    _
  $region23: #{bottleneck_forward.6} parent=0 // pred_check_branch
    %25 = sbr.rel (0) target = $region25
  $region24: #{bottleneck_forward.6} parent=0 // pred_region
    _
  $region25: #{bottleneck_forward.6} parent=0 // pred_fallthru
    _
  %v27 = vld [vmem:[%s0] sm:$0xf]
  %v28 = vld [vmem:[%s0 + $0x4] sm:$0xf]
  %v29 = vld [vmem:[%s0 + $0x8] sm:$0xf]
  %v30 = vld [vmem:[%s0 + $0xc] sm:$0xf]
  %v31 = vld [vmem:[%s0 + $0x10] sm:$0xf]
  %v32 = vld [vmem:[%s0 + $0x14] sm:$0xf]
  %v33 = vld [vmem:[%s0 + $0x18] sm:$0xf]
  %v34 = vld [vmem:[%s0 + $0x1c] sm:$0xf]
  %v35 = vld [vmem:[%s0 + $0x20] sm:$0xf]
  %v36 = vld [vmem:[%s0 + $0x24] sm:$0xf]
  %v37 = vld [vmem:[%s0 + $0x28] sm:$0xf]
  %v38 = vld [vmem:[%s0 + $0x2c] sm:$0xf]
  %v39 = vld [vmem:[%s0 + $0x30] sm:$0xf]
  %v40 = vld [vmem:[%s0 + $0x34] sm:$0xf]
  %v41 = vld [vmem:[%s0 + $0x38] sm:$0xf]
  %v42 = vld [vmem:[%s0 + $0x3c] sm:$0xf]
  %v43 = vunpack.c.l.bf16 %v27
  %v44 = vunpack.c.l.bf16 %v28
  %v45 = vunpack.c.l.bf16 %v29
  %v46 = vunpack.c.l.bf16 %v30
  %v47 = vunpack.c.l.bf16 %v31
  %v48 = vunpack.c.l.bf16 %v32
  %v49 = vunpack.c.l.bf16 %v33
  %v50 = vunpack.c.l.bf16 %v34
  %v51 = vunpack.c.l.bf16 %v35
  %v52 = vunpack.c.l.bf16 %v36
  %v53 = vunpack.c.l.bf16 %v37
  %v54 = vunpack.c.l.bf16 %v38
  %v55 = vunpack.c.l.bf16 %v39
  %v56 = vunpack.c.l.bf16 %v40
  %v57 = vunpack.c.l.bf16 %v41
  %v58 = vunpack.c.l.bf16 %v42
  %v59 = vld [vmem:[%s2] sm:$0x1]
  %v61 = vlaneseq
  %v62 = vshrl.u32 %v61, 7
  %v63 = vsub.s32 0, %v62
  %v64 = vrot.slane %v59, %v63
  %v66 = vmul.f32 %v43, %v64
  %v67 = vmul.f32 %v44, %v64
  %v68 = vmul.f32 %v45, %v64
  %v69 = vmul.f32 %v46, %v64
  %v70 = vmul.f32 %v47, %v64
  %v71 = vmul.f32 %v48, %v64
  %v72 = vmul.f32 %v49, %v64
  %v73 = vmul.f32 %v50, %v64
  %v74 = vmul.f32 %v51, %v64
  %v75 = vmul.f32 %v52, %v64
  %v76 = vmul.f32 %v53, %v64
  %v77 = vmul.f32 %v54, %v64
  %v78 = vmul.f32 %v55, %v64
  %v79 = vmul.f32 %v56, %v64
  %v80 = vmul.f32 %v57, %v64
  %v81 = vmul.f32 %v58, %v64
  %v82 = vld [vmem:[%s3] sm:$0x1]
  %v84 = vlaneseq
  %v85 = vshrl.u32 %v84, 7
  %v86 = vsub.s32 0, %v85
  %v87 = vrot.slane %v82, %v86
  %v89 = vadd.f32 %v66, %v87
  %v90 = vadd.f32 %v67, %v87
  %v91 = vadd.f32 %v68, %v87
  %v92 = vadd.f32 %v69, %v87
  %v93 = vadd.f32 %v70, %v87
  %v94 = vadd.f32 %v71, %v87
  %v95 = vadd.f32 %v72, %v87
  %v96 = vadd.f32 %v73, %v87
  %v97 = vadd.f32 %v74, %v87
  %v98 = vadd.f32 %v75, %v87
  %v99 = vadd.f32 %v76, %v87
  %v100 = vadd.f32 %v77, %v87
  %v101 = vadd.f32 %v78, %v87
  %v102 = vadd.f32 %v79, %v87
  %v103 = vadd.f32 %v80, %v87
  %v104 = vadd.f32 %v81, %v87
  %v105 = vmax.f32 %v89, 0.0
  %v106 = vmax.f32 %v90, 0.0
  %v107 = vmax.f32 %v91, 0.0
  %v108 = vmax.f32 %v92, 0.0
  %v109 = vmax.f32 %v93, 0.0
  %v110 = vmax.f32 %v94, 0.0
  %v111 = vmax.f32 %v95, 0.0
  %v112 = vmax.f32 %v96, 0.0
  %v113 = vmax.f32 %v97, 0.0
  %v114 = vmax.f32 %v98, 0.0
  %v115 = vmax.f32 %v99, 0.0
  %v116 = vmax.f32 %v100, 0.0
  %v117 = vmax.f32 %v101, 0.0
  %v118 = vmax.f32 %v102, 0.0
  %v119 = vmax.f32 %v103, 0.0
  %v120 = vmax.f32 %v104, 0.0
  %v121 = vpack.c.bf16 %v106, %v105
  %v122 = vpack.c.bf16 %v108, %v107
  %v123 = vpack.c.bf16 %v110, %v109
  %v124 = vpack.c.bf16 %v112, %v111
  %v125 = vpack.c.bf16 %v114, %v113
  %v126 = vpack.c.bf16 %v116, %v115
  %v127 = vpack.c.bf16 %v118, %v117
  %v128 = vpack.c.bf16 %v120, %v119
  %v129 = vld [vmem:[%s4] sm:$0xf]
  %vm130 = vcmask 64512
  %v132 = vsel %vm130, %v121, 0
  %v135 = vsel %vm130, %v122, 0
  %v138 = vsel %vm130, %v123, 0
  %v141 = vsel %vm130, %v124, 0
  %v144 = vsel %vm130, %v125, 0
  %v147 = vsel %vm130, %v126, 0
  %v150 = vsel %vm130, %v127, 0
  %v153 = vsel %vm130, %v128, 0
  %vm155 = vcmask 1043456
  %v157 = vsel %vm155, %v129, 0
  %159 = vmatprep.subr.bf16.mxu0 0
  %160 = vmatpush1.bf16.msra.mxu0 0
  %161 = vmatprep.subr.bf16.mxu0 0
  %162 = vmatpush1.bf16.msra.mxu0 0
  %163 = vmatprep.subr.bf16.mxu0 0
  %164 = vmatpush1.bf16.msra.mxu0 0
  %165 = vmatprep.subr.bf16.mxu0 0
  %166 = vmatpush1.bf16.msra.mxu0 0
  %167 = vmatprep.subr.bf16.mxu0 0
  %168 = vmatpush1.bf16.msra.mxu0 0
  %169 = vmatprep.subr.bf16.mxu0 0
  %170 = vmatpush1.bf16.msra.mxu0 0
  %171 = vmatprep.subr.bf16.mxu0 0
  %172 = vmatpush1.bf16.msra.mxu0 0
  %173 = vmatprep.subr.bf16.mxu0 0
  %174 = vmatpush1.bf16.msra.mxu0 %v157
  %175 = vmatprep.subr.bf16.mxu0 0
  %176 = vmatpush2.bf16.msra.mxu0 0
  %177 = vmatprep.subr.bf16.mxu0 0
  %178 = vmatpush2.bf16.msra.mxu0 0
  %179 = vmatprep.subr.bf16.mxu0 0
  %180 = vmatpush2.bf16.msra.mxu0 0
  %181 = vmatprep.subr.bf16.mxu0 0
  %182 = vmatpush2.bf16.msra.mxu0 0
  %183 = vmatprep.subr.bf16.mxu0 0
  %184 = vmatpush2.bf16.msra.mxu0 0
  %185 = vmatprep.subr.bf16.mxu0 0
  %186 = vmatpush2.bf16.msra.mxu0 0
  %187 = vmatprep.subr.bf16.mxu0 0
  %188 = vmatpush2.bf16.msra.mxu0 0
  %189 = vmatprep.subr.bf16.mxu0 0
  %190 = vmatpush2.bf16.msra.mxu0 0
  %191 = vmatprep.mubr.bf16.mxu0 0
  %192 = vmatmul.mubr.bf16.gmra.mxu0 %v132
  %v193 = vpop.f32.mrf.mxu0
  %v194 = vadd.f32 0.0, %v193
  %v195 = vpop.f32.mrf.mxu0
  %v196 = vpop.f32.mrf.mxu0
  %v197 = vadd.f32 0.0, %v196
  %v198 = vpop.f32.mrf.mxu0
  %199 = vmatprep.mubr.bf16.mxu0 0
  %200 = vmatmul.mubr.bf16.gmra.mxu0 %v135
  %v201 = vpop.f32.mrf.mxu0
  %v202 = vadd.f32 0.0, %v201
  %v203 = vpop.f32.mrf.mxu0
  %v204 = vpop.f32.mrf.mxu0
  %v205 = vadd.f32 0.0, %v204
  %v206 = vpop.f32.mrf.mxu0
  %207 = vmatprep.mubr.bf16.mxu0 0
  %208 = vmatmul.mubr.bf16.gmra.mxu0 %v138
  %v209 = vpop.f32.mrf.mxu0
  %v210 = vadd.f32 0.0, %v209
  %v211 = vpop.f32.mrf.mxu0
  %v212 = vpop.f32.mrf.mxu0
  %v213 = vadd.f32 0.0, %v212
  %v214 = vpop.f32.mrf.mxu0
  %215 = vmatprep.mubr.bf16.mxu0 0
  %216 = vmatmul.mubr.bf16.gmra.mxu0 %v141
  %v217 = vpop.f32.mrf.mxu0
  %v218 = vadd.f32 0.0, %v217
  %v219 = vpop.f32.mrf.mxu0
  %v220 = vpop.f32.mrf.mxu0
  %v221 = vadd.f32 0.0, %v220
  %v222 = vpop.f32.mrf.mxu0
  %223 = vmatprep.mubr.bf16.mxu0 0
  %224 = vmatmul.mubr.bf16.gmra.mxu0 %v144
  %v225 = vpop.f32.mrf.mxu0
  %v226 = vadd.f32 0.0, %v225
  %v227 = vpop.f32.mrf.mxu0
  %v228 = vpop.f32.mrf.mxu0
  %v229 = vadd.f32 0.0, %v228
  %v230 = vpop.f32.mrf.mxu0
  %231 = vmatprep.mubr.bf16.mxu0 0
  %232 = vmatmul.mubr.bf16.gmra.mxu0 %v147
  %v233 = vpop.f32.mrf.mxu0
  %v234 = vadd.f32 0.0, %v233
  %v235 = vpop.f32.mrf.mxu0
  %v236 = vpop.f32.mrf.mxu0
  %v237 = vadd.f32 0.0, %v236
  %v238 = vpop.f32.mrf.mxu0
  %239 = vmatprep.mubr.bf16.mxu0 0
  %240 = vmatmul.mubr.bf16.gmra.mxu0 %v150
  %v241 = vpop.f32.mrf.mxu0
  %v242 = vadd.f32 0.0, %v241
  %v243 = vpop.f32.mrf.mxu0
  %v244 = vpop.f32.mrf.mxu0
  %v245 = vadd.f32 0.0, %v244
  %v246 = vpop.f32.mrf.mxu0
  %247 = vmatprep.mubr.bf16.mxu0 0
  %248 = vmatmul.mubr.bf16.gmra.mxu0 %v153
  %v249 = vpop.f32.mrf.mxu0
  %v250 = vadd.f32 0.0, %v249
  %v251 = vpop.f32.mrf.mxu0
  %v252 = vpop.f32.mrf.mxu0
  %v253 = vadd.f32 0.0, %v252
  %v254 = vpop.f32.mrf.mxu0
  %255 = vdwg.mxu0
  %v256 = vld [vmem:[%s1] sm:$0xf]
  %v257 = vld [vmem:[%s1 + $0x4] sm:$0xf]
  %v258 = vld [vmem:[%s1 + $0x8] sm:$0xf]
  %v259 = vld [vmem:[%s1 + $0xc] sm:$0xf]
  %v260 = vld [vmem:[%s1 + $0x10] sm:$0xf]
  %v261 = vld [vmem:[%s1 + $0x14] sm:$0xf]
  %v262 = vld [vmem:[%s1 + $0x18] sm:$0xf]
  %v263 = vld [vmem:[%s1 + $0x1c] sm:$0xf]
  %v264 = vld [vmem:[%s1 + $0x20] sm:$0xf]
  %v265 = vld [vmem:[%s1 + $0x24] sm:$0xf]
  %v266 = vld [vmem:[%s1 + $0x28] sm:$0xf]
  %v267 = vld [vmem:[%s1 + $0x2c] sm:$0xf]
  %v268 = vld [vmem:[%s1 + $0x30] sm:$0xf]
  %v269 = vld [vmem:[%s1 + $0x34] sm:$0xf]
  %v270 = vld [vmem:[%s1 + $0x38] sm:$0xf]
  %v271 = vld [vmem:[%s1 + $0x3c] sm:$0xf]
  %v272 = vld [vmem:[%s5] sm:$0xf]
  %v273 = vld [vmem:[%s5 + $0x4] sm:$0xf]
  %v290 = vunpack.c.l.b16 %v256
  %v291 = vunpack.c.l.b16 %v257
  %v292 = vunpack.c.l.b16 %v258
  %v293 = vunpack.c.l.b16 %v259
  %v294 = vunpack.c.l.b16 %v260
  %v295 = vunpack.c.l.b16 %v261
  %v296 = vunpack.c.l.b16 %v262
  %v297 = vunpack.c.l.b16 %v263
  %v298 = vunpack.c.l.b16 %v264
  %v299 = vunpack.c.l.b16 %v265
  %v300 = vunpack.c.l.b16 %v266
  %v301 = vunpack.c.l.b16 %v267
  %v302 = vunpack.c.l.b16 %v268
  %v303 = vunpack.c.l.b16 %v269
  %v304 = vunpack.c.l.b16 %v270
  %v305 = vunpack.c.l.b16 %v271
  %v306 = vpack.c.b16 %v291, %v290
  %v307 = vpack.c.b16 %v293, %v292
  %v308 = vpack.c.b16 %v295, %v294
  %v309 = vpack.c.b16 %v297, %v296
  %v310 = vpack.c.b16 %v299, %v298
  %v311 = vpack.c.b16 %v301, %v300
  %v312 = vpack.c.b16 %v303, %v302
  %v313 = vpack.c.b16 %v305, %v304
  %v316 = vunpack.c.l.b16 %v272
  %v317 = vunpack.c.l.b16 %v273
  %v318 = vpack.c.b16 %v317, %v316
  %vm320 = vcmask 130048
  %v322 = vsel %vm320, %v306, 0
  %v325 = vsel %vm320, %v307, 0
  %v328 = vsel %vm320, %v308, 0
  %v331 = vsel %vm320, %v309, 0
  %v334 = vsel %vm320, %v310, 0
  %v337 = vsel %vm320, %v311, 0
  %v340 = vsel %vm320, %v312, 0
  %v343 = vsel %vm320, %v313, 0
  %345 = vmatprep.subr.bf16.mxu0 0
  %346 = vmatpush1.bf16.msra.mxu0 0
  %347 = vmatprep.subr.bf16.mxu0 0
  %348 = vmatpush1.bf16.msra.mxu0 0
  %349 = vmatprep.subr.bf16.mxu0 0
  %350 = vmatpush1.bf16.msra.mxu0 0
  %351 = vmatprep.subr.bf16.mxu0 0
  %352 = vmatpush1.bf16.msra.mxu0 0
  %353 = vmatprep.subr.bf16.mxu0 0
  %354 = vmatpush1.bf16.msra.mxu0 0
  %355 = vmatprep.subr.bf16.mxu0 0
  %356 = vmatpush1.bf16.msra.mxu0 0
  %357 = vmatprep.subr.bf16.mxu0 0
  %358 = vmatpush1.bf16.msra.mxu0 0
  %359 = vmatprep.subr.bf16.mxu0 0
  %360 = vmatpush1.bf16.msra.mxu0 %v318
  %361 = vmatprep.subr.bf16.mxu0 0
  %362 = vmatpush2.bf16.msra.mxu0 0
  %363 = vmatprep.subr.bf16.mxu0 0
  %364 = vmatpush2.bf16.msra.mxu0 0
  %365 = vmatprep.subr.bf16.mxu0 0
  %366 = vmatpush2.bf16.msra.mxu0 0
  %367 = vmatprep.subr.bf16.mxu0 0
  %368 = vmatpush2.bf16.msra.mxu0 0
  %369 = vmatprep.subr.bf16.mxu0 0
  %370 = vmatpush2.bf16.msra.mxu0 0
  %371 = vmatprep.subr.bf16.mxu0 0
  %372 = vmatpush2.bf16.msra.mxu0 0
  %373 = vmatprep.subr.bf16.mxu0 0
  %374 = vmatpush2.bf16.msra.mxu0 0
  %375 = vmatprep.subr.bf16.mxu0 0
  %376 = vmatpush2.bf16.msra.mxu0 0
  %377 = vmatprep.mubr.bf16.mxu0 0
  %378 = vmatmul.mubr.bf16.gmra.mxu0 %v322
  %v379 = vpop.f32.mrf.mxu0
  %v380 = vadd.f32 0.0, %v379
  %v381 = vpop.f32.mrf.mxu0
  %v382 = vpop.f32.mrf.mxu0
  %v383 = vadd.f32 0.0, %v382
  %v384 = vpop.f32.mrf.mxu0
  %385 = vmatprep.mubr.bf16.mxu0 0
  %386 = vmatmul.mubr.bf16.gmra.mxu0 %v325
  %v387 = vpop.f32.mrf.mxu0
  %v388 = vadd.f32 0.0, %v387
  %v389 = vpop.f32.mrf.mxu0
  %v390 = vpop.f32.mrf.mxu0
  %v391 = vadd.f32 0.0, %v390
  %v392 = vpop.f32.mrf.mxu0
  %393 = vmatprep.mubr.bf16.mxu0 0
  %394 = vmatmul.mubr.bf16.gmra.mxu0 %v328
  %v395 = vpop.f32.mrf.mxu0
  %v396 = vadd.f32 0.0, %v395
  %v397 = vpop.f32.mrf.mxu0
  %v398 = vpop.f32.mrf.mxu0
  %v399 = vadd.f32 0.0, %v398
  %v400 = vpop.f32.mrf.mxu0
  %401 = vmatprep.mubr.bf16.mxu0 0
  %402 = vmatmul.mubr.bf16.gmra.mxu0 %v331
  %v403 = vpop.f32.mrf.mxu0
  %v404 = vadd.f32 0.0, %v403
  %v405 = vpop.f32.mrf.mxu0
  %v406 = vpop.f32.mrf.mxu0
  %v407 = vadd.f32 0.0, %v406
  %v408 = vpop.f32.mrf.mxu0
  %409 = vmatprep.mubr.bf16.mxu0 0
  %410 = vmatmul.mubr.bf16.gmra.mxu0 %v334
  %v411 = vpop.f32.mrf.mxu0
  %v412 = vadd.f32 0.0, %v411
  %v413 = vpop.f32.mrf.mxu0
  %v414 = vpop.f32.mrf.mxu0
  %v415 = vadd.f32 0.0, %v414
  %v416 = vpop.f32.mrf.mxu0
  %417 = vmatprep.mubr.bf16.mxu0 0
  %418 = vmatmul.mubr.bf16.gmra.mxu0 %v337
  %v419 = vpop.f32.mrf.mxu0
  %v420 = vadd.f32 0.0, %v419
  %v421 = vpop.f32.mrf.mxu0
  %v422 = vpop.f32.mrf.mxu0
  %v423 = vadd.f32 0.0, %v422
  %v424 = vpop.f32.mrf.mxu0
  %425 = vmatprep.mubr.bf16.mxu0 0
  %426 = vmatmul.mubr.bf16.gmra.mxu0 %v340
  %v427 = vpop.f32.mrf.mxu0
  %v428 = vadd.f32 0.0, %v427
  %v429 = vpop.f32.mrf.mxu0
  %v430 = vpop.f32.mrf.mxu0
  %v431 = vadd.f32 0.0, %v430
  %v432 = vpop.f32.mrf.mxu0
  %433 = vmatprep.mubr.bf16.mxu0 0
  %434 = vmatmul.mubr.bf16.gmra.mxu0 %v343
  %v435 = vpop.f32.mrf.mxu0
  %v436 = vadd.f32 0.0, %v435
  %v437 = vpop.f32.mrf.mxu0
  %v438 = vpop.f32.mrf.mxu0
  %v439 = vadd.f32 0.0, %v438
  %v440 = vpop.f32.mrf.mxu0
  %441 = vdwg.mxu0
  %v442 = vpack.c.bf16 %v197, %v194
  %v443 = vpack.c.bf16 %v205, %v202
  %v444 = vpack.c.bf16 %v213, %v210
  %v445 = vpack.c.bf16 %v221, %v218
  %v446 = vpack.c.bf16 %v229, %v226
  %v447 = vpack.c.bf16 %v237, %v234
  %v448 = vpack.c.bf16 %v245, %v242
  %v449 = vpack.c.bf16 %v253, %v250
  %v458 = vunpack.c.l.b16 %v442
  %v459 = vunpack.c.h.b16 %v442
  %v460 = vunpack.c.l.b16 %v443
  %v461 = vunpack.c.h.b16 %v443
  %v462 = vunpack.c.l.b16 %v444
  %v463 = vunpack.c.h.b16 %v444
  %v464 = vunpack.c.l.b16 %v445
  %v465 = vunpack.c.h.b16 %v445
  %v466 = vunpack.c.l.b16 %v446
  %v467 = vunpack.c.h.b16 %v446
  %v468 = vunpack.c.l.b16 %v447
  %v469 = vunpack.c.h.b16 %v447
  %v470 = vunpack.c.l.b16 %v448
  %v471 = vunpack.c.h.b16 %v448
  %v472 = vunpack.c.l.b16 %v449
  %v473 = vunpack.c.h.b16 %v449
  %v474 = vpack.c.b16 %v458, %v458
  %v475 = vpack.c.b16 %v459, %v459
  %v476 = vpack.c.b16 %v460, %v460
  %v477 = vpack.c.b16 %v461, %v461
  %v478 = vpack.c.b16 %v462, %v462
  %v479 = vpack.c.b16 %v463, %v463
  %v480 = vpack.c.b16 %v464, %v464
  %v481 = vpack.c.b16 %v465, %v465
  %v482 = vpack.c.b16 %v466, %v466
  %v483 = vpack.c.b16 %v467, %v467
  %v484 = vpack.c.b16 %v468, %v468
  %v485 = vpack.c.b16 %v469, %v469
  %v486 = vpack.c.b16 %v470, %v470
  %v487 = vpack.c.b16 %v471, %v471
  %v488 = vpack.c.b16 %v472, %v472
  %v489 = vpack.c.b16 %v473, %v473
  %vm506 = vcmask 257024
  %507 = vst.msk [vmem:[%s6] sm:$0xf] %vm506, %v474
  %508 = vst.msk [vmem:[%s6 + $0x4] sm:$0xf] %vm506, %v475
  %509 = vst.msk [vmem:[%s6 + $0x8] sm:$0xf] %vm506, %v476
  %510 = vst.msk [vmem:[%s6 + $0xc] sm:$0xf] %vm506, %v477
  %511 = vst.msk [vmem:[%s6 + $0x10] sm:$0xf] %vm506, %v478
  %512 = vst.msk [vmem:[%s6 + $0x14] sm:$0xf] %vm506, %v479
  %513 = vst.msk [vmem:[%s6 + $0x18] sm:$0xf] %vm506, %v480
  %514 = vst.msk [vmem:[%s6 + $0x1c] sm:$0xf] %vm506, %v481
  %515 = vst.msk [vmem:[%s6 + $0x20] sm:$0xf] %vm506, %v482
  %516 = vst.msk [vmem:[%s6 + $0x24] sm:$0xf] %vm506, %v483
  %517 = vst.msk [vmem:[%s6 + $0x28] sm:$0xf] %vm506, %v484
  %518 = vst.msk [vmem:[%s6 + $0x2c] sm:$0xf] %vm506, %v485
  %519 = vst.msk [vmem:[%s6 + $0x30] sm:$0xf] %vm506, %v486
  %520 = vst.msk [vmem:[%s6 + $0x34] sm:$0xf] %vm506, %v487
  %521 = vst.msk [vmem:[%s6 + $0x38] sm:$0xf] %vm506, %v488
  %522 = vst.msk [vmem:[%s6 + $0x3c] sm:$0xf] %vm506, %v489
  %v523 = vpack.c.bf16 %v383, %v380
  %v524 = vpack.c.bf16 %v391, %v388
  %v525 = vpack.c.bf16 %v399, %v396
  %v526 = vpack.c.bf16 %v407, %v404
  %v527 = vpack.c.bf16 %v415, %v412
  %v528 = vpack.c.bf16 %v423, %v420
  %v529 = vpack.c.bf16 %v431, %v428
  %v530 = vpack.c.bf16 %v439, %v436
  %v539 = vunpack.c.l.b16 %v523
  %v540 = vunpack.c.h.b16 %v523
  %v541 = vunpack.c.l.b16 %v524
  %v542 = vunpack.c.h.b16 %v524
  %v543 = vunpack.c.l.b16 %v525
  %v544 = vunpack.c.h.b16 %v525
  %v545 = vunpack.c.l.b16 %v526
  %v546 = vunpack.c.h.b16 %v526
  %v547 = vunpack.c.l.b16 %v527
  %v548 = vunpack.c.h.b16 %v527
  %v549 = vunpack.c.l.b16 %v528
  %v550 = vunpack.c.h.b16 %v528
  %v551 = vunpack.c.l.b16 %v529
  %v552 = vunpack.c.h.b16 %v529
  %v553 = vunpack.c.l.b16 %v530
  %v554 = vunpack.c.h.b16 %v530
  %v555 = vpack.c.b16 %v539, %v539
  %v556 = vpack.c.b16 %v540, %v540
  %v557 = vpack.c.b16 %v541, %v541
  %v558 = vpack.c.b16 %v542, %v542
  %v559 = vpack.c.b16 %v543, %v543
  %v560 = vpack.c.b16 %v544, %v544
  %v561 = vpack.c.b16 %v545, %v545
  %v562 = vpack.c.b16 %v546, %v546
  %v563 = vpack.c.b16 %v547, %v547
  %v564 = vpack.c.b16 %v548, %v548
  %v565 = vpack.c.b16 %v549, %v549
  %v566 = vpack.c.b16 %v550, %v550
  %v567 = vpack.c.b16 %v551, %v551
  %v568 = vpack.c.b16 %v552, %v552
  %v569 = vpack.c.b16 %v553, %v553
  %v570 = vpack.c.b16 %v554, %v554
  %587 = vst.msk [vmem:[%s7] sm:$0xf] %vm506, %v555
  %588 = vst.msk [vmem:[%s7 + $0x4] sm:$0xf] %vm506, %v556
  %589 = vst.msk [vmem:[%s7 + $0x8] sm:$0xf] %vm506, %v557
  %590 = vst.msk [vmem:[%s7 + $0xc] sm:$0xf] %vm506, %v558
  %591 = vst.msk [vmem:[%s7 + $0x10] sm:$0xf] %vm506, %v559
  %592 = vst.msk [vmem:[%s7 + $0x14] sm:$0xf] %vm506, %v560
  %593 = vst.msk [vmem:[%s7 + $0x18] sm:$0xf] %vm506, %v561
  %594 = vst.msk [vmem:[%s7 + $0x1c] sm:$0xf] %vm506, %v562
  %595 = vst.msk [vmem:[%s7 + $0x20] sm:$0xf] %vm506, %v563
  %596 = vst.msk [vmem:[%s7 + $0x24] sm:$0xf] %vm506, %v564
  %597 = vst.msk [vmem:[%s7 + $0x28] sm:$0xf] %vm506, %v565
  %598 = vst.msk [vmem:[%s7 + $0x2c] sm:$0xf] %vm506, %v566
  %599 = vst.msk [vmem:[%s7 + $0x30] sm:$0xf] %vm506, %v567
  %600 = vst.msk [vmem:[%s7 + $0x34] sm:$0xf] %vm506, %v568
  %601 = vst.msk [vmem:[%s7 + $0x38] sm:$0xf] %vm506, %v569
  %602 = vst.msk [vmem:[%s7 + $0x3c] sm:$0xf] %vm506, %v570
  %vm603 = vcmask 261120
  %v604 = vsel %vm603, %v194, 0.0
  %v605 = vsel %vm603, %v197, 0.0
  %v606 = vadd.f32 %v604, %v605
  %v607 = vsel %vm603, %v202, 0.0
  %v608 = vadd.f32 %v606, %v607
  %v609 = vsel %vm603, %v205, 0.0
  %v610 = vadd.f32 %v608, %v609
  %v611 = vsel %vm603, %v210, 0.0
  %v612 = vadd.f32 %v610, %v611
  %v613 = vsel %vm603, %v213, 0.0
  %v614 = vadd.f32 %v612, %v613
  %v615 = vsel %vm603, %v218, 0.0
  %v616 = vadd.f32 %v614, %v615
  %v617 = vsel %vm603, %v221, 0.0
  %v618 = vadd.f32 %v616, %v617
  %v619 = vsel %vm603, %v226, 0.0
  %v620 = vadd.f32 %v618, %v619
  %v621 = vsel %vm603, %v229, 0.0
  %v622 = vadd.f32 %v620, %v621
  %v623 = vsel %vm603, %v234, 0.0
  %v624 = vadd.f32 %v622, %v623
  %v625 = vsel %vm603, %v237, 0.0
  %v626 = vadd.f32 %v624, %v625
  %v627 = vsel %vm603, %v242, 0.0
  %v628 = vadd.f32 %v626, %v627
  %v629 = vsel %vm603, %v245, 0.0
  %v630 = vadd.f32 %v628, %v629
  %v631 = vsel %vm603, %v250, 0.0
  %v632 = vadd.f32 %v630, %v631
  %v633 = vsel %vm603, %v253, 0.0
  %v634 = vadd.f32 %v632, %v633
  %v635 = vrot.slane %v634, 4
  %v636 = vadd.f32 %v634, %v635
  %v637 = vrot.slane %v636, 2
  %v638 = vadd.f32 %v636, %v637
  %v639 = vrot.slane %v638, 1
  %v640 = vadd.f32 %v638, %v639
  %v641 = vmul.f32 %v194, %v194
  %v642 = vmul.f32 %v197, %v197
  %v643 = vmul.f32 %v202, %v202
  %v644 = vmul.f32 %v205, %v205
  %v645 = vmul.f32 %v210, %v210
  %v646 = vmul.f32 %v213, %v213
  %v647 = vmul.f32 %v218, %v218
  %v648 = vmul.f32 %v221, %v221
  %v649 = vmul.f32 %v226, %v226
  %v650 = vmul.f32 %v229, %v229
  %v651 = vmul.f32 %v234, %v234
  %v652 = vmul.f32 %v237, %v237
  %v653 = vmul.f32 %v242, %v242
  %v654 = vmul.f32 %v245, %v245
  %v655 = vmul.f32 %v250, %v250
  %v656 = vmul.f32 %v253, %v253
  %v657 = vsel %vm603, %v641, 0.0
  %v658 = vsel %vm603, %v642, 0.0
  %v659 = vadd.f32 %v657, %v658
  %v660 = vsel %vm603, %v643, 0.0
  %v661 = vadd.f32 %v659, %v660
  %v662 = vsel %vm603, %v644, 0.0
  %v663 = vadd.f32 %v661, %v662
  %v664 = vsel %vm603, %v645, 0.0
  %v665 = vadd.f32 %v663, %v664
  %v666 = vsel %vm603, %v646, 0.0
  %v667 = vadd.f32 %v665, %v666
  %v668 = vsel %vm603, %v647, 0.0
  %v669 = vadd.f32 %v667, %v668
  %v670 = vsel %vm603, %v648, 0.0
  %v671 = vadd.f32 %v669, %v670
  %v672 = vsel %vm603, %v649, 0.0
  %v673 = vadd.f32 %v671, %v672
  %v674 = vsel %vm603, %v650, 0.0
  %v675 = vadd.f32 %v673, %v674
  %v676 = vsel %vm603, %v651, 0.0
  %v677 = vadd.f32 %v675, %v676
  %v678 = vsel %vm603, %v652, 0.0
  %v679 = vadd.f32 %v677, %v678
  %v680 = vsel %vm603, %v653, 0.0
  %v681 = vadd.f32 %v679, %v680
  %v682 = vsel %vm603, %v654, 0.0
  %v683 = vadd.f32 %v681, %v682
  %v684 = vsel %vm603, %v655, 0.0
  %v685 = vadd.f32 %v683, %v684
  %v686 = vsel %vm603, %v656, 0.0
  %v687 = vadd.f32 %v685, %v686
  %v688 = vrot.slane %v687, 4
  %v689 = vadd.f32 %v687, %v688
  %v690 = vrot.slane %v689, 2
  %v691 = vadd.f32 %v689, %v690
  %v692 = vrot.slane %v691, 1
  %v693 = vadd.f32 %v691, %v692
  %v694 = vsel %vm603, %v380, 0.0
  %v695 = vsel %vm603, %v383, 0.0
  %v696 = vadd.f32 %v694, %v695
  %v697 = vsel %vm603, %v388, 0.0
  %v698 = vadd.f32 %v696, %v697
  %v699 = vsel %vm603, %v391, 0.0
  %v700 = vadd.f32 %v698, %v699
  %v701 = vsel %vm603, %v396, 0.0
  %v702 = vadd.f32 %v700, %v701
  %v703 = vsel %vm603, %v399, 0.0
  %v704 = vadd.f32 %v702, %v703
  %v705 = vsel %vm603, %v404, 0.0
  %v706 = vadd.f32 %v704, %v705
  %v707 = vsel %vm603, %v407, 0.0
  %v708 = vadd.f32 %v706, %v707
  %v709 = vsel %vm603, %v412, 0.0
  %v710 = vadd.f32 %v708, %v709
  %v711 = vsel %vm603, %v415, 0.0
  %v712 = vadd.f32 %v710, %v711
  %v713 = vsel %vm603, %v420, 0.0
  %v714 = vadd.f32 %v712, %v713
  %v715 = vsel %vm603, %v423, 0.0
  %v716 = vadd.f32 %v714, %v715
  %v717 = vsel %vm603, %v428, 0.0
  %v718 = vadd.f32 %v716, %v717
  %v719 = vsel %vm603, %v431, 0.0
  %v720 = vadd.f32 %v718, %v719
  %v721 = vsel %vm603, %v436, 0.0
  %v722 = vadd.f32 %v720, %v721
  %v723 = vsel %vm603, %v439, 0.0
  %v724 = vadd.f32 %v722, %v723
  %v725 = vrot.slane %v724, 4
  %v726 = vadd.f32 %v724, %v725
  %v727 = vrot.slane %v726, 2
  %v728 = vadd.f32 %v726, %v727
  %v729 = vrot.slane %v728, 1
  %v730 = vadd.f32 %v728, %v729
  %v731 = vmul.f32 %v380, %v380
  %v732 = vmul.f32 %v383, %v383
  %v733 = vmul.f32 %v388, %v388
  %v734 = vmul.f32 %v391, %v391
  %v735 = vmul.f32 %v396, %v396
  %v736 = vmul.f32 %v399, %v399
  %v737 = vmul.f32 %v404, %v404
  %v738 = vmul.f32 %v407, %v407
  %v739 = vmul.f32 %v412, %v412
  %v740 = vmul.f32 %v415, %v415
  %v741 = vmul.f32 %v420, %v420
  %v742 = vmul.f32 %v423, %v423
  %v743 = vmul.f32 %v428, %v428
  %v744 = vmul.f32 %v431, %v431
  %v745 = vmul.f32 %v436, %v436
  %v746 = vmul.f32 %v439, %v439
  %v747 = vsel %vm603, %v731, 0.0
  %v748 = vsel %vm603, %v732, 0.0
  %v749 = vadd.f32 %v747, %v748
  %v750 = vsel %vm603, %v733, 0.0
  %v751 = vadd.f32 %v749, %v750
  %v752 = vsel %vm603, %v734, 0.0
  %v753 = vadd.f32 %v751, %v752
  %v754 = vsel %vm603, %v735, 0.0
  %v755 = vadd.f32 %v753, %v754
  %v756 = vsel %vm603, %v736, 0.0
  %v757 = vadd.f32 %v755, %v756
  %v758 = vsel %vm603, %v737, 0.0
  %v759 = vadd.f32 %v757, %v758
  %v760 = vsel %vm603, %v738, 0.0
  %v761 = vadd.f32 %v759, %v760
  %v762 = vsel %vm603, %v739, 0.0
  %v763 = vadd.f32 %v761, %v762
  %v764 = vsel %vm603, %v740, 0.0
  %v765 = vadd.f32 %v763, %v764
  %v766 = vsel %vm603, %v741, 0.0
  %v767 = vadd.f32 %v765, %v766
  %v768 = vsel %vm603, %v742, 0.0
  %v769 = vadd.f32 %v767, %v768
  %v770 = vsel %vm603, %v743, 0.0
  %v771 = vadd.f32 %v769, %v770
  %v772 = vsel %vm603, %v744, 0.0
  %v773 = vadd.f32 %v771, %v772
  %v774 = vsel %vm603, %v745, 0.0
  %v775 = vadd.f32 %v773, %v774
  %v776 = vsel %vm603, %v746, 0.0
  %v777 = vadd.f32 %v775, %v776
  %v778 = vrot.slane %v777, 4
  %v779 = vadd.f32 %v777, %v778
  %v780 = vrot.slane %v779, 2
  %v781 = vadd.f32 %v779, %v780
  %v782 = vrot.slane %v781, 1
  %v783 = vadd.f32 %v781, %v782
  %vm784 = vcmask 1040384
  %v785 = vsel %vm784, %v640, %v693
  %vm786 = vcmask 1041408
  %v787 = vsel %vm786, %v785, %v730
  %vm788 = vcmask 1042432
  %v789 = vsel %vm788, %v787, %v783
  %790 = vst.msk [vmem:[%s8] sm:$0xf] %vm506, %v789
  // Predicated region
  $region26: #{bottleneck_forward.6} parent=0 // pred_check
    _
  $region27: #{bottleneck_forward.6} parent=0 // pred_check_branch
    %792 = sbr.rel (0) target = $region29
  $region28: #{bottleneck_forward.6} parent=0 // pred_region
    _
  $region29: #{bottleneck_forward.6} parent=0 // pred_fallthru
    _
  // Predicated region
  $region30: #{bottleneck_forward.6} parent=0 // pred_check
    _
  $region31: #{bottleneck_forward.6} parent=0 // pred_check_branch
    %794 = sbr.rel (0) target = $region33
  $region32: #{bottleneck_forward.6} parent=0 // pred_region
    _
  $region33: #{bottleneck_forward.6} parent=0 // pred_fallthru
    _
  // Predicated region
  $region34: #{bottleneck_forward.6} parent=0 // pred_check
    _
  $region35: #{bottleneck_forward.6} parent=0 // pred_check_branch
    %796 = sbr.rel (0) target = $region37
  $region36: #{bottleneck_forward.6} parent=0 // pred_region
    _
  $region37: #{bottleneck_forward.6} parent=0 // pred_fallthru
    _
  // Predicated region
  $region38: #{bottleneck_forward.6} parent=0 // pred_check
    _
  $region39: #{bottleneck_forward.6} parent=0 // pred_check_branch
    %798 = sbr.rel (0) target = $region41
  $region40: #{bottleneck_forward.6} parent=0 // pred_region
    _
  $region41: #{bottleneck_forward.6} parent=0 // pred_fallthru
    _
  // Predicated region
  $region42: #{bottleneck_forward.6} parent=0 // pred_check
    _
  $region43: #{bottleneck_forward.6} parent=0 // pred_check_branch
    %800 = sbr.rel (0) target = $region45
  $region44: #{bottleneck_forward.6} parent=0 // pred_region
    _
  $region45: #{bottleneck_forward.6} parent=0 // pred_fallthru
    _
  // Predicated region
  $region46: #{bottleneck_forward.6} parent=0 // pred_check
    _
  $region47: #{bottleneck_forward.6} parent=0 // pred_check_branch
    %802 = sbr.rel (0) target = $region49
  $region48: #{bottleneck_forward.6} parent=0 // pred_region
    _
  $region49: #{bottleneck_forward.6} parent=0 // pred_fallthru
    _

</llo_original>
